<compile_context>
chip_gen: v7x
topology: tpu7x:2x2x1
jax: 0.10.0
libtpu: 0.0.40
codegen_flags: <defaults>
</compile_context>

<pallas_src>
import math
import functools

import jax
import jax.numpy as jnp
from jax.experimental import pallas as pl
from jax.experimental.pallas import tpu as pltpu


# ----------------------------------------------------------------------------
# helpers
# ----------------------------------------------------------------------------

_VMEM_BUDGET = 12 * 1024 * 1024   # conservative share of scoped VMEM for fused kernels
_LN_EPS = 1e-5


def _round_up(x, m):
    return ((x + m - 1) // m) * m


def _pad2(a, shape, dtype):
    """Zero-pad a 2-D array up to `shape` and cast to `dtype`."""
    if a.shape == shape and a.dtype == dtype:
        return a
    out = jnp.zeros(shape, dtype)
    return out.at[: a.shape[0], : a.shape[1]].set(a.astype(dtype))


def _layernorm_f32(y, g, b, out_dtype):
    mean = jnp.mean(y, axis=-1, keepdims=True)
    var = jnp.mean(jnp.square(y - mean), axis=-1, keepdims=True)
    yn = (y - mean) * jax.lax.rsqrt(var + _LN_EPS)
    return (yn * g + b).astype(out_dtype)


# ----------------------------------------------------------------------------
# Tiled matmul kernel (bias + optional ReLU epilogue)
# ----------------------------------------------------------------------------

def _matmul_kernel(x_ref, w_ref, b_ref, o_ref, acc_ref, *, activation):
    @pl.when(pl.program_id(2) == 0)
    def _init():
        acc_ref[...] = jnp.zeros_like(acc_ref)

    acc_ref[...] += jnp.dot(x_ref[...], w_ref[...],
                            preferred_element_type=jnp.float32)

    @pl.when(pl.program_id(2) == pl.num_programs(2) - 1)
    def _finalize():
        y = acc_ref[...] + b_ref[...]          # bias in f32
        if activation == "relu":
            y = jnp.maximum(y, 0.0)
        o_ref[...] = y.astype(o_ref.dtype)


def matmul(x, w, b=None, activation=None, out_dtype=None):
    """(M, K) @ (K, N) [+ b] [ReLU].  bf16 operands, f32 accumulation."""
    M, K = x.shape
    Kw, N = w.shape
    assert K == Kw
    out_dtype = out_dtype or x.dtype

    tm = min(_round_up(M, 16), 256)
    tn = min(_round_up(N, 128), 256)
    tk = min(_round_up(K, 128), 512)
    Mp, Np, Kp = _round_up(M, tm), _round_up(N, tn), _round_up(K, tk)

    xp = _pad2(x, (Mp, Kp), jnp.bfloat16)
    wp = _pad2(w, (Kp, Np), jnp.bfloat16)
    bp = jnp.zeros((1, Np), jnp.float32)
    if b is not None:
        bp = bp.at[0, :N].set(b.astype(jnp.float32))

    grid = (Mp // tm, Np // tn, Kp // tk)
    out = pl.pallas_call(
        functools.partial(_matmul_kernel, activation=activation),
        out_shape=jax.ShapeDtypeStruct((Mp, Np), out_dtype),
        grid=grid,
        in_specs=[
            pl.BlockSpec((tm, tk), lambda i, j, k: (i, k)),
            pl.BlockSpec((tk, tn), lambda i, j, k: (k, j)),
            pl.BlockSpec((1, tn), lambda i, j, k: (0, j)),
        ],
        out_specs=pl.BlockSpec((tm, tn), lambda i, j, k: (i, j)),
        scratch_shapes=[pltpu.VMEM((tm, tn), jnp.float32)],
        compiler_params=pltpu.CompilerParams(
            dimension_semantics=("parallel", "parallel", "arbitrary")),
    )(xp, wp, bp)
    return out[:M, :N]


# ----------------------------------------------------------------------------
# Fused residual-add + LayerNorm kernel (fallback path for huge models)
# ----------------------------------------------------------------------------

def _add_ln_kernel(x_ref, r_ref, g_ref, b_ref, o_ref):
    y = x_ref[...].astype(jnp.float32) + r_ref[...].astype(jnp.float32)
    o_ref[...] = _layernorm_f32(y, g_ref[...], b_ref[...], o_ref.dtype)


def add_layernorm(x, res, g, b):
    """LayerNorm(x + res) over last dim; x/res: (B, S, D)."""
    B, S, D = x.shape
    M = B * S
    tm = min(_round_up(M, 16), 512)
    Mp = _round_up(M, tm)
    x2 = _pad2(x.reshape(M, D), (Mp, D), jnp.bfloat16)
    r2 = _pad2(res.reshape(M, D), (Mp, D), jnp.bfloat16)
    out = pl.pallas_call(
        _add_ln_kernel,
        out_shape=jax.ShapeDtypeStruct((Mp, D), jnp.bfloat16),
        grid=(Mp // tm,),
        in_specs=[
            pl.BlockSpec((tm, D), lambda i: (i, 0)),
            pl.BlockSpec((tm, D), lambda i: (i, 0)),
            pl.BlockSpec((1, D), lambda i: (0, 0)),
            pl.BlockSpec((1, D), lambda i: (0, 0)),
        ],
        out_specs=pl.BlockSpec((tm, D), lambda i: (i, 0)),
        compiler_params=pltpu.CompilerParams(dimension_semantics=("parallel",)),
    )(x2, r2,
      g.reshape(1, D).astype(jnp.float32),
      b.reshape(1, D).astype(jnp.float32))
    return out[:M].reshape(B, S, D)


# ----------------------------------------------------------------------------
# Fused output-projection + residual + LayerNorm kernel
# ----------------------------------------------------------------------------

def _proj_add_ln_kernel(a_ref, r_ref, w_ref, bw_ref, g_ref, b_ref, o_ref):
    y = jnp.dot(a_ref[...], w_ref[...],
                preferred_element_type=jnp.float32) + bw_ref[...]
    y = y + r_ref[...].astype(jnp.float32)
    o_ref[...] = _layernorm_f32(y, g_ref[...], b_ref[...], o_ref.dtype)


def proj_add_ln(a, res, w, bw, g, b):
    """LayerNorm(a @ w + bw + res); a/res: (B, S, D), w: (D, D)."""
    B, S, D = a.shape
    M = B * S
    tm = min(_round_up(M, 16), 256)
    Mp = _round_up(M, tm)
    est = 2 * (D * D * 2) + 2 * 3 * tm * D * 2 + 2 * tm * D * 4
    if est > _VMEM_BUDGET:
        y = matmul(a.reshape(M, D), w, bw).reshape(B, S, D)
        return add_layernorm(y, res, g, b)
    a2 = _pad2(a.reshape(M, D), (Mp, D), jnp.bfloat16)
    r2 = _pad2(res.reshape(M, D), (Mp, D), jnp.bfloat16)
    out = pl.pallas_call(
        _proj_add_ln_kernel,
        out_shape=jax.ShapeDtypeStruct((Mp, D), jnp.bfloat16),
        grid=(Mp // tm,),
        in_specs=[
            pl.BlockSpec((tm, D), lambda i: (i, 0)),
            pl.BlockSpec((tm, D), lambda i: (i, 0)),
            pl.BlockSpec((D, D), lambda i: (0, 0)),    # weight resident
            pl.BlockSpec((1, D), lambda i: (0, 0)),
            pl.BlockSpec((1, D), lambda i: (0, 0)),
            pl.BlockSpec((1, D), lambda i: (0, 0)),
        ],
        out_specs=pl.BlockSpec((tm, D), lambda i: (i, 0)),
        compiler_params=pltpu.CompilerParams(dimension_semantics=("parallel",)),
    )(a2, r2,
      w.astype(jnp.bfloat16),
      bw.reshape(1, D).astype(jnp.float32),
      g.reshape(1, D).astype(jnp.float32),
      b.reshape(1, D).astype(jnp.float32))
    return out[:M].reshape(B, S, D)


# ----------------------------------------------------------------------------
# Fused FFN (W1 + ReLU + W2) + residual + LayerNorm kernel
# ----------------------------------------------------------------------------

def _ffn_add_ln_kernel(x_ref, w1_ref, b1_ref, w2_ref, b2_ref, g_ref, b_ref, o_ref):
    x = x_ref[...]
    h = jnp.dot(x, w1_ref[...], preferred_element_type=jnp.float32) + b1_ref[...]
    h = jnp.maximum(h, 0.0).astype(x.dtype)
    y = jnp.dot(h, w2_ref[...], preferred_element_type=jnp.float32) + b2_ref[...]
    y = y + x.astype(jnp.float32)
    o_ref[...] = _layernorm_f32(y, g_ref[...], b_ref[...], o_ref.dtype)


def ffn_add_ln(x, w1, b1, w2, b2, g, b):
    """LayerNorm(ReLU(x @ w1 + b1) @ w2 + b2 + x); x: (B, S, D)."""
    B, S, D = x.shape
    dff = w1.shape[1]
    M = B * S
    tm = min(_round_up(M, 16), 256)
    Mp = _round_up(M, tm)
    est = (2 * 2 * (D * dff + dff * D) * 2      # double-buffered bf16 weights
           + 2 * 2 * tm * D * 2                  # x/out tiles
           + tm * dff * 4 + tm * D * 4)          # f32 intermediates
    if est > _VMEM_BUDGET:
        h = matmul(x.reshape(M, D), w1, b1, activation="relu")
        f = matmul(h, w2, b2).reshape(B, S, D)
        return add_layernorm(f, x, g, b)
    x2 = _pad2(x.reshape(M, D), (Mp, D), jnp.bfloat16)
    out = pl.pallas_call(
        _ffn_add_ln_kernel,
        out_shape=jax.ShapeDtypeStruct((Mp, D), jnp.bfloat16),
        grid=(Mp // tm,),
        in_specs=[
            pl.BlockSpec((tm, D), lambda i: (i, 0)),
            pl.BlockSpec((D, dff), lambda i: (0, 0)),   # weights resident
            pl.BlockSpec((1, dff), lambda i: (0, 0)),
            pl.BlockSpec((dff, D), lambda i: (0, 0)),
            pl.BlockSpec((1, D), lambda i: (0, 0)),
            pl.BlockSpec((1, D), lambda i: (0, 0)),
            pl.BlockSpec((1, D), lambda i: (0, 0)),
        ],
        out_specs=pl.BlockSpec((tm, D), lambda i: (i, 0)),
        compiler_params=pltpu.CompilerParams(dimension_semantics=("parallel",)),
    )(x2,
      w1.astype(jnp.bfloat16), b1.reshape(1, dff).astype(jnp.float32),
      w2.astype(jnp.bfloat16), b2.reshape(1, D).astype(jnp.float32),
      g.reshape(1, D).astype(jnp.float32),
      b.reshape(1, D).astype(jnp.float32))
    return out[:M].reshape(B, S, D)


# ----------------------------------------------------------------------------
# Attention kernels: one grid step per batch element, heads split in-kernel,
# causal mask built in-kernel, key-padding bias is (B, 1, Sk) only.
# Q/K/V are read from the fused projection slabs (no XLA lane-slices).
# ----------------------------------------------------------------------------

def _mha_core(q, k, v, bias, nhead, scale):
    """q:(Sq,D) k,v:(Sk,D) bf16; bias: (1,Sk) or (Sq,Sk) f32 additive."""
    Sq, D = q.shape
    dh = D // nhead
    outs = []
    for h in range(nhead):
        qh = q[:, h * dh:(h + 1) * dh]
        kh = k[:, h * dh:(h + 1) * dh]
        vh = v[:, h * dh:(h + 1) * dh]
        # QK^T without an explicit transpose of K (contract last dims).
        s = jax.lax.dot_general(qh, kh, (((1,), (1,)), ((), ())),
                                preferred_element_type=jnp.float32) * scale
        s = s + bias
        s = s - jnp.max(s, axis=-1, keepdims=True)
        p = jnp.exp(s)
        p = p * pl.reciprocal(jnp.sum(p, axis=-1, keepdims=True), approx=True)
        outs.append(jnp.dot(p.astype(v.dtype), vh,
                            preferred_element_type=jnp.float32))
    return jnp.concatenate(outs, axis=-1)


def _self_attn_kernel(qkv_ref, m_ref, o_ref, *, nhead, scale, causal):
    qkv = qkv_ref[0]                        # (S, 3D) bf16
    D = qkv.shape[-1] // 3
    q, k, v = qkv[:, :D], qkv[:, D:2 * D], qkv[:, 2 * D:]
    bias = m_ref[0]                         # (1, Sk) f32 key-padding bias
    if causal:
        Sq, Sk = q.shape[0], k.shape[0]
        qi = jax.lax.broadcasted_iota(jnp.int32, (Sq, Sk), 0)
        ki = jax.lax.broadcasted_iota(jnp.int32, (Sq, Sk), 1)
        bias = bias + jnp.where(ki <= qi, 0.0, -1e9).astype(jnp.float32)
    o_ref[0] = _mha_core(q, k, v, bias, nhead, scale).astype(o_ref.dtype)


def _cross_attn_kernel(q_ref, kv_ref, m_ref, o_ref, *, nhead, scale):
    q = q_ref[0]                            # (Sq, D)
    kv = kv_ref[0]                          # (Sk, 2D)
    D = q.shape[-1]
    k, v = kv[:, :D], kv[:, D:]
    o_ref[0] = _mha_core(q, k, v, m_ref[0], nhead, scale).astype(o_ref.dtype)


def self_attention(qkv, kv_bias, nhead, causal):
    """qkv: (B, S, 3D) bf16; kv_bias: (B, 1, S) f32 additive."""
    B, S, D3 = qkv.shape
    D = D3 // 3
    scale = 1.0 / math.sqrt(D // nhead)
    return pl.pallas_call(
        functools.partial(_self_attn_kernel, nhead=nhead, scale=scale,
                          causal=causal),
        out_shape=jax.ShapeDtypeStruct((B, S, D), qkv.dtype),
        grid=(B,),
        in_specs=[
            pl.BlockSpec((1, S, D3), lambda b: (b, 0, 0)),
            pl.BlockSpec((1, 1, S), lambda b: (b, 0, 0)),
        ],
        out_specs=pl.BlockSpec((1, S, D), lambda b: (b, 0, 0)),
        compiler_params=pltpu.CompilerParams(dimension_semantics=("parallel",)),
    )(qkv, kv_bias)


def cross_attention(q, kv, kv_bias, nhead):
    """q: (B, Sq, D); kv: (B, Sk, 2D) bf16; kv_bias: (B, 1, Sk) f32 additive."""
    B, Sq, D = q.shape
    Sk = kv.shape[1]
    scale = 1.0 / math.sqrt(D // nhead)
    return pl.pallas_call(
        functools.partial(_cross_attn_kernel, nhead=nhead, scale=scale),
        out_shape=jax.ShapeDtypeStruct((B, Sq, D), q.dtype),
        grid=(B,),
        in_specs=[
            pl.BlockSpec((1, Sq, D), lambda b: (b, 0, 0)),
            pl.BlockSpec((1, Sk, 2 * D), lambda b: (b, 0, 0)),
            pl.BlockSpec((1, 1, Sk), lambda b: (b, 0, 0)),
        ],
        out_specs=pl.BlockSpec((1, Sq, D), lambda b: (b, 0, 0)),
        compiler_params=pltpu.CompilerParams(dimension_semantics=("parallel",)),
    )(q, kv, kv_bias)


# ----------------------------------------------------------------------------
# Model glue (embedding gather / PE / parameter wiring) in plain JAX
# ----------------------------------------------------------------------------

def sinusoidal_pe(S, D):
    pos = jnp.arange(S, dtype=jnp.float32)[:, None]
    i = jnp.arange(0, D, 2, dtype=jnp.float32)
    div = jnp.exp(-math.log(10000.0) * i / D)
    pe = jnp.zeros((S, D), jnp.float32)
    pe = pe.at[:, 0::2].set(jnp.sin(pos * div))
    pe = pe.at[:, 1::2].set(jnp.cos(pos * div))
    return pe


def embed(tokens, table, d_model):
    # Embedding lookup (gather) is glue; scale + PE follow the standard transformer.
    x = table[tokens].astype(jnp.float32) * math.sqrt(d_model)
    x = x + sinusoidal_pe(tokens.shape[1], d_model)[None]
    return x.astype(jnp.bfloat16)


def self_mha_block(x, p, kv_bias, nhead, causal, ln_g, ln_b):
    """Post-LN residual block: LN(OutProj(SelfAttn(x)) + x)."""
    B, S, D = x.shape
    qkv = matmul(x.reshape(B * S, D), p["w_qkv"], p["b_qkv"]).reshape(B, S, 3 * D)
    a = self_attention(qkv, kv_bias, nhead, causal)
    return proj_add_ln(a, x, p["wo"], p["bo"], ln_g, ln_b)


def cross_mha_block(q_x, kv_x, p, kv_bias, nhead, ln_g, ln_b):
    """Post-LN residual block: LN(OutProj(CrossAttn(q_x, kv_x)) + q_x)."""
    B, Sq, D = q_x.shape
    Sk = kv_x.shape[1]
    q = matmul(q_x.reshape(B * Sq, D), p["wq"], p["bq"]).reshape(B, Sq, D)
    kv = matmul(kv_x.reshape(B * Sk, D), p["w_kv"], p["b_kv"]).reshape(B, Sk, 2 * D)
    c = cross_attention(q, kv, kv_bias, nhead)
    return proj_add_ln(c, q_x, p["wo"], p["bo"], ln_g, ln_b)


def hunayn_forward(params, src, tgt, src_mask=None, tgt_mask=None):
    D = params["d_model"]
    H = params["nhead"]
    B, Ss = src.shape
    St = tgt.shape[1]
    if src_mask is None:
        src_mask = jnp.ones((B, Ss), bool)
    if tgt_mask is None:
        tgt_mask = jnp.ones((B, St), bool)

    x = embed(src, params["src_emb"], D)
    y = embed(tgt, params["tgt_emb"], D)

    neg = jnp.float32(-1e9)
    src_kv_bias = jnp.where(src_mask, 0.0, neg)[:, None, :].astype(jnp.float32)  # (B,1,Ss)
    tgt_kv_bias = jnp.where(tgt_mask, 0.0, neg)[:, None, :].astype(jnp.float32)  # (B,1,St)

    # Encoder (post-LN residual blocks)
    for lyr in params["enc_layers"]:
        x = self_mha_block(x, lyr["attn"], src_kv_bias, H, False,
                           lyr["ln1_g"], lyr["ln1_b"])
        x = ffn_add_ln(x, lyr["w1"], lyr["b1"], lyr["w2"], lyr["b2"],
                       lyr["ln2_g"], lyr["ln2_b"])
    memory = x

    # Decoder
    for lyr in params["dec_layers"]:
        y = self_mha_block(y, lyr["self_attn"], tgt_kv_bias, H, True,
                           lyr["ln1_g"], lyr["ln1_b"])
        y = cross_mha_block(y, memory, lyr["cross_attn"], src_kv_bias, H,
                            lyr["ln2_g"], lyr["ln2_b"])
        y = ffn_add_ln(y, lyr["w1"], lyr["b1"], lyr["w2"], lyr["b2"],
                       lyr["ln3_g"], lyr["ln3_b"])

    # Generator (LM head, bias=False) -> f32 logits
    logits = matmul(y.reshape(B * St, D), params["gen_w"], None,
                    out_dtype=jnp.float32)
    return logits.reshape(B, St, params["tgt_vocab"])


# ----------------------------------------------------------------------------
# Deterministic parameter construction (weights stored bf16 for the MXU)
# ----------------------------------------------------------------------------

def init_params(key, src_vocab, tgt_vocab, d_model, d_ff, nhead,
                n_enc, n_dec, src_pad=0, tgt_pad=0):
    keys = iter(jax.random.split(key, 4096))

    def nrm(shape, scale=0.05):
        return (scale * jax.random.normal(next(keys), shape)).astype(jnp.float32)

    def zeros(shape):
        return jnp.zeros(shape, jnp.float32)

    def ones(shape):
        return jnp.ones(shape, jnp.float32)

    def bf(a):
        return a.astype(jnp.bfloat16)

    def attn_self_p():
        wq, wk, wv = nrm((d_model, d_model)), nrm((d_model, d_model)), nrm((d_model, d_model))
        return dict(
            w_qkv=bf(jnp.concatenate([wq, wk, wv], axis=1)),
            b_qkv=zeros((3 * d_model,)),
            wo=bf(nrm((d_model, d_model))), bo=zeros((d_model,)),
        )

    def attn_cross_p():
        wk, wv = nrm((d_model, d_model)), nrm((d_model, d_model))
        return dict(
            wq=bf(nrm((d_model, d_model))), bq=zeros((d_model,)),
            w_kv=bf(jnp.concatenate([wk, wv], axis=1)),
            b_kv=zeros((2 * d_model,)),
            wo=bf(nrm((d_model, d_model))), bo=zeros((d_model,)),
        )

    enc_layers = []
    for _ in range(n_enc):
        enc_layers.append(dict(
            attn=attn_self_p(),
            w1=bf(nrm((d_model, d_ff))), b1=zeros((d_ff,)),
            w2=bf(nrm((d_ff, d_model))), b2=zeros((d_model,)),
            ln1_g=ones((d_model,)), ln1_b=zeros((d_model,)),
            ln2_g=ones((d_model,)), ln2_b=zeros((d_model,)),
        ))

    dec_layers = []
    for _ in range(n_dec):
        dec_layers.append(dict(
            self_attn=attn_self_p(),
            cross_attn=attn_cross_p(),
            w1=bf(nrm((d_model, d_ff))), b1=zeros((d_ff,)),
            w2=bf(nrm((d_ff, d_model))), b2=zeros((d_model,)),
            ln1_g=ones((d_model,)), ln1_b=zeros((d_model,)),
            ln2_g=ones((d_model,)), ln2_b=zeros((d_model,)),
            ln3_g=ones((d_model,)), ln3_b=zeros((d_model,)),
        ))

    src_emb = nrm((src_vocab, d_model)).at[src_pad].set(0.0)   # padding_idx row zeroed
    tgt_emb = nrm((tgt_vocab, d_model)).at[tgt_pad].set(0.0)

    return dict(
        d_model=d_model, nhead=nhead, tgt_vocab=tgt_vocab,
        src_emb=src_emb, tgt_emb=tgt_emb,
        enc_layers=enc_layers, dec_layers=dec_layers,
        gen_w=bf(nrm((d_model, tgt_vocab))),
    )


# ----------------------------------------------------------------------------
# Main
# ----------------------------------------------------------------------------

if __name__ == "__main__":
    B, Ss, St = 2, 8, 8
    src_vocab, tgt_vocab = 64, 48
    d_model, d_ff, nhead = 32, 64, 4
    n_enc = n_dec = 2

    key = jax.random.PRNGKey(0)
    pkey, skey, tkey = jax.random.split(key, 3)

    params = init_params(pkey, src_vocab, tgt_vocab, d_model, d_ff, nhead,
                         n_enc, n_dec, src_pad=0, tgt_pad=0)

    src = jax.random.randint(skey, (B, Ss), 1, src_vocab, dtype=jnp.int32)
    tgt = jax.random.randint(tkey, (B, St), 1, tgt_vocab, dtype=jnp.int32)
    # key-padding masks: True = real token (last position of batch 1 is padding)
    src_mask = jnp.ones((B, Ss), bool).at[1, Ss - 1].set(False)
    tgt_mask = jnp.ones((B, St), bool).at[1, St - 1].set(False)
    src = src.at[1, Ss - 1].set(0)
    tgt = tgt.at[1, St - 1].set(0)

    # jit the whole forward (params closed over, so python ints stay static);
    # this folds the XLA glue between pallas_calls into one compiled program.
    fwd = jax.jit(functools.partial(hunayn_forward, params))
    out = jax.block_until_ready(fwd(src, tgt, src_mask, tgt_mask))

    assert out.shape == (B, St, tgt_vocab), out.shape
    assert bool(jnp.all(jnp.isfinite(out)))
    print("KERNEL_OK")
</pallas_src>

<mosaic_0001>
module attributes {stable_mosaic.version = 11 : i64} {
  func.func @_proj_add_ln_kernel(%arg0: i32, %arg1: memref<16x32xbf16, #tpu.memory_space<vmem>>, %arg2: memref<16x32xbf16, #tpu.memory_space<vmem>>, %arg3: memref<32x32xbf16, #tpu.memory_space<vmem>>, %arg4: memref<1x32xf32, #tpu.memory_space<vmem>>, %arg5: memref<1x32xf32, #tpu.memory_space<vmem>>, %arg6: memref<1x32xf32, #tpu.memory_space<vmem>>, %arg7: memref<16x32xbf16, #tpu.memory_space<vmem>>) attributes {dimension_semantics = [#tpu.dimension_semantics<parallel>], iteration_bounds = array<i64: 1>, scalar_prefetch = 0 : i64, scratch_operands = 0 : i64, tpu.core_type = #tpu.core_type<tc>, window_params = [{transform_indices = @transform_0, window_bounds = array<i64: 16, 32>}, {transform_indices = @transform_1, window_bounds = array<i64: 16, 32>}, {pipeline_mode = #tpu.pipeline_mode<synchronous>, transform_indices = @transform_2, window_bounds = array<i64: 32, 32>}, {pipeline_mode = #tpu.pipeline_mode<synchronous>, transform_indices = @transform_3, window_bounds = array<i64: 1, 32>}, {pipeline_mode = #tpu.pipeline_mode<synchronous>, transform_indices = @transform_4, window_bounds = array<i64: 1, 32>}, {pipeline_mode = #tpu.pipeline_mode<synchronous>, transform_indices = @transform_5, window_bounds = array<i64: 1, 32>}, {transform_indices = @transform_6, window_bounds = array<i64: 16, 32>}]} {
    %c0 = arith.constant 0 : index
    %c0_0 = arith.constant 0 : index
    %0 = vector.load %arg1[%c0, %c0_0] : memref<16x32xbf16, #tpu.memory_space<vmem>>, vector<16x32xbf16>
    %c0_1 = arith.constant 0 : index
    %c0_2 = arith.constant 0 : index
    %1 = vector.load %arg3[%c0_1, %c0_2] : memref<32x32xbf16, #tpu.memory_space<vmem>>, vector<32x32xbf16>
    %cst = arith.constant dense<0.000000e+00> : vector<16x32xf32>
    %2 = tpu.matmul %0, %1, %cst {dimension_numbers = #tpu.dot_dimension_numbers<[1], [0], [0], [1], [0, 0, 1, 1], [], []>} : vector<16x32xbf16>, vector<32x32xbf16>, vector<16x32xf32> -> vector<16x32xf32>
    %c0_3 = arith.constant 0 : index
    %c0_4 = arith.constant 0 : index
    %3 = vector.load %arg4[%c0_3, %c0_4] : memref<1x32xf32, #tpu.memory_space<vmem>>, vector<1x32xf32>
    %4 = vector.broadcast %3 : vector<1x32xf32> to vector<16x32xf32>
    %5 = arith.addf %2, %4 : vector<16x32xf32>
    %c0_5 = arith.constant 0 : index
    %c0_6 = arith.constant 0 : index
    %6 = vector.load %arg2[%c0_5, %c0_6] : memref<16x32xbf16, #tpu.memory_space<vmem>>, vector<16x32xbf16>
    %7 = arith.extf %6 : vector<16x32xbf16> to vector<16x32xf32>
    %8 = arith.addf %5, %7 : vector<16x32xf32>
    %c0_7 = arith.constant 0 : index
    %c0_8 = arith.constant 0 : index
    %9 = vector.load %arg5[%c0_7, %c0_8] : memref<1x32xf32, #tpu.memory_space<vmem>>, vector<1x32xf32>
    %c0_9 = arith.constant 0 : index
    %c0_10 = arith.constant 0 : index
    %10 = vector.load %arg6[%c0_9, %c0_10] : memref<1x32xf32, #tpu.memory_space<vmem>>, vector<1x32xf32>
    %cst_11 = arith.constant dense<0.000000e+00> : vector<16xf32>
    %11 = vector.multi_reduction <add>, %8, %cst_11 [1] : vector<16x32xf32> to vector<16xf32>
    %12 = vector.shape_cast %11 : vector<16xf32> to vector<16x1xf32>
    %cst_12 = arith.constant 3.200000e+01 : f32
    %13 = vector.broadcast %cst_12 : f32 to vector<16x1xf32>
    %14 = arith.divf %12, %13 : vector<16x1xf32>
    %15 = vector.broadcast %14 : vector<16x1xf32> to vector<16x32xf32>
    %16 = arith.subf %8, %15 : vector<16x32xf32>
    %17 = arith.mulf %16, %16 : vector<16x32xf32>
    %cst_13 = arith.constant dense<0.000000e+00> : vector<16xf32>
    %18 = vector.multi_reduction <add>, %17, %cst_13 [1] : vector<16x32xf32> to vector<16xf32>
    %19 = vector.shape_cast %18 : vector<16xf32> to vector<16x1xf32>
    %cst_14 = arith.constant 3.200000e+01 : f32
    %20 = vector.broadcast %cst_14 : f32 to vector<16x1xf32>
    %21 = arith.divf %19, %20 : vector<16x1xf32>
    %22 = vector.broadcast %14 : vector<16x1xf32> to vector<16x32xf32>
    %23 = arith.subf %8, %22 : vector<16x32xf32>
    %cst_15 = arith.constant 9.99999974E-6 : f32
    %24 = vector.broadcast %cst_15 : f32 to vector<16x1xf32>
    %25 = arith.addf %21, %24 : vector<16x1xf32>
    %26 = math.rsqrt %25 : vector<16x1xf32>
    %27 = vector.broadcast %26 : vector<16x1xf32> to vector<16x32xf32>
    %28 = arith.mulf %23, %27 : vector<16x32xf32>
    %29 = vector.broadcast %9 : vector<1x32xf32> to vector<16x32xf32>
    %30 = arith.mulf %28, %29 : vector<16x32xf32>
    %31 = vector.broadcast %10 : vector<1x32xf32> to vector<16x32xf32>
    %32 = arith.addf %30, %31 : vector<16x32xf32>
    %33 = arith.truncf %32 : vector<16x32xf32> to vector<16x32xbf16>
    %c0_16 = arith.constant 0 : index
    %c0_17 = arith.constant 0 : index
    %34 = vector.load %arg7[%c0_16, %c0_17] : memref<16x32xbf16, #tpu.memory_space<vmem>>, vector<16x32xbf16>
    tpu.vector_store %arg7[%c0_16, %c0_17], %33 {strides = array<i32>} : memref<16x32xbf16, #tpu.memory_space<vmem>>, vector<16x32xbf16>,
    return
  }
  func.func @transform_0(%arg0: i32) -> (i32, i32) {
    %c0_i32 = arith.constant 0 : i32
    %c0_i32_0 = arith.constant 0 : i32
    return %arg0, %c0_i32 : i32, i32
  }
  func.func @transform_1(%arg0: i32) -> (i32, i32) {
    %c0_i32 = arith.constant 0 : i32
    %c0_i32_0 = arith.constant 0 : i32
    return %arg0, %c0_i32 : i32, i32
  }
  func.func @transform_2(%arg0: i32) -> (i32, i32) {
    %c0_i32 = arith.constant 0 : i32
    %c0_i32_0 = arith.constant 0 : i32
    %c0_i32_1 = arith.constant 0 : i32
    return %c0_i32, %c0_i32_0 : i32, i32
  }
  func.func @transform_3(%arg0: i32) -> (i32, i32) {
    %c0_i32 = arith.constant 0 : i32
    %c0_i32_0 = arith.constant 0 : i32
    %c0_i32_1 = arith.constant 0 : i32
    return %c0_i32, %c0_i32_0 : i32, i32
  }
  func.func @transform_4(%arg0: i32) -> (i32, i32) {
    %c0_i32 = arith.constant 0 : i32
    %c0_i32_0 = arith.constant 0 : i32
    %c0_i32_1 = arith.constant 0 : i32
    return %c0_i32, %c0_i32_0 : i32, i32
  }
  func.func @transform_5(%arg0: i32) -> (i32, i32) {
    %c0_i32 = arith.constant 0 : i32
    %c0_i32_0 = arith.constant 0 : i32
    %c0_i32_1 = arith.constant 0 : i32
    return %c0_i32, %c0_i32_0 : i32, i32
  }
  func.func @transform_6(%arg0: i32) -> (i32, i32) {
    %c0_i32 = arith.constant 0 : i32
    %c0_i32_0 = arith.constant 0 : i32
    return %arg0, %c0_i32 : i32, i32
  }
}

module attributes {stable_mosaic.version = 11 : i64} {
  func.func @_matmul_kernel(%arg0: i32, %arg1: i32, %arg2: i32, %arg3: memref<16x128xbf16, #tpu.memory_space<vmem>>, %arg4: memref<128x128xbf16, #tpu.memory_space<vmem>>, %arg5: memref<1x128xf32, #tpu.memory_space<vmem>>, %arg6: memref<16x128xbf16, #tpu.memory_space<vmem>>, %arg7: memref<16x128xf32, #tpu.memory_space<vmem>>) attributes {dimension_semantics = [#tpu.dimension_semantics<parallel>, #tpu.dimension_semantics<parallel>, #tpu.dimension_semantics<arbitrary>], iteration_bounds = array<i64: 1, 1, 1>, scalar_prefetch = 0 : i64, scratch_operands = 1 : i64, tpu.core_type = #tpu.core_type<tc>, window_params = [{transform_indices = @transform_0, window_bounds = array<i64: 16, 128>}, {transform_indices = @transform_1, window_bounds = array<i64: 128, 128>}, {transform_indices = @transform_2, window_bounds = array<i64: 1, 128>}, {transform_indices = @transform_3, window_bounds = array<i64: 16, 128>}]} {
    %c0_i32 = arith.constant 0 : i32
    %0 = arith.cmpi eq, %arg2, %c0_i32 : i32
    %1 = arith.extui %0 : i1 to i32
    %c0_i32_0 = arith.constant 0 : i32
    %2 = arith.cmpi ne, %1, %c0_i32_0 : i32
    scf.if %2 {
      %cst_10 = arith.constant 0.000000e+00 : f32
      %12 = vector.broadcast %cst_10 : f32 to vector<16x128xf32>
      %c0_11 = arith.constant 0 : index
      %c0_12 = arith.constant 0 : index
      %13 = vector.load %arg7[%c0_11, %c0_12] : memref<16x128xf32, #tpu.memory_space<vmem>>, vector<16x128xf32>
      tpu.vector_store %arg7[%c0_11, %c0_12], %12 {strides = array<i32>} : memref<16x128xf32, #tpu.memory_space<vmem>>, vector<16x128xf32>,
    } else {
    }
    %c0 = arith.constant 0 : index
    %c0_1 = arith.constant 0 : index
    %3 = vector.load %arg7[%c0, %c0_1] : memref<16x128xf32, #tpu.memory_space<vmem>>, vector<16x128xf32>
    %c0_2 = arith.constant 0 : index
    %c0_3 = arith.constant 0 : index
    %4 = vector.load %arg3[%c0_2, %c0_3] : memref<16x128xbf16, #tpu.memory_space<vmem>>, vector<16x128xbf16>
    %c0_4 = arith.constant 0 : index
    %c0_5 = arith.constant 0 : index
    %5 = vector.load %arg4[%c0_4, %c0_5] : memref<128x128xbf16, #tpu.memory_space<vmem>>, vector<128x128xbf16>
    %cst = arith.constant dense<0.000000e+00> : vector<16x128xf32>
    %6 = tpu.matmul %4, %5, %cst {dimension_numbers = #tpu.dot_dimension_numbers<[1], [0], [0], [1], [0, 0, 1, 1], [], []>} : vector<16x128xbf16>, vector<128x128xbf16>, vector<16x128xf32> -> vector<16x128xf32>
    %7 = arith.addf %3, %6 : vector<16x128xf32>
    %c0_6 = arith.constant 0 : index
    %c0_7 = arith.constant 0 : index
    %8 = vector.load %arg7[%c0_6, %c0_7] : memref<16x128xf32, #tpu.memory_space<vmem>>, vector<16x128xf32>
    tpu.vector_store %arg7[%c0_6, %c0_7], %7 {strides = array<i32>} : memref<16x128xf32, #tpu.memory_space<vmem>>, vector<16x128xf32>,
    %c0_i32_8 = arith.constant 0 : i32
    %9 = arith.cmpi eq, %arg2, %c0_i32_8 : i32
    %10 = arith.extui %9 : i1 to i32
    %c0_i32_9 = arith.constant 0 : i32
    %11 = arith.cmpi ne, %10, %c0_i32_9 : i32
    scf.if %11 {
      %c0_10 = arith.constant 0 : index
      %c0_11 = arith.constant 0 : index
      %12 = vector.load %arg7[%c0_10, %c0_11] : memref<16x128xf32, #tpu.memory_space<vmem>>, vector<16x128xf32>
      %c0_12 = arith.constant 0 : index
      %c0_13 = arith.constant 0 : index
      %13 = vector.load %arg5[%c0_12, %c0_13] : memref<1x128xf32, #tpu.memory_space<vmem>>, vector<1x128xf32>
      %14 = vector.broadcast %13 : vector<1x128xf32> to vector<16x128xf32>
      %15 = arith.addf %12, %14 : vector<16x128xf32>
      %16 = arith.truncf %15 : vector<16x128xf32> to vector<16x128xbf16>
      %c0_14 = arith.constant 0 : index
      %c0_15 = arith.constant 0 : index
      %17 = vector.load %arg6[%c0_14, %c0_15] : memref<16x128xbf16, #tpu.memory_space<vmem>>, vector<16x128xbf16>
      tpu.vector_store %arg6[%c0_14, %c0_15], %16 {strides = array<i32>} : memref<16x128xbf16, #tpu.memory_space<vmem>>, vector<16x128xbf16>,
    } else {
    }
    return
  }
  func.func @transform_0(%arg0: i32, %arg1: i32, %arg2: i32) -> (i32, i32) {
    %c0_i32 = arith.constant 0 : i32
    return %arg0, %arg2 : i32, i32
  }
  func.func @transform_1(%arg0: i32, %arg1: i32, %arg2: i32) -> (i32, i32) {
    %c0_i32 = arith.constant 0 : i32
    return %arg2, %arg1 : i32, i32
  }
  func.func @transform_2(%arg0: i32, %arg1: i32, %arg2: i32) -> (i32, i32) {
    %c0_i32 = arith.constant 0 : i32
    %c0_i32_0 = arith.constant 0 : i32
    return %c0_i32, %arg1 : i32, i32
  }
  func.func @transform_3(%arg0: i32, %arg1: i32, %arg2: i32) -> (i32, i32) {
    %c0_i32 = arith.constant 0 : i32
    return %arg0, %arg1 : i32, i32
  }
}

module attributes {stable_mosaic.version = 11 : i64} {
  func.func @_self_attn_kernel(%arg0: i32, %arg1: memref<1x8x96xbf16, #tpu.memory_space<vmem>>, %arg2: memref<1x1x8xf32, #tpu.memory_space<vmem>>, %arg3: memref<1x8x32xbf16, #tpu.memory_space<vmem>>) attributes {dimension_semantics = [#tpu.dimension_semantics<parallel>], iteration_bounds = array<i64: 2>, scalar_prefetch = 0 : i64, scratch_operands = 0 : i64, tpu.core_type = #tpu.core_type<tc>, window_params = [{transform_indices = @transform_0, window_bounds = array<i64: 1, 8, 96>}, {transform_indices = @transform_1, window_bounds = array<i64: 1, 1, 8>}, {transform_indices = @transform_2, window_bounds = array<i64: 1, 8, 32>}]} {
    %c0 = arith.constant 0 : index
    %c0_0 = arith.constant 0 : index
    %c0_1 = arith.constant 0 : index
    %0 = vector.load %arg1[%c0, %c0_0, %c0_1] : memref<1x8x96xbf16, #tpu.memory_space<vmem>>, vector<1x8x96xbf16>
    %1 = vector.shape_cast %0 : vector<1x8x96xbf16> to vector<8x96xbf16>
    %2 = vector.extract_strided_slice %1 {offsets = [0, 0], sizes = [8, 32], strides = [1, 1]} : vector<8x96xbf16> to vector<8x32xbf16>
    %3 = vector.extract_strided_slice %1 {offsets = [0, 32], sizes = [8, 32], strides = [1, 1]} : vector<8x96xbf16> to vector<8x32xbf16>
    %4 = vector.extract_strided_slice %1 {offsets = [0, 64], sizes = [8, 32], strides = [1, 1]} : vector<8x96xbf16> to vector<8x32xbf16>
    %c0_2 = arith.constant 0 : index
    %c0_3 = arith.constant 0 : index
    %c0_4 = arith.constant 0 : index
    %5 = vector.load %arg2[%c0_2, %c0_3, %c0_4] : memref<1x1x8xf32, #tpu.memory_space<vmem>>, vector<1x1x8xf32>
    %6 = vector.shape_cast %5 : vector<1x1x8xf32> to vector<1x8xf32>
    %7 = vector.extract_strided_slice %2 {offsets = [0, 0], sizes = [8, 8], strides = [1, 1]} : vector<8x32xbf16> to vector<8x8xbf16>
    %8 = vector.extract_strided_slice %3 {offsets = [0, 0], sizes = [8, 8], strides = [1, 1]} : vector<8x32xbf16> to vector<8x8xbf16>
    %9 = vector.extract_strided_slice %4 {offsets = [0, 0], sizes = [8, 8], strides = [1, 1]} : vector<8x32xbf16> to vector<8x8xbf16>
    %cst = arith.constant dense<0.000000e+00> : vector<8x8xf32>
    %10 = tpu.matmul %7, %8, %cst {dimension_numbers = #tpu.dot_dimension_numbers<[1], [1], [0], [0], [0, 0, 1, 0], [], []>} : vector<8x8xbf16>, vector<8x8xbf16>, vector<8x8xf32> -> vector<8x8xf32>
    %cst_5 = arith.constant 0.353553385 : f32
    %11 = vector.broadcast %cst_5 : f32 to vector<8x8xf32>
    %12 = arith.mulf %10, %11 : vector<8x8xf32>
    %13 = vector.broadcast %6 : vector<1x8xf32> to vector<8x8xf32>
    %14 = arith.addf %12, %13 : vector<8x8xf32>
    %cst_6 = arith.constant dense<0xFF800000> : vector<8xf32>
    %15 = vector.multi_reduction <maximumf>, %14, %cst_6 [1] : vector<8x8xf32> to vector<8xf32>
    %16 = vector.shape_cast %15 : vector<8xf32> to vector<8x1xf32>
    %17 = vector.broadcast %16 : vector<8x1xf32> to vector<8x8xf32>
    %18 = arith.subf %14, %17 : vector<8x8xf32>
    %19 = math.exp %18 : vector<8x8xf32>
    %cst_7 = arith.constant dense<0.000000e+00> : vector<8xf32>
    %20 = vector.multi_reduction <add>, %19, %cst_7 [1] : vector<8x8xf32> to vector<8xf32>
    %21 = vector.shape_cast %20 : vector<8xf32> to vector<8x1xf32>
    %22 = tpu.reciprocal %21 {approx = true} : vector<8x1xf32> -> vector<8x1xf32>
    %23 = vector.broadcast %22 : vector<8x1xf32> to vector<8x8xf32>
    %24 = arith.mulf %19, %23 : vector<8x8xf32>
    %25 = arith.truncf %24 : vector<8x8xf32> to vector<8x8xbf16>
    %cst_8 = arith.constant dense<0.000000e+00> : vector<8x8xf32>
    %26 = tpu.matmul %25, %9, %cst_8 {dimension_numbers = #tpu.dot_dimension_numbers<[1], [0], [0], [1], [0, 0, 1, 1], [], []>} : vector<8x8xbf16>, vector<8x8xbf16>, vector<8x8xf32> -> vector<8x8xf32>
    %27 = vector.extract_strided_slice %2 {offsets = [0, 8], sizes = [8, 8], strides = [1, 1]} : vector<8x32xbf16> to vector<8x8xbf16>
    %28 = vector.extract_strided_slice %3 {offsets = [0, 8], sizes = [8, 8], strides = [1, 1]} : vector<8x32xbf16> to vector<8x8xbf16>
    %29 = vector.extract_strided_slice %4 {offsets = [0, 8], sizes = [8, 8], strides = [1, 1]} : vector<8x32xbf16> to vector<8x8xbf16>
    %cst_9 = arith.constant dense<0.000000e+00> : vector<8x8xf32>
    %30 = tpu.matmul %27, %28, %cst_9 {dimension_numbers = #tpu.dot_dimension_numbers<[1], [1], [0], [0], [0, 0, 1, 0], [], []>} : vector<8x8xbf16>, vector<8x8xbf16>, vector<8x8xf32> -> vector<8x8xf32>
    %cst_10 = arith.constant 0.353553385 : f32
    %31 = vector.broadcast %cst_10 : f32 to vector<8x8xf32>
    %32 = arith.mulf %30, %31 : vector<8x8xf32>
    %33 = vector.broadcast %6 : vector<1x8xf32> to vector<8x8xf32>
    %34 = arith.addf %32, %33 : vector<8x8xf32>
    %cst_11 = arith.constant dense<0xFF800000> : vector<8xf32>
    %35 = vector.multi_reduction <maximumf>, %34, %cst_11 [1] : vector<8x8xf32> to vector<8xf32>
    %36 = vector.shape_cast %35 : vector<8xf32> to vector<8x1xf32>
    %37 = vector.broadcast %36 : vector<8x1xf32> to vector<8x8xf32>
    %38 = arith.subf %34, %37 : vector<8x8xf32>
    %39 = math.exp %38 : vector<8x8xf32>
    %cst_12 = arith.constant dense<0.000000e+00> : vector<8xf32>
    %40 = vector.multi_reduction <add>, %39, %cst_12 [1] : vector<8x8xf32> to vector<8xf32>
    %41 = vector.shape_cast %40 : vector<8xf32> to vector<8x1xf32>
    %42 = tpu.reciprocal %41 {approx = true} : vector<8x1xf32> -> vector<8x1xf32>
    %43 = vector.broadcast %42 : vector<8x1xf32> to vector<8x8xf32>
    %44 = arith.mulf %39, %43 : vector<8x8xf32>
    %45 = arith.truncf %44 : vector<8x8xf32> to vector<8x8xbf16>
    %cst_13 = arith.constant dense<0.000000e+00> : vector<8x8xf32>
    %46 = tpu.matmul %45, %29, %cst_13 {dimension_numbers = #tpu.dot_dimension_numbers<[1], [0], [0], [1], [0, 0, 1, 1], [], []>} : vector<8x8xbf16>, vector<8x8xbf16>, vector<8x8xf32> -> vector<8x8xf32>
    %47 = vector.extract_strided_slice %2 {offsets = [0, 16], sizes = [8, 8], strides = [1, 1]} : vector<8x32xbf16> to vector<8x8xbf16>
    %48 = vector.extract_strided_slice %3 {offsets = [0, 16], sizes = [8, 8], strides = [1, 1]} : vector<8x32xbf16> to vector<8x8xbf16>
    %49 = vector.extract_strided_slice %4 {offsets = [0, 16], sizes = [8, 8], strides = [1, 1]} : vector<8x32xbf16> to vector<8x8xbf16>
    %cst_14 = arith.constant dense<0.000000e+00> : vector<8x8xf32>
    %50 = tpu.matmul %47, %48, %cst_14 {dimension_numbers = #tpu.dot_dimension_numbers<[1], [1], [0], [0], [0, 0, 1, 0], [], []>} : vector<8x8xbf16>, vector<8x8xbf16>, vector<8x8xf32> -> vector<8x8xf32>
    %cst_15 = arith.constant 0.353553385 : f32
    %51 = vector.broadcast %cst_15 : f32 to vector<8x8xf32>
    %52 = arith.mulf %50, %51 : vector<8x8xf32>
    %53 = vector.broadcast %6 : vector<1x8xf32> to vector<8x8xf32>
    %54 = arith.addf %52, %53 : vector<8x8xf32>
    %cst_16 = arith.constant dense<0xFF800000> : vector<8xf32>
    %55 = vector.multi_reduction <maximumf>, %54, %cst_16 [1] : vector<8x8xf32> to vector<8xf32>
    %56 = vector.shape_cast %55 : vector<8xf32> to vector<8x1xf32>
    %57 = vector.broadcast %56 : vector<8x1xf32> to vector<8x8xf32>
    %58 = arith.subf %54, %57 : vector<8x8xf32>
    %59 = math.exp %58 : vector<8x8xf32>
    %cst_17 = arith.constant dense<0.000000e+00> : vector<8xf32>
    %60 = vector.multi_reduction <add>, %59, %cst_17 [1] : vector<8x8xf32> to vector<8xf32>
    %61 = vector.shape_cast %60 : vector<8xf32> to vector<8x1xf32>
    %62 = tpu.reciprocal %61 {approx = true} : vector<8x1xf32> -> vector<8x1xf32>
    %63 = vector.broadcast %62 : vector<8x1xf32> to vector<8x8xf32>
    %64 = arith.mulf %59, %63 : vector<8x8xf32>
    %65 = arith.truncf %64 : vector<8x8xf32> to vector<8x8xbf16>
    %cst_18 = arith.constant dense<0.000000e+00> : vector<8x8xf32>
    %66 = tpu.matmul %65, %49, %cst_18 {dimension_numbers = #tpu.dot_dimension_numbers<[1], [0], [0], [1], [0, 0, 1, 1], [], []>} : vector<8x8xbf16>, vector<8x8xbf16>, vector<8x8xf32> -> vector<8x8xf32>
    %67 = vector.extract_strided_slice %2 {offsets = [0, 24], sizes = [8, 8], strides = [1, 1]} : vector<8x32xbf16> to vector<8x8xbf16>
    %68 = vector.extract_strided_slice %3 {offsets = [0, 24], sizes = [8, 8], strides = [1, 1]} : vector<8x32xbf16> to vector<8x8xbf16>
    %69 = vector.extract_strided_slice %4 {offsets = [0, 24], sizes = [8, 8], strides = [1, 1]} : vector<8x32xbf16> to vector<8x8xbf16>
    %cst_19 = arith.constant dense<0.000000e+00> : vector<8x8xf32>
    %70 = tpu.matmul %67, %68, %cst_19 {dimension_numbers = #tpu.dot_dimension_numbers<[1], [1], [0], [0], [0, 0, 1, 0], [], []>} : vector<8x8xbf16>, vector<8x8xbf16>, vector<8x8xf32> -> vector<8x8xf32>
    %cst_20 = arith.constant 0.353553385 : f32
    %71 = vector.broadcast %cst_20 : f32 to vector<8x8xf32>
    %72 = arith.mulf %70, %71 : vector<8x8xf32>
    %73 = vector.broadcast %6 : vector<1x8xf32> to vector<8x8xf32>
    %74 = arith.addf %72, %73 : vector<8x8xf32>
    %cst_21 = arith.constant dense<0xFF800000> : vector<8xf32>
    %75 = vector.multi_reduction <maximumf>, %74, %cst_21 [1] : vector<8x8xf32> to vector<8xf32>
    %76 = vector.shape_cast %75 : vector<8xf32> to vector<8x1xf32>
    %77 = vector.broadcast %76 : vector<8x1xf32> to vector<8x8xf32>
    %78 = arith.subf %74, %77 : vector<8x8xf32>
    %79 = math.exp %78 : vector<8x8xf32>
    %cst_22 = arith.constant dense<0.000000e+00> : vector<8xf32>
    %80 = vector.multi_reduction <add>, %79, %cst_22 [1] : vector<8x8xf32> to vector<8xf32>
    %81 = vector.shape_cast %80 : vector<8xf32> to vector<8x1xf32>
    %82 = tpu.reciprocal %81 {approx = true} : vector<8x1xf32> -> vector<8x1xf32>
    %83 = vector.broadcast %82 : vector<8x1xf32> to vector<8x8xf32>
    %84 = arith.mulf %79, %83 : vector<8x8xf32>
    %85 = arith.truncf %84 : vector<8x8xf32> to vector<8x8xbf16>
    %cst_23 = arith.constant dense<0.000000e+00> : vector<8x8xf32>
    %86 = tpu.matmul %85, %69, %cst_23 {dimension_numbers = #tpu.dot_dimension_numbers<[1], [0], [0], [1], [0, 0, 1, 1], [], []>} : vector<8x8xbf16>, vector<8x8xbf16>, vector<8x8xf32> -> vector<8x8xf32>
    %87 = tpu.concatenate %26, %46, %66, %86 in 1 : vector<8x8xf32>, vector<8x8xf32>, vector<8x8xf32>, vector<8x8xf32> -> vector<8x32xf32>
    %88 = arith.truncf %87 : vector<8x32xf32> to vector<8x32xbf16>
    %c0_24 = arith.constant 0 : index
    %c0_25 = arith.constant 0 : index
    %c0_26 = arith.constant 0 : index
    %89 = vector.load %arg3[%c0_24, %c0_25, %c0_26] : memref<1x8x32xbf16, #tpu.memory_space<vmem>>, vector<1x8x32xbf16>
    %90 = vector.shape_cast %89 : vector<1x8x32xbf16> to vector<8x32xbf16>
    %91 = vector.shape_cast %88 : vector<8x32xbf16> to vector<1x8x32xbf16>
    tpu.vector_store %arg3[%c0_24, %c0_25, %c0_26], %91 {strides = array<i32>} : memref<1x8x32xbf16, #tpu.memory_space<vmem>>, vector<1x8x32xbf16>,
    return
  }
  func.func @transform_0(%arg0: i32) -> (i32, i32, i32) {
    %c0_i32 = arith.constant 0 : i32
    %c0_i32_0 = arith.constant 0 : i32
    %c0_i32_1 = arith.constant 0 : i32
    return %arg0, %c0_i32, %c0_i32_0 : i32, i32, i32
  }
  func.func @transform_1(%arg0: i32) -> (i32, i32, i32) {
    %c0_i32 = arith.constant 0 : i32
    %c0_i32_0 = arith.constant 0 : i32
    %c0_i32_1 = arith.constant 0 : i32
    return %arg0, %c0_i32, %c0_i32_0 : i32, i32, i32
  }
  func.func @transform_2(%arg0: i32) -> (i32, i32, i32) {
    %c0_i32 = arith.constant 0 : i32
    %c0_i32_0 = arith.constant 0 : i32
    %c0_i32_1 = arith.constant 0 : i32
    return %arg0, %c0_i32, %c0_i32_0 : i32, i32, i32
  }
}

module attributes {stable_mosaic.version = 11 : i64} {
  func.func @_ffn_add_ln_kernel(%arg0: i32, %arg1: memref<16x32xbf16, #tpu.memory_space<vmem>>, %arg2: memref<32x64xbf16, #tpu.memory_space<vmem>>, %arg3: memref<1x64xf32, #tpu.memory_space<vmem>>, %arg4: memref<64x32xbf16, #tpu.memory_space<vmem>>, %arg5: memref<1x32xf32, #tpu.memory_space<vmem>>, %arg6: memref<1x32xf32, #tpu.memory_space<vmem>>, %arg7: memref<1x32xf32, #tpu.memory_space<vmem>>, %arg8: memref<16x32xbf16, #tpu.memory_space<vmem>>) attributes {dimension_semantics = [#tpu.dimension_semantics<parallel>], iteration_bounds = array<i64: 1>, scalar_prefetch = 0 : i64, scratch_operands = 0 : i64, tpu.core_type = #tpu.core_type<tc>, window_params = [{transform_indices = @transform_0, window_bounds = array<i64: 16, 32>}, {pipeline_mode = #tpu.pipeline_mode<synchronous>, transform_indices = @transform_1, window_bounds = array<i64: 32, 64>}, {pipeline_mode = #tpu.pipeline_mode<synchronous>, transform_indices = @transform_2, window_bounds = array<i64: 1, 64>}, {pipeline_mode = #tpu.pipeline_mode<synchronous>, transform_indices = @transform_3, window_bounds = array<i64: 64, 32>}, {pipeline_mode = #tpu.pipeline_mode<synchronous>, transform_indices = @transform_4, window_bounds = array<i64: 1, 32>}, {pipeline_mode = #tpu.pipeline_mode<synchronous>, transform_indices = @transform_5, window_bounds = array<i64: 1, 32>}, {pipeline_mode = #tpu.pipeline_mode<synchronous>, transform_indices = @transform_6, window_bounds = array<i64: 1, 32>}, {transform_indices = @transform_7, window_bounds = array<i64: 16, 32>}]} {
    %c0 = arith.constant 0 : index
    %c0_0 = arith.constant 0 : index
    %0 = vector.load %arg1[%c0, %c0_0] : memref<16x32xbf16, #tpu.memory_space<vmem>>, vector<16x32xbf16>
    %c0_1 = arith.constant 0 : index
    %c0_2 = arith.constant 0 : index
    %1 = vector.load %arg2[%c0_1, %c0_2] : memref<32x64xbf16, #tpu.memory_space<vmem>>, vector<32x64xbf16>
    %cst = arith.constant dense<0.000000e+00> : vector<16x64xf32>
    %2 = tpu.matmul %0, %1, %cst {dimension_numbers = #tpu.dot_dimension_numbers<[1], [0], [0], [1], [0, 0, 1, 1], [], []>} : vector<16x32xbf16>, vector<32x64xbf16>, vector<16x64xf32> -> vector<16x64xf32>
    %c0_3 = arith.constant 0 : index
    %c0_4 = arith.constant 0 : index
    %3 = vector.load %arg3[%c0_3, %c0_4] : memref<1x64xf32, #tpu.memory_space<vmem>>, vector<1x64xf32>
    %4 = vector.broadcast %3 : vector<1x64xf32> to vector<16x64xf32>
    %5 = arith.addf %2, %4 : vector<16x64xf32>
    %cst_5 = arith.constant 0.000000e+00 : f32
    %6 = vector.broadcast %cst_5 : f32 to vector<16x64xf32>
    %7 = arith.maximumf %5, %6 : vector<16x64xf32>
    %8 = arith.truncf %7 : vector<16x64xf32> to vector<16x64xbf16>
    %c0_6 = arith.constant 0 : index
    %c0_7 = arith.constant 0 : index
    %9 = vector.load %arg4[%c0_6, %c0_7] : memref<64x32xbf16, #tpu.memory_space<vmem>>, vector<64x32xbf16>
    %cst_8 = arith.constant dense<0.000000e+00> : vector<16x32xf32>
    %10 = tpu.matmul %8, %9, %cst_8 {dimension_numbers = #tpu.dot_dimension_numbers<[1], [0], [0], [1], [0, 0, 1, 1], [], []>} : vector<16x64xbf16>, vector<64x32xbf16>, vector<16x32xf32> -> vector<16x32xf32>
    %c0_9 = arith.constant 0 : index
    %c0_10 = arith.constant 0 : index
    %11 = vector.load %arg5[%c0_9, %c0_10] : memref<1x32xf32, #tpu.memory_space<vmem>>, vector<1x32xf32>
    %12 = vector.broadcast %11 : vector<1x32xf32> to vector<16x32xf32>
    %13 = arith.addf %10, %12 : vector<16x32xf32>
    %14 = arith.extf %0 : vector<16x32xbf16> to vector<16x32xf32>
    %15 = arith.addf %13, %14 : vector<16x32xf32>
    %c0_11 = arith.constant 0 : index
    %c0_12 = arith.constant 0 : index
    %16 = vector.load %arg6[%c0_11, %c0_12] : memref<1x32xf32, #tpu.memory_space<vmem>>, vector<1x32xf32>
    %c0_13 = arith.constant 0 : index
    %c0_14 = arith.constant 0 : index
    %17 = vector.load %arg7[%c0_13, %c0_14] : memref<1x32xf32, #tpu.memory_space<vmem>>, vector<1x32xf32>
    %cst_15 = arith.constant dense<0.000000e+00> : vector<16xf32>
    %18 = vector.multi_reduction <add>, %15, %cst_15 [1] : vector<16x32xf32> to vector<16xf32>
    %19 = vector.shape_cast %18 : vector<16xf32> to vector<16x1xf32>
    %cst_16 = arith.constant 3.200000e+01 : f32
    %20 = vector.broadcast %cst_16 : f32 to vector<16x1xf32>
    %21 = arith.divf %19, %20 : vector<16x1xf32>
    %22 = vector.broadcast %21 : vector<16x1xf32> to vector<16x32xf32>
    %23 = arith.subf %15, %22 : vector<16x32xf32>
    %24 = arith.mulf %23, %23 : vector<16x32xf32>
    %cst_17 = arith.constant dense<0.000000e+00> : vector<16xf32>
    %25 = vector.multi_reduction <add>, %24, %cst_17 [1] : vector<16x32xf32> to vector<16xf32>
    %26 = vector.shape_cast %25 : vector<16xf32> to vector<16x1xf32>
    %cst_18 = arith.constant 3.200000e+01 : f32
    %27 = vector.broadcast %cst_18 : f32 to vector<16x1xf32>
    %28 = arith.divf %26, %27 : vector<16x1xf32>
    %29 = vector.broadcast %21 : vector<16x1xf32> to vector<16x32xf32>
    %30 = arith.subf %15, %29 : vector<16x32xf32>
    %cst_19 = arith.constant 9.99999974E-6 : f32
    %31 = vector.broadcast %cst_19 : f32 to vector<16x1xf32>
    %32 = arith.addf %28, %31 : vector<16x1xf32>
    %33 = math.rsqrt %32 : vector<16x1xf32>
    %34 = vector.broadcast %33 : vector<16x1xf32> to vector<16x32xf32>
    %35 = arith.mulf %30, %34 : vector<16x32xf32>
    %36 = vector.broadcast %16 : vector<1x32xf32> to vector<16x32xf32>
    %37 = arith.mulf %35, %36 : vector<16x32xf32>
    %38 = vector.broadcast %17 : vector<1x32xf32> to vector<16x32xf32>
    %39 = arith.addf %37, %38 : vector<16x32xf32>
    %40 = arith.truncf %39 : vector<16x32xf32> to vector<16x32xbf16>
    %c0_20 = arith.constant 0 : index
    %c0_21 = arith.constant 0 : index
    %41 = vector.load %arg8[%c0_20, %c0_21] : memref<16x32xbf16, #tpu.memory_space<vmem>>, vector<16x32xbf16>
    tpu.vector_store %arg8[%c0_20, %c0_21], %40 {strides = array<i32>} : memref<16x32xbf16, #tpu.memory_space<vmem>>, vector<16x32xbf16>,
    return
  }
  func.func @transform_0(%arg0: i32) -> (i32, i32) {
    %c0_i32 = arith.constant 0 : i32
    %c0_i32_0 = arith.constant 0 : i32
    return %arg0, %c0_i32 : i32, i32
  }
  func.func @transform_1(%arg0: i32) -> (i32, i32) {
    %c0_i32 = arith.constant 0 : i32
    %c0_i32_0 = arith.constant 0 : i32
    %c0_i32_1 = arith.constant 0 : i32
    return %c0_i32, %c0_i32_0 : i32, i32
  }
  func.func @transform_2(%arg0: i32) -> (i32, i32) {
    %c0_i32 = arith.constant 0 : i32
    %c0_i32_0 = arith.constant 0 : i32
    %c0_i32_1 = arith.constant 0 : i32
    return %c0_i32, %c0_i32_0 : i32, i32
  }
  func.func @transform_3(%arg0: i32) -> (i32, i32) {
    %c0_i32 = arith.constant 0 : i32
    %c0_i32_0 = arith.constant 0 : i32
    %c0_i32_1 = arith.constant 0 : i32
    return %c0_i32, %c0_i32_0 : i32, i32
  }
  func.func @transform_4(%arg0: i32) -> (i32, i32) {
    %c0_i32 = arith.constant 0 : i32
    %c0_i32_0 = arith.constant 0 : i32
    %c0_i32_1 = arith.constant 0 : i32
    return %c0_i32, %c0_i32_0 : i32, i32
  }
  func.func @transform_5(%arg0: i32) -> (i32, i32) {
    %c0_i32 = arith.constant 0 : i32
    %c0_i32_0 = arith.constant 0 : i32
    %c0_i32_1 = arith.constant 0 : i32
    return %c0_i32, %c0_i32_0 : i32, i32
  }
  func.func @transform_6(%arg0: i32) -> (i32, i32) {
    %c0_i32 = arith.constant 0 : i32
    %c0_i32_0 = arith.constant 0 : i32
    %c0_i32_1 = arith.constant 0 : i32
    return %c0_i32, %c0_i32_0 : i32, i32
  }
  func.func @transform_7(%arg0: i32) -> (i32, i32) {
    %c0_i32 = arith.constant 0 : i32
    %c0_i32_0 = arith.constant 0 : i32
    return %arg0, %c0_i32 : i32, i32
  }
}

module attributes {stable_mosaic.version = 11 : i64} {
  func.func @_self_attn_kernel(%arg0: i32, %arg1: memref<1x8x96xbf16, #tpu.memory_space<vmem>>, %arg2: memref<1x1x8xf32, #tpu.memory_space<vmem>>, %arg3: memref<1x8x32xbf16, #tpu.memory_space<vmem>>) attributes {dimension_semantics = [#tpu.dimension_semantics<parallel>], iteration_bounds = array<i64: 2>, scalar_prefetch = 0 : i64, scratch_operands = 0 : i64, tpu.core_type = #tpu.core_type<tc>, window_params = [{transform_indices = @transform_0, window_bounds = array<i64: 1, 8, 96>}, {transform_indices = @transform_1, window_bounds = array<i64: 1, 1, 8>}, {transform_indices = @transform_2, window_bounds = array<i64: 1, 8, 32>}]} {
    %c0 = arith.constant 0 : index
    %c0_0 = arith.constant 0 : index
    %c0_1 = arith.constant 0 : index
    %0 = vector.load %arg1[%c0, %c0_0, %c0_1] : memref<1x8x96xbf16, #tpu.memory_space<vmem>>, vector<1x8x96xbf16>
    %1 = vector.shape_cast %0 : vector<1x8x96xbf16> to vector<8x96xbf16>
    %2 = vector.extract_strided_slice %1 {offsets = [0, 0], sizes = [8, 32], strides = [1, 1]} : vector<8x96xbf16> to vector<8x32xbf16>
    %3 = vector.extract_strided_slice %1 {offsets = [0, 32], sizes = [8, 32], strides = [1, 1]} : vector<8x96xbf16> to vector<8x32xbf16>
    %4 = vector.extract_strided_slice %1 {offsets = [0, 64], sizes = [8, 32], strides = [1, 1]} : vector<8x96xbf16> to vector<8x32xbf16>
    %c0_2 = arith.constant 0 : index
    %c0_3 = arith.constant 0 : index
    %c0_4 = arith.constant 0 : index
    %5 = vector.load %arg2[%c0_2, %c0_3, %c0_4] : memref<1x1x8xf32, #tpu.memory_space<vmem>>, vector<1x1x8xf32>
    %6 = vector.shape_cast %5 : vector<1x1x8xf32> to vector<1x8xf32>
    %7 = tpu.iota {dimensions = array<i32: 0>} : vector<8x8xi32>
    %8 = tpu.iota {dimensions = array<i32: 1>} : vector<8x8xi32>
    %9 = arith.cmpi sle, %8, %7 : vector<8x8xi32>
    %cst = arith.constant 0.000000e+00 : f32
    %cst_5 = arith.constant -1.000000e+09 : f32
    %10 = vector.broadcast %cst : f32 to vector<8x8xf32>
    %11 = vector.broadcast %cst_5 : f32 to vector<8x8xf32>
    %12 = arith.select %9, %10, %11 : vector<8x8xi1>, vector<8x8xf32>
    %13 = vector.broadcast %6 : vector<1x8xf32> to vector<8x8xf32>
    %14 = arith.addf %13, %12 : vector<8x8xf32>
    %15 = vector.extract_strided_slice %2 {offsets = [0, 0], sizes = [8, 8], strides = [1, 1]} : vector<8x32xbf16> to vector<8x8xbf16>
    %16 = vector.extract_strided_slice %3 {offsets = [0, 0], sizes = [8, 8], strides = [1, 1]} : vector<8x32xbf16> to vector<8x8xbf16>
    %17 = vector.extract_strided_slice %4 {offsets = [0, 0], sizes = [8, 8], strides = [1, 1]} : vector<8x32xbf16> to vector<8x8xbf16>
    %cst_6 = arith.constant dense<0.000000e+00> : vector<8x8xf32>
    %18 = tpu.matmul %15, %16, %cst_6 {dimension_numbers = #tpu.dot_dimension_numbers<[1], [1], [0], [0], [0, 0, 1, 0], [], []>} : vector<8x8xbf16>, vector<8x8xbf16>, vector<8x8xf32> -> vector<8x8xf32>
    %cst_7 = arith.constant 0.353553385 : f32
    %19 = vector.broadcast %cst_7 : f32 to vector<8x8xf32>
    %20 = arith.mulf %18, %19 : vector<8x8xf32>
    %21 = arith.addf %20, %14 : vector<8x8xf32>
    %cst_8 = arith.constant dense<0xFF800000> : vector<8xf32>
    %22 = vector.multi_reduction <maximumf>, %21, %cst_8 [1] : vector<8x8xf32> to vector<8xf32>
    %23 = vector.shape_cast %22 : vector<8xf32> to vector<8x1xf32>
    %24 = vector.broadcast %23 : vector<8x1xf32> to vector<8x8xf32>
    %25 = arith.subf %21, %24 : vector<8x8xf32>
    %26 = math.exp %25 : vector<8x8xf32>
    %cst_9 = arith.constant dense<0.000000e+00> : vector<8xf32>
    %27 = vector.multi_reduction <add>, %26, %cst_9 [1] : vector<8x8xf32> to vector<8xf32>
    %28 = vector.shape_cast %27 : vector<8xf32> to vector<8x1xf32>
    %29 = tpu.reciprocal %28 {approx = true} : vector<8x1xf32> -> vector<8x1xf32>
    %30 = vector.broadcast %29 : vector<8x1xf32> to vector<8x8xf32>
    %31 = arith.mulf %26, %30 : vector<8x8xf32>
    %32 = arith.truncf %31 : vector<8x8xf32> to vector<8x8xbf16>
    %cst_10 = arith.constant dense<0.000000e+00> : vector<8x8xf32>
    %33 = tpu.matmul %32, %17, %cst_10 {dimension_numbers = #tpu.dot_dimension_numbers<[1], [0], [0], [1], [0, 0, 1, 1], [], []>} : vector<8x8xbf16>, vector<8x8xbf16>, vector<8x8xf32> -> vector<8x8xf32>
    %34 = vector.extract_strided_slice %2 {offsets = [0, 8], sizes = [8, 8], strides = [1, 1]} : vector<8x32xbf16> to vector<8x8xbf16>
    %35 = vector.extract_strided_slice %3 {offsets = [0, 8], sizes = [8, 8], strides = [1, 1]} : vector<8x32xbf16> to vector<8x8xbf16>
    %36 = vector.extract_strided_slice %4 {offsets = [0, 8], sizes = [8, 8], strides = [1, 1]} : vector<8x32xbf16> to vector<8x8xbf16>
    %cst_11 = arith.constant dense<0.000000e+00> : vector<8x8xf32>
    %37 = tpu.matmul %34, %35, %cst_11 {dimension_numbers = #tpu.dot_dimension_numbers<[1], [1], [0], [0], [0, 0, 1, 0], [], []>} : vector<8x8xbf16>, vector<8x8xbf16>, vector<8x8xf32> -> vector<8x8xf32>
    %cst_12 = arith.constant 0.353553385 : f32
    %38 = vector.broadcast %cst_12 : f32 to vector<8x8xf32>
    %39 = arith.mulf %37, %38 : vector<8x8xf32>
    %40 = arith.addf %39, %14 : vector<8x8xf32>
    %cst_13 = arith.constant dense<0xFF800000> : vector<8xf32>
    %41 = vector.multi_reduction <maximumf>, %40, %cst_13 [1] : vector<8x8xf32> to vector<8xf32>
    %42 = vector.shape_cast %41 : vector<8xf32> to vector<8x1xf32>
    %43 = vector.broadcast %42 : vector<8x1xf32> to vector<8x8xf32>
    %44 = arith.subf %40, %43 : vector<8x8xf32>
    %45 = math.exp %44 : vector<8x8xf32>
    %cst_14 = arith.constant dense<0.000000e+00> : vector<8xf32>
    %46 = vector.multi_reduction <add>, %45, %cst_14 [1] : vector<8x8xf32> to vector<8xf32>
    %47 = vector.shape_cast %46 : vector<8xf32> to vector<8x1xf32>
    %48 = tpu.reciprocal %47 {approx = true} : vector<8x1xf32> -> vector<8x1xf32>
    %49 = vector.broadcast %48 : vector<8x1xf32> to vector<8x8xf32>
    %50 = arith.mulf %45, %49 : vector<8x8xf32>
    %51 = arith.truncf %50 : vector<8x8xf32> to vector<8x8xbf16>
    %cst_15 = arith.constant dense<0.000000e+00> : vector<8x8xf32>
    %52 = tpu.matmul %51, %36, %cst_15 {dimension_numbers = #tpu.dot_dimension_numbers<[1], [0], [0], [1], [0, 0, 1, 1], [], []>} : vector<8x8xbf16>, vector<8x8xbf16>, vector<8x8xf32> -> vector<8x8xf32>
    %53 = vector.extract_strided_slice %2 {offsets = [0, 16], sizes = [8, 8], strides = [1, 1]} : vector<8x32xbf16> to vector<8x8xbf16>
    %54 = vector.extract_strided_slice %3 {offsets = [0, 16], sizes = [8, 8], strides = [1, 1]} : vector<8x32xbf16> to vector<8x8xbf16>
    %55 = vector.extract_strided_slice %4 {offsets = [0, 16], sizes = [8, 8], strides = [1, 1]} : vector<8x32xbf16> to vector<8x8xbf16>
    %cst_16 = arith.constant dense<0.000000e+00> : vector<8x8xf32>
    %56 = tpu.matmul %53, %54, %cst_16 {dimension_numbers = #tpu.dot_dimension_numbers<[1], [1], [0], [0], [0, 0, 1, 0], [], []>} : vector<8x8xbf16>, vector<8x8xbf16>, vector<8x8xf32> -> vector<8x8xf32>
    %cst_17 = arith.constant 0.353553385 : f32
    %57 = vector.broadcast %cst_17 : f32 to vector<8x8xf32>
    %58 = arith.mulf %56, %57 : vector<8x8xf32>
    %59 = arith.addf %58, %14 : vector<8x8xf32>
    %cst_18 = arith.constant dense<0xFF800000> : vector<8xf32>
    %60 = vector.multi_reduction <maximumf>, %59, %cst_18 [1] : vector<8x8xf32> to vector<8xf32>
    %61 = vector.shape_cast %60 : vector<8xf32> to vector<8x1xf32>
    %62 = vector.broadcast %61 : vector<8x1xf32> to vector<8x8xf32>
    %63 = arith.subf %59, %62 : vector<8x8xf32>
    %64 = math.exp %63 : vector<8x8xf32>
    %cst_19 = arith.constant dense<0.000000e+00> : vector<8xf32>
    %65 = vector.multi_reduction <add>, %64, %cst_19 [1] : vector<8x8xf32> to vector<8xf32>
    %66 = vector.shape_cast %65 : vector<8xf32> to vector<8x1xf32>
    %67 = tpu.reciprocal %66 {approx = true} : vector<8x1xf32> -> vector<8x1xf32>
    %68 = vector.broadcast %67 : vector<8x1xf32> to vector<8x8xf32>
    %69 = arith.mulf %64, %68 : vector<8x8xf32>
    %70 = arith.truncf %69 : vector<8x8xf32> to vector<8x8xbf16>
    %cst_20 = arith.constant dense<0.000000e+00> : vector<8x8xf32>
    %71 = tpu.matmul %70, %55, %cst_20 {dimension_numbers = #tpu.dot_dimension_numbers<[1], [0], [0], [1], [0, 0, 1, 1], [], []>} : vector<8x8xbf16>, vector<8x8xbf16>, vector<8x8xf32> -> vector<8x8xf32>
    %72 = vector.extract_strided_slice %2 {offsets = [0, 24], sizes = [8, 8], strides = [1, 1]} : vector<8x32xbf16> to vector<8x8xbf16>
    %73 = vector.extract_strided_slice %3 {offsets = [0, 24], sizes = [8, 8], strides = [1, 1]} : vector<8x32xbf16> to vector<8x8xbf16>
    %74 = vector.extract_strided_slice %4 {offsets = [0, 24], sizes = [8, 8], strides = [1, 1]} : vector<8x32xbf16> to vector<8x8xbf16>
    %cst_21 = arith.constant dense<0.000000e+00> : vector<8x8xf32>
    %75 = tpu.matmul %72, %73, %cst_21 {dimension_numbers = #tpu.dot_dimension_numbers<[1], [1], [0], [0], [0, 0, 1, 0], [], []>} : vector<8x8xbf16>, vector<8x8xbf16>, vector<8x8xf32> -> vector<8x8xf32>
    %cst_22 = arith.constant 0.353553385 : f32
    %76 = vector.broadcast %cst_22 : f32 to vector<8x8xf32>
    %77 = arith.mulf %75, %76 : vector<8x8xf32>
    %78 = arith.addf %77, %14 : vector<8x8xf32>
    %cst_23 = arith.constant dense<0xFF800000> : vector<8xf32>
    %79 = vector.multi_reduction <maximumf>, %78, %cst_23 [1] : vector<8x8xf32> to vector<8xf32>
    %80 = vector.shape_cast %79 : vector<8xf32> to vector<8x1xf32>
    %81 = vector.broadcast %80 : vector<8x1xf32> to vector<8x8xf32>
    %82 = arith.subf %78, %81 : vector<8x8xf32>
    %83 = math.exp %82 : vector<8x8xf32>
    %cst_24 = arith.constant dense<0.000000e+00> : vector<8xf32>
    %84 = vector.multi_reduction <add>, %83, %cst_24 [1] : vector<8x8xf32> to vector<8xf32>
    %85 = vector.shape_cast %84 : vector<8xf32> to vector<8x1xf32>
    %86 = tpu.reciprocal %85 {approx = true} : vector<8x1xf32> -> vector<8x1xf32>
    %87 = vector.broadcast %86 : vector<8x1xf32> to vector<8x8xf32>
    %88 = arith.mulf %83, %87 : vector<8x8xf32>
    %89 = arith.truncf %88 : vector<8x8xf32> to vector<8x8xbf16>
    %cst_25 = arith.constant dense<0.000000e+00> : vector<8x8xf32>
    %90 = tpu.matmul %89, %74, %cst_25 {dimension_numbers = #tpu.dot_dimension_numbers<[1], [0], [0], [1], [0, 0, 1, 1], [], []>} : vector<8x8xbf16>, vector<8x8xbf16>, vector<8x8xf32> -> vector<8x8xf32>
    %91 = tpu.concatenate %33, %52, %71, %90 in 1 : vector<8x8xf32>, vector<8x8xf32>, vector<8x8xf32>, vector<8x8xf32> -> vector<8x32xf32>
    %92 = arith.truncf %91 : vector<8x32xf32> to vector<8x32xbf16>
    %c0_26 = arith.constant 0 : index
    %c0_27 = arith.constant 0 : index
    %c0_28 = arith.constant 0 : index
    %93 = vector.load %arg3[%c0_26, %c0_27, %c0_28] : memref<1x8x32xbf16, #tpu.memory_space<vmem>>, vector<1x8x32xbf16>
    %94 = vector.shape_cast %93 : vector<1x8x32xbf16> to vector<8x32xbf16>
    %95 = vector.shape_cast %92 : vector<8x32xbf16> to vector<1x8x32xbf16>
    tpu.vector_store %arg3[%c0_26, %c0_27, %c0_28], %95 {strides = array<i32>} : memref<1x8x32xbf16, #tpu.memory_space<vmem>>, vector<1x8x32xbf16>,
    return
  }
  func.func @transform_0(%arg0: i32) -> (i32, i32, i32) {
    %c0_i32 = arith.constant 0 : i32
    %c0_i32_0 = arith.constant 0 : i32
    %c0_i32_1 = arith.constant 0 : i32
    return %arg0, %c0_i32, %c0_i32_0 : i32, i32, i32
  }
  func.func @transform_1(%arg0: i32) -> (i32, i32, i32) {
    %c0_i32 = arith.constant 0 : i32
    %c0_i32_0 = arith.constant 0 : i32
    %c0_i32_1 = arith.constant 0 : i32
    return %arg0, %c0_i32, %c0_i32_0 : i32, i32, i32
  }
  func.func @transform_2(%arg0: i32) -> (i32, i32, i32) {
    %c0_i32 = arith.constant 0 : i32
    %c0_i32_0 = arith.constant 0 : i32
    %c0_i32_1 = arith.constant 0 : i32
    return %arg0, %c0_i32, %c0_i32_0 : i32, i32, i32
  }
}

module attributes {stable_mosaic.version = 11 : i64} {
  func.func @_cross_attn_kernel(%arg0: i32, %arg1: memref<1x8x32xbf16, #tpu.memory_space<vmem>>, %arg2: memref<1x8x64xbf16, #tpu.memory_space<vmem>>, %arg3: memref<1x1x8xf32, #tpu.memory_space<vmem>>, %arg4: memref<1x8x32xbf16, #tpu.memory_space<vmem>>) attributes {dimension_semantics = [#tpu.dimension_semantics<parallel>], iteration_bounds = array<i64: 2>, scalar_prefetch = 0 : i64, scratch_operands = 0 : i64, tpu.core_type = #tpu.core_type<tc>, window_params = [{transform_indices = @transform_0, window_bounds = array<i64: 1, 8, 32>}, {transform_indices = @transform_1, window_bounds = array<i64: 1, 8, 64>}, {transform_indices = @transform_2, window_bounds = array<i64: 1, 1, 8>}, {transform_indices = @transform_3, window_bounds = array<i64: 1, 8, 32>}]} {
    %c0 = arith.constant 0 : index
    %c0_0 = arith.constant 0 : index
    %c0_1 = arith.constant 0 : index
    %0 = vector.load %arg1[%c0, %c0_0, %c0_1] : memref<1x8x32xbf16, #tpu.memory_space<vmem>>, vector<1x8x32xbf16>
    %1 = vector.shape_cast %0 : vector<1x8x32xbf16> to vector<8x32xbf16>
    %c0_2 = arith.constant 0 : index
    %c0_3 = arith.constant 0 : index
    %c0_4 = arith.constant 0 : index
    %2 = vector.load %arg2[%c0_2, %c0_3, %c0_4] : memref<1x8x64xbf16, #tpu.memory_space<vmem>>, vector<1x8x64xbf16>
    %3 = vector.shape_cast %2 : vector<1x8x64xbf16> to vector<8x64xbf16>
    %4 = vector.extract_strided_slice %3 {offsets = [0, 0], sizes = [8, 32], strides = [1, 1]} : vector<8x64xbf16> to vector<8x32xbf16>
    %5 = vector.extract_strided_slice %3 {offsets = [0, 32], sizes = [8, 32], strides = [1, 1]} : vector<8x64xbf16> to vector<8x32xbf16>
    %c0_5 = arith.constant 0 : index
    %c0_6 = arith.constant 0 : index
    %c0_7 = arith.constant 0 : index
    %6 = vector.load %arg3[%c0_5, %c0_6, %c0_7] : memref<1x1x8xf32, #tpu.memory_space<vmem>>, vector<1x1x8xf32>
    %7 = vector.shape_cast %6 : vector<1x1x8xf32> to vector<1x8xf32>
    %8 = vector.extract_strided_slice %1 {offsets = [0, 0], sizes = [8, 8], strides = [1, 1]} : vector<8x32xbf16> to vector<8x8xbf16>
    %9 = vector.extract_strided_slice %4 {offsets = [0, 0], sizes = [8, 8], strides = [1, 1]} : vector<8x32xbf16> to vector<8x8xbf16>
    %10 = vector.extract_strided_slice %5 {offsets = [0, 0], sizes = [8, 8], strides = [1, 1]} : vector<8x32xbf16> to vector<8x8xbf16>
    %cst = arith.constant dense<0.000000e+00> : vector<8x8xf32>
    %11 = tpu.matmul %8, %9, %cst {dimension_numbers = #tpu.dot_dimension_numbers<[1], [1], [0], [0], [0, 0, 1, 0], [], []>} : vector<8x8xbf16>, vector<8x8xbf16>, vector<8x8xf32> -> vector<8x8xf32>
    %cst_8 = arith.constant 0.353553385 : f32
    %12 = vector.broadcast %cst_8 : f32 to vector<8x8xf32>
    %13 = arith.mulf %11, %12 : vector<8x8xf32>
    %14 = vector.broadcast %7 : vector<1x8xf32> to vector<8x8xf32>
    %15 = arith.addf %13, %14 : vector<8x8xf32>
    %cst_9 = arith.constant dense<0xFF800000> : vector<8xf32>
    %16 = vector.multi_reduction <maximumf>, %15, %cst_9 [1] : vector<8x8xf32> to vector<8xf32>
    %17 = vector.shape_cast %16 : vector<8xf32> to vector<8x1xf32>
    %18 = vector.broadcast %17 : vector<8x1xf32> to vector<8x8xf32>
    %19 = arith.subf %15, %18 : vector<8x8xf32>
    %20 = math.exp %19 : vector<8x8xf32>
    %cst_10 = arith.constant dense<0.000000e+00> : vector<8xf32>
    %21 = vector.multi_reduction <add>, %20, %cst_10 [1] : vector<8x8xf32> to vector<8xf32>
    %22 = vector.shape_cast %21 : vector<8xf32> to vector<8x1xf32>
    %23 = tpu.reciprocal %22 {approx = true} : vector<8x1xf32> -> vector<8x1xf32>
    %24 = vector.broadcast %23 : vector<8x1xf32> to vector<8x8xf32>
    %25 = arith.mulf %20, %24 : vector<8x8xf32>
    %26 = arith.truncf %25 : vector<8x8xf32> to vector<8x8xbf16>
    %cst_11 = arith.constant dense<0.000000e+00> : vector<8x8xf32>
    %27 = tpu.matmul %26, %10, %cst_11 {dimension_numbers = #tpu.dot_dimension_numbers<[1], [0], [0], [1], [0, 0, 1, 1], [], []>} : vector<8x8xbf16>, vector<8x8xbf16>, vector<8x8xf32> -> vector<8x8xf32>
    %28 = vector.extract_strided_slice %1 {offsets = [0, 8], sizes = [8, 8], strides = [1, 1]} : vector<8x32xbf16> to vector<8x8xbf16>
    %29 = vector.extract_strided_slice %4 {offsets = [0, 8], sizes = [8, 8], strides = [1, 1]} : vector<8x32xbf16> to vector<8x8xbf16>
    %30 = vector.extract_strided_slice %5 {offsets = [0, 8], sizes = [8, 8], strides = [1, 1]} : vector<8x32xbf16> to vector<8x8xbf16>
    %cst_12 = arith.constant dense<0.000000e+00> : vector<8x8xf32>
    %31 = tpu.matmul %28, %29, %cst_12 {dimension_numbers = #tpu.dot_dimension_numbers<[1], [1], [0], [0], [0, 0, 1, 0], [], []>} : vector<8x8xbf16>, vector<8x8xbf16>, vector<8x8xf32> -> vector<8x8xf32>
    %cst_13 = arith.constant 0.353553385 : f32
    %32 = vector.broadcast %cst_13 : f32 to vector<8x8xf32>
    %33 = arith.mulf %31, %32 : vector<8x8xf32>
    %34 = vector.broadcast %7 : vector<1x8xf32> to vector<8x8xf32>
    %35 = arith.addf %33, %34 : vector<8x8xf32>
    %cst_14 = arith.constant dense<0xFF800000> : vector<8xf32>
    %36 = vector.multi_reduction <maximumf>, %35, %cst_14 [1] : vector<8x8xf32> to vector<8xf32>
    %37 = vector.shape_cast %36 : vector<8xf32> to vector<8x1xf32>
    %38 = vector.broadcast %37 : vector<8x1xf32> to vector<8x8xf32>
    %39 = arith.subf %35, %38 : vector<8x8xf32>
    %40 = math.exp %39 : vector<8x8xf32>
    %cst_15 = arith.constant dense<0.000000e+00> : vector<8xf32>
    %41 = vector.multi_reduction <add>, %40, %cst_15 [1] : vector<8x8xf32> to vector<8xf32>
    %42 = vector.shape_cast %41 : vector<8xf32> to vector<8x1xf32>
    %43 = tpu.reciprocal %42 {approx = true} : vector<8x1xf32> -> vector<8x1xf32>
    %44 = vector.broadcast %43 : vector<8x1xf32> to vector<8x8xf32>
    %45 = arith.mulf %40, %44 : vector<8x8xf32>
    %46 = arith.truncf %45 : vector<8x8xf32> to vector<8x8xbf16>
    %cst_16 = arith.constant dense<0.000000e+00> : vector<8x8xf32>
    %47 = tpu.matmul %46, %30, %cst_16 {dimension_numbers = #tpu.dot_dimension_numbers<[1], [0], [0], [1], [0, 0, 1, 1], [], []>} : vector<8x8xbf16>, vector<8x8xbf16>, vector<8x8xf32> -> vector<8x8xf32>
    %48 = vector.extract_strided_slice %1 {offsets = [0, 16], sizes = [8, 8], strides = [1, 1]} : vector<8x32xbf16> to vector<8x8xbf16>
    %49 = vector.extract_strided_slice %4 {offsets = [0, 16], sizes = [8, 8], strides = [1, 1]} : vector<8x32xbf16> to vector<8x8xbf16>
    %50 = vector.extract_strided_slice %5 {offsets = [0, 16], sizes = [8, 8], strides = [1, 1]} : vector<8x32xbf16> to vector<8x8xbf16>
    %cst_17 = arith.constant dense<0.000000e+00> : vector<8x8xf32>
    %51 = tpu.matmul %48, %49, %cst_17 {dimension_numbers = #tpu.dot_dimension_numbers<[1], [1], [0], [0], [0, 0, 1, 0], [], []>} : vector<8x8xbf16>, vector<8x8xbf16>, vector<8x8xf32> -> vector<8x8xf32>
    %cst_18 = arith.constant 0.353553385 : f32
    %52 = vector.broadcast %cst_18 : f32 to vector<8x8xf32>
    %53 = arith.mulf %51, %52 : vector<8x8xf32>
    %54 = vector.broadcast %7 : vector<1x8xf32> to vector<8x8xf32>
    %55 = arith.addf %53, %54 : vector<8x8xf32>
    %cst_19 = arith.constant dense<0xFF800000> : vector<8xf32>
    %56 = vector.multi_reduction <maximumf>, %55, %cst_19 [1] : vector<8x8xf32> to vector<8xf32>
    %57 = vector.shape_cast %56 : vector<8xf32> to vector<8x1xf32>
    %58 = vector.broadcast %57 : vector<8x1xf32> to vector<8x8xf32>
    %59 = arith.subf %55, %58 : vector<8x8xf32>
    %60 = math.exp %59 : vector<8x8xf32>
    %cst_20 = arith.constant dense<0.000000e+00> : vector<8xf32>
    %61 = vector.multi_reduction <add>, %60, %cst_20 [1] : vector<8x8xf32> to vector<8xf32>
    %62 = vector.shape_cast %61 : vector<8xf32> to vector<8x1xf32>
    %63 = tpu.reciprocal %62 {approx = true} : vector<8x1xf32> -> vector<8x1xf32>
    %64 = vector.broadcast %63 : vector<8x1xf32> to vector<8x8xf32>
    %65 = arith.mulf %60, %64 : vector<8x8xf32>
    %66 = arith.truncf %65 : vector<8x8xf32> to vector<8x8xbf16>
    %cst_21 = arith.constant dense<0.000000e+00> : vector<8x8xf32>
    %67 = tpu.matmul %66, %50, %cst_21 {dimension_numbers = #tpu.dot_dimension_numbers<[1], [0], [0], [1], [0, 0, 1, 1], [], []>} : vector<8x8xbf16>, vector<8x8xbf16>, vector<8x8xf32> -> vector<8x8xf32>
    %68 = vector.extract_strided_slice %1 {offsets = [0, 24], sizes = [8, 8], strides = [1, 1]} : vector<8x32xbf16> to vector<8x8xbf16>
    %69 = vector.extract_strided_slice %4 {offsets = [0, 24], sizes = [8, 8], strides = [1, 1]} : vector<8x32xbf16> to vector<8x8xbf16>
    %70 = vector.extract_strided_slice %5 {offsets = [0, 24], sizes = [8, 8], strides = [1, 1]} : vector<8x32xbf16> to vector<8x8xbf16>
    %cst_22 = arith.constant dense<0.000000e+00> : vector<8x8xf32>
    %71 = tpu.matmul %68, %69, %cst_22 {dimension_numbers = #tpu.dot_dimension_numbers<[1], [1], [0], [0], [0, 0, 1, 0], [], []>} : vector<8x8xbf16>, vector<8x8xbf16>, vector<8x8xf32> -> vector<8x8xf32>
    %cst_23 = arith.constant 0.353553385 : f32
    %72 = vector.broadcast %cst_23 : f32 to vector<8x8xf32>
    %73 = arith.mulf %71, %72 : vector<8x8xf32>
    %74 = vector.broadcast %7 : vector<1x8xf32> to vector<8x8xf32>
    %75 = arith.addf %73, %74 : vector<8x8xf32>
    %cst_24 = arith.constant dense<0xFF800000> : vector<8xf32>
    %76 = vector.multi_reduction <maximumf>, %75, %cst_24 [1] : vector<8x8xf32> to vector<8xf32>
    %77 = vector.shape_cast %76 : vector<8xf32> to vector<8x1xf32>
    %78 = vector.broadcast %77 : vector<8x1xf32> to vector<8x8xf32>
    %79 = arith.subf %75, %78 : vector<8x8xf32>
    %80 = math.exp %79 : vector<8x8xf32>
    %cst_25 = arith.constant dense<0.000000e+00> : vector<8xf32>
    %81 = vector.multi_reduction <add>, %80, %cst_25 [1] : vector<8x8xf32> to vector<8xf32>
    %82 = vector.shape_cast %81 : vector<8xf32> to vector<8x1xf32>
    %83 = tpu.reciprocal %82 {approx = true} : vector<8x1xf32> -> vector<8x1xf32>
    %84 = vector.broadcast %83 : vector<8x1xf32> to vector<8x8xf32>
    %85 = arith.mulf %80, %84 : vector<8x8xf32>
    %86 = arith.truncf %85 : vector<8x8xf32> to vector<8x8xbf16>
    %cst_26 = arith.constant dense<0.000000e+00> : vector<8x8xf32>
    %87 = tpu.matmul %86, %70, %cst_26 {dimension_numbers = #tpu.dot_dimension_numbers<[1], [0], [0], [1], [0, 0, 1, 1], [], []>} : vector<8x8xbf16>, vector<8x8xbf16>, vector<8x8xf32> -> vector<8x8xf32>
    %88 = tpu.concatenate %27, %47, %67, %87 in 1 : vector<8x8xf32>, vector<8x8xf32>, vector<8x8xf32>, vector<8x8xf32> -> vector<8x32xf32>
    %89 = arith.truncf %88 : vector<8x32xf32> to vector<8x32xbf16>
    %c0_27 = arith.constant 0 : index
    %c0_28 = arith.constant 0 : index
    %c0_29 = arith.constant 0 : index
    %90 = vector.load %arg4[%c0_27, %c0_28, %c0_29] : memref<1x8x32xbf16, #tpu.memory_space<vmem>>, vector<1x8x32xbf16>
    %91 = vector.shape_cast %90 : vector<1x8x32xbf16> to vector<8x32xbf16>
    %92 = vector.shape_cast %89 : vector<8x32xbf16> to vector<1x8x32xbf16>
    tpu.vector_store %arg4[%c0_27, %c0_28, %c0_29], %92 {strides = array<i32>} : memref<1x8x32xbf16, #tpu.memory_space<vmem>>, vector<1x8x32xbf16>,
    return
  }
  func.func @transform_0(%arg0: i32) -> (i32, i32, i32) {
    %c0_i32 = arith.constant 0 : i32
    %c0_i32_0 = arith.constant 0 : i32
    %c0_i32_1 = arith.constant 0 : i32
    return %arg0, %c0_i32, %c0_i32_0 : i32, i32, i32
  }
  func.func @transform_1(%arg0: i32) -> (i32, i32, i32) {
    %c0_i32 = arith.constant 0 : i32
    %c0_i32_0 = arith.constant 0 : i32
    %c0_i32_1 = arith.constant 0 : i32
    return %arg0, %c0_i32, %c0_i32_0 : i32, i32, i32
  }
  func.func @transform_2(%arg0: i32) -> (i32, i32, i32) {
    %c0_i32 = arith.constant 0 : i32
    %c0_i32_0 = arith.constant 0 : i32
    %c0_i32_1 = arith.constant 0 : i32
    return %arg0, %c0_i32, %c0_i32_0 : i32, i32, i32
  }
  func.func @transform_3(%arg0: i32) -> (i32, i32, i32) {
    %c0_i32 = arith.constant 0 : i32
    %c0_i32_0 = arith.constant 0 : i32
    %c0_i32_1 = arith.constant 0 : i32
    return %arg0, %c0_i32, %c0_i32_0 : i32, i32, i32
  }
}

module attributes {stable_mosaic.version = 11 : i64} {
  func.func @_matmul_kernel(%arg0: i32, %arg1: i32, %arg2: i32, %arg3: memref<16x128xbf16, #tpu.memory_space<vmem>>, %arg4: memref<128x128xbf16, #tpu.memory_space<vmem>>, %arg5: memref<1x128xf32, #tpu.memory_space<vmem>>, %arg6: memref<16x128xf32, #tpu.memory_space<vmem>>, %arg7: memref<16x128xf32, #tpu.memory_space<vmem>>) attributes {dimension_semantics = [#tpu.dimension_semantics<parallel>, #tpu.dimension_semantics<parallel>, #tpu.dimension_semantics<arbitrary>], iteration_bounds = array<i64: 1, 1, 1>, scalar_prefetch = 0 : i64, scratch_operands = 1 : i64, tpu.core_type = #tpu.core_type<tc>, window_params = [{transform_indices = @transform_0, window_bounds = array<i64: 16, 128>}, {transform_indices = @transform_1, window_bounds = array<i64: 128, 128>}, {transform_indices = @transform_2, window_bounds = array<i64: 1, 128>}, {transform_indices = @transform_3, window_bounds = array<i64: 16, 128>}]} {
    %c0_i32 = arith.constant 0 : i32
    %0 = arith.cmpi eq, %arg2, %c0_i32 : i32
    %1 = arith.extui %0 : i1 to i32
    %c0_i32_0 = arith.constant 0 : i32
    %2 = arith.cmpi ne, %1, %c0_i32_0 : i32
    scf.if %2 {
      %cst_10 = arith.constant 0.000000e+00 : f32
      %12 = vector.broadcast %cst_10 : f32 to vector<16x128xf32>
      %c0_11 = arith.constant 0 : index
      %c0_12 = arith.constant 0 : index
      %13 = vector.load %arg7[%c0_11, %c0_12] : memref<16x128xf32, #tpu.memory_space<vmem>>, vector<16x128xf32>
      tpu.vector_store %arg7[%c0_11, %c0_12], %12 {strides = array<i32>} : memref<16x128xf32, #tpu.memory_space<vmem>>, vector<16x128xf32>,
    } else {
    }
    %c0 = arith.constant 0 : index
    %c0_1 = arith.constant 0 : index
    %3 = vector.load %arg7[%c0, %c0_1] : memref<16x128xf32, #tpu.memory_space<vmem>>, vector<16x128xf32>
    %c0_2 = arith.constant 0 : index
    %c0_3 = arith.constant 0 : index
    %4 = vector.load %arg3[%c0_2, %c0_3] : memref<16x128xbf16, #tpu.memory_space<vmem>>, vector<16x128xbf16>
    %c0_4 = arith.constant 0 : index
    %c0_5 = arith.constant 0 : index
    %5 = vector.load %arg4[%c0_4, %c0_5] : memref<128x128xbf16, #tpu.memory_space<vmem>>, vector<128x128xbf16>
    %cst = arith.constant dense<0.000000e+00> : vector<16x128xf32>
    %6 = tpu.matmul %4, %5, %cst {dimension_numbers = #tpu.dot_dimension_numbers<[1], [0], [0], [1], [0, 0, 1, 1], [], []>} : vector<16x128xbf16>, vector<128x128xbf16>, vector<16x128xf32> -> vector<16x128xf32>
    %7 = arith.addf %3, %6 : vector<16x128xf32>
    %c0_6 = arith.constant 0 : index
    %c0_7 = arith.constant 0 : index
    %8 = vector.load %arg7[%c0_6, %c0_7] : memref<16x128xf32, #tpu.memory_space<vmem>>, vector<16x128xf32>
    tpu.vector_store %arg7[%c0_6, %c0_7], %7 {strides = array<i32>} : memref<16x128xf32, #tpu.memory_space<vmem>>, vector<16x128xf32>,
    %c0_i32_8 = arith.constant 0 : i32
    %9 = arith.cmpi eq, %arg2, %c0_i32_8 : i32
    %10 = arith.extui %9 : i1 to i32
    %c0_i32_9 = arith.constant 0 : i32
    %11 = arith.cmpi ne, %10, %c0_i32_9 : i32
    scf.if %11 {
      %c0_10 = arith.constant 0 : index
      %c0_11 = arith.constant 0 : index
      %12 = vector.load %arg7[%c0_10, %c0_11] : memref<16x128xf32, #tpu.memory_space<vmem>>, vector<16x128xf32>
      %c0_12 = arith.constant 0 : index
      %c0_13 = arith.constant 0 : index
      %13 = vector.load %arg5[%c0_12, %c0_13] : memref<1x128xf32, #tpu.memory_space<vmem>>, vector<1x128xf32>
      %14 = vector.broadcast %13 : vector<1x128xf32> to vector<16x128xf32>
      %15 = arith.addf %12, %14 : vector<16x128xf32>
      %c0_14 = arith.constant 0 : index
      %c0_15 = arith.constant 0 : index
      %16 = vector.load %arg6[%c0_14, %c0_15] : memref<16x128xf32, #tpu.memory_space<vmem>>, vector<16x128xf32>
      tpu.vector_store %arg6[%c0_14, %c0_15], %15 {strides = array<i32>} : memref<16x128xf32, #tpu.memory_space<vmem>>, vector<16x128xf32>,
    } else {
    }
    return
  }
  func.func @transform_0(%arg0: i32, %arg1: i32, %arg2: i32) -> (i32, i32) {
    %c0_i32 = arith.constant 0 : i32
    return %arg0, %arg2 : i32, i32
  }
  func.func @transform_1(%arg0: i32, %arg1: i32, %arg2: i32) -> (i32, i32) {
    %c0_i32 = arith.constant 0 : i32
    return %arg2, %arg1 : i32, i32
  }
  func.func @transform_2(%arg0: i32, %arg1: i32, %arg2: i32) -> (i32, i32) {
    %c0_i32 = arith.constant 0 : i32
    %c0_i32_0 = arith.constant 0 : i32
    return %c0_i32, %arg1 : i32, i32
  }
  func.func @transform_3(%arg0: i32, %arg1: i32, %arg2: i32) -> (i32, i32) {
    %c0_i32 = arith.constant 0 : i32
    return %arg0, %arg1 : i32, i32
  }
}

</mosaic_0001>

<llo_original>
// kernel: hunayn_forward.27
$region0: #{hunayn_forward.27}
  #allocation0 [shape = 'u32[]', space=smem, size = 0x4, offset = 0x4, fixed_abs, tag = 'smem constant byte address 0x4 - core index']
  #allocation1 [shape = 'u32[144,128]{1,0:T(1,128)}', space=vmem, size = 0x12000, scoped, tag = 'internal scratch']
  %s0 = inlined_call_operand.vmem [shape: bf16[16,32], index: 0, kind: input, shape index: {}]
  %s1 = inlined_call_operand.vmem [shape: bf16[16,32], index: 1, kind: input, shape index: {}]
  %s2 = inlined_call_operand.vmem [shape: bf16[32,32], index: 2, kind: input, shape index: {}]
  %s3 = inlined_call_operand.vmem [shape: f32[1,32], index: 3, kind: input, shape index: {}, may-alias: {3,5}]
  %s4 = inlined_call_operand.vmem [shape: f32[1,32], index: 4, kind: input, shape index: {}]
  %s5 = inlined_call_operand.vmem [shape: f32[1,32], index: 5, kind: input, shape index: {}, may-alias: {3,5}]
  %s6 = inlined_call_operand.vmem [shape: bf16[16,32], index: 6, kind: output, shape index: {}]
  %s7 = sld [smem:[#allocation0]]
  $region34: #{hunayn_forward.27} parent=0
    _
  %s9 = ssub.s32 1, %s7
  %s10 = scalar_select 0, %s9, %s7
  // Predicated region
  $region2: #{hunayn_forward.27} parent=0 // pred_check
    _
  $region3: #{hunayn_forward.27} parent=0 // pred_check_branch
    %12 = sbr.rel (0) target = $region5
  $region4: #{hunayn_forward.27} parent=0 // pred_region
    _
  $region5: #{hunayn_forward.27} parent=0 // pred_fallthru
    _
  // Predicated region
  $region6: #{hunayn_forward.27} parent=0 // pred_check
    _
  $region7: #{hunayn_forward.27} parent=0 // pred_check_branch
    %14 = sbr.rel (0) target = $region9
  $region8: #{hunayn_forward.27} parent=0 // pred_region
    _
  $region9: #{hunayn_forward.27} parent=0 // pred_fallthru
    _
  // Predicated region
  $region10: #{hunayn_forward.27} parent=0 // pred_check
    _
  $region11: #{hunayn_forward.27} parent=0 // pred_check_branch
    %16 = sbr.rel (0) target = $region13
  $region12: #{hunayn_forward.27} parent=0 // pred_region
    _
  $region13: #{hunayn_forward.27} parent=0 // pred_fallthru
    _
  // Predicated region
  $region14: #{hunayn_forward.27} parent=0 // pred_check
    _
  $region15: #{hunayn_forward.27} parent=0 // pred_check_branch
    %18 = sbr.rel (0) target = $region17
  $region16: #{hunayn_forward.27} parent=0 // pred_region
    _
  $region17: #{hunayn_forward.27} parent=0 // pred_fallthru
    _
  // Predicated region
  $region18: #{hunayn_forward.27} parent=0 // pred_check
    _
  $region19: #{hunayn_forward.27} parent=0 // pred_check_branch
    %20 = sbr.rel (0) target = $region21
  $region20: #{hunayn_forward.27} parent=0 // pred_region
    _
  $region21: #{hunayn_forward.27} parent=0 // pred_fallthru
    _
  // Predicated region
  $region22: #{hunayn_forward.27} parent=0 // pred_check
    _
  $region23: #{hunayn_forward.27} parent=0 // pred_check_branch
    %22 = sbr.rel (0) target = $region25
  $region24: #{hunayn_forward.27} parent=0 // pred_region
    _
  $region25: #{hunayn_forward.27} parent=0 // pred_fallthru
    _
  %v24 = vld [vmem:[%s0] sm:$0xf]
  %v25 = vld [vmem:[%s0 + $0x4] sm:$0xf]
  %v26 = vld [vmem:[%s2] sm:$0xf]
  %v27 = vld [vmem:[%s2 + $0x4] sm:$0xf]
  %v28 = vld [vmem:[%s2 + $0x8] sm:$0xf]
  %v29 = vld [vmem:[%s2 + $0xc] sm:$0xf]
  %v30 = vld [vmem:[%s3] sm:$0x1]
  %v32 = vlaneseq
  %v33 = vshrl.u32 %v32, 7
  %v34 = vsub.s32 0, %v33
  %v35 = vrot.slane %v30, %v34
  %v39 = vunpack.c.l.b16 %v24
  %v40 = vunpack.c.l.b16 %v25
  %v41 = vpack.c.b16 %v40, %v39
  %v46 = vunpack.c.l.b16 %v26
  %v47 = vunpack.c.l.b16 %v27
  %v48 = vunpack.c.l.b16 %v28
  %v49 = vunpack.c.l.b16 %v29
  %v50 = vpack.c.b16 %v47, %v46
  %v51 = vpack.c.b16 %v49, %v48
  %vm54 = vcmask 261120
  %v56 = vsel %vm54, %v41, 0
  %58 = vmatprep.subr.bf16.mxu0 0
  %59 = vmatpush1.bf16.msra.mxu0 %v50
  %60 = vmatprep.subr.bf16.mxu0 0
  %61 = vmatpush1.bf16.msra.mxu0 %v51
  %62 = vmatprep.subr.bf16.mxu0 0
  %63 = vmatpush1.bf16.msra.mxu0 0
  %64 = vmatprep.subr.bf16.mxu0 0
  %65 = vmatpush1.bf16.msra.mxu0 0
  %66 = vmatprep.subr.bf16.mxu0 0
  %67 = vmatpush1.bf16.msra.mxu0 0
  %68 = vmatprep.subr.bf16.mxu0 0
  %69 = vmatpush1.bf16.msra.mxu0 0
  %70 = vmatprep.subr.bf16.mxu0 0
  %71 = vmatpush1.bf16.msra.mxu0 0
  %72 = vmatprep.subr.bf16.mxu0 0
  %73 = vmatpush1.bf16.msra.mxu0 0
  %74 = vmatprep.subr.bf16.mxu0 0
  %75 = vmatpush1.bf16.msra.mxu0 0
  %76 = vmatprep.subr.bf16.mxu0 0
  %77 = vmatpush1.bf16.msra.mxu0 0
  %78 = vmatprep.subr.bf16.mxu0 0
  %79 = vmatpush1.bf16.msra.mxu0 0
  %80 = vmatprep.subr.bf16.mxu0 0
  %81 = vmatpush1.bf16.msra.mxu0 0
  %82 = vmatprep.subr.bf16.mxu0 0
  %83 = vmatpush1.bf16.msra.mxu0 0
  %84 = vmatprep.subr.bf16.mxu0 0
  %85 = vmatpush1.bf16.msra.mxu0 0
  %86 = vmatprep.subr.bf16.mxu0 0
  %87 = vmatpush1.bf16.msra.mxu0 0
  %88 = vmatprep.subr.bf16.mxu0 0
  %89 = vmatpush1.bf16.msra.mxu0 0
  %90 = vmatprep.mubr.bf16.mxu0 0
  %91 = vmatmul.mubr.bf16.gmra.mrb[0].mxu0 %v56
  %v92 = vpop.f32.mrb[0].mxu0
  %v93 = vadd.f32 %v35, %v92
  %v94 = vpop.f32.mrb[0].mxu0
  %v95 = vpop.f32.mrb[0].mxu0
  %v96 = vadd.f32 %v35, %v95
  %v97 = vpop.f32.mrb[0].mxu0
  %98 = vdwg.mxu0
  %v99 = vld [vmem:[%s1] sm:$0xf]
  %v100 = vld [vmem:[%s1 + $0x4] sm:$0xf]
  %v101 = vunpack.c.l.bf16 %v99
  %v102 = vunpack.c.l.bf16 %v100
  %v103 = vadd.f32 %v93, %v101
  %v104 = vadd.f32 %v96, %v102
  %v105 = vld [vmem:[%s4] sm:$0x1]
  %v106 = vld [vmem:[%s5] sm:$0x1]
  %v107 = vsel %vm54, %v103, 0.0
  %108 = vadd.xlane.f32.xlu0 %v107
  %v109 = vpop.xlane.xlu0 %108
  %v110 = vsel %vm54, %v104, 0.0
  %111 = vadd.xlane.f32.xlu0 %v110
  %v112 = vpop.xlane.xlu0 %111
  %v113 = vrcp.pop 32.0
  %v114 = vmul.f32 %v109, %v113
  %v115 = vmul.f32 %v112, %v113
  %v116 = vsub.f32 %v103, %v114
  %v117 = vsub.f32 %v104, %v115
  %v118 = vmul.f32 %v116, %v116
  %v119 = vmul.f32 %v117, %v117
  %v120 = vsel %vm54, %v118, 0.0
  %121 = vadd.xlane.f32.xlu0 %v120
  %v122 = vpop.xlane.xlu0 %121
  %v123 = vsel %vm54, %v119, 0.0
  %124 = vadd.xlane.f32.xlu0 %v123
  %v125 = vpop.xlane.xlu0 %124
  %v126 = vmul.f32 %v122, %v113
  %v127 = vmul.f32 %v125, %v113
  %v128 = vadd.f32 %v126, 1e-05
  %v129 = vadd.f32 %v127, 1e-05
  %v130 = vrsqrt.pop %v128
  %v131 = vrsqrt.pop %v129
  %v132 = vmul.f32 %v116, %v130
  %v133 = vmul.f32 %v117, %v131
  %v135 = vlaneseq
  %v136 = vshrl.u32 %v135, 7
  %v137 = vsub.s32 0, %v136
  %v138 = vrot.slane %v105, %v137
  %v140 = vmul.f32 %v132, %v138
  %v141 = vmul.f32 %v133, %v138
  %v143 = vlaneseq
  %v144 = vshrl.u32 %v143, 7
  %v145 = vsub.s32 0, %v144
  %v146 = vrot.slane %v106, %v145
  %v148 = vadd.f32 %v140, %v146
  %v149 = vadd.f32 %v141, %v146
  %v150 = vpack.c.bf16 %v149, %v148
  %v152 = vunpack.c.l.b16 %v150
  %v153 = vunpack.c.h.b16 %v150
  %v154 = vpack.c.b16 %v152, %v152
  %v155 = vpack.c.b16 %v153, %v153
  %vm158 = vcmask 257024
  %159 = vst.msk [vmem:[%s6] sm:$0xf] %vm158, %v154
  %160 = vst.msk [vmem:[%s6 + $0x4] sm:$0xf] %vm158, %v155
  // Predicated region
  $region26: #{hunayn_forward.27} parent=0 // pred_check
    _
  $region27: #{hunayn_forward.27} parent=0 // pred_check_branch
    %162 = sbr.rel (0) target = $region29
  $region28: #{hunayn_forward.27} parent=0 // pred_region
    _
  $region29: #{hunayn_forward.27} parent=0 // pred_fallthru
    _
  // Predicated region
  $region30: #{hunayn_forward.27} parent=0 // pred_check
    _
  $region31: #{hunayn_forward.27} parent=0 // pred_check_branch
    %164 = sbr.rel (0) target = $region33
  $region32: #{hunayn_forward.27} parent=0 // pred_region
    _
  $region33: #{hunayn_forward.27} parent=0 // pred_fallthru
    _

// kernel: hunayn_forward.25
$region0: #{hunayn_forward.25}
  #allocation0 [shape = 'u32[]', space=smem, size = 0x4, offset = 0x4, fixed_abs, tag = 'smem constant byte address 0x4 - core index']
  #allocation1 [shape = 'u32[144,128]{1,0:T(1,128)}', space=vmem, size = 0x12000, scoped, tag = 'internal scratch']
  #allocation2 [shape = 'f32[16,128]{1,0:T(8,128)}', space=vmem, size = 0x2000, scoped, tag = 'scratch operand']
  %s0 = inlined_call_operand.vmem [shape: bf16[16,128], index: 0, kind: input, shape index: {}]
  %s1 = inlined_call_operand.vmem [shape: bf16[128,128], index: 1, kind: input, shape index: {}]
  %s2 = inlined_call_operand.vmem [shape: f32[1,128], index: 2, kind: input, shape index: {}]
  %s3 = inlined_call_operand.vmem [shape: bf16[16,128], index: 3, kind: output, shape index: {}]
  %s4 = sld [smem:[#allocation0]]
  $region30: #{hunayn_forward.25} parent=0
    _
  %s6 = ssub.s32 1, %s4
  %s7 = scalar_select 0, %s6, %s4
  // Predicated region
  $region2: #{hunayn_forward.25} parent=0 // pred_check
    _
  $region3: #{hunayn_forward.25} parent=0 // pred_check_branch
    %9 = sbr.rel (0) target = $region5
  $region4: #{hunayn_forward.25} parent=0 // pred_region
    _
  $region5: #{hunayn_forward.25} parent=0 // pred_fallthru
    _
  // Predicated region
  $region6: #{hunayn_forward.25} parent=0 // pred_check
    _
  $region7: #{hunayn_forward.25} parent=0 // pred_check_branch
    %11 = sbr.rel (0) target = $region9
  $region8: #{hunayn_forward.25} parent=0 // pred_region
    _
  $region9: #{hunayn_forward.25} parent=0 // pred_fallthru
    _
  // Predicated region
  $region10: #{hunayn_forward.25} parent=0 // pred_check
    _
  $region11: #{hunayn_forward.25} parent=0 // pred_check_branch
    %13 = sbr.rel (0) target = $region13
  $region12: #{hunayn_forward.25} parent=0 // pred_region
    _
  $region13: #{hunayn_forward.25} parent=0 // pred_fallthru
    _
  %p15 = scmp.eq.s32.totalorder 0, 0
  // Predicated region
  $region14: #{hunayn_forward.25} parent=0 // pred_check
    %p16 = pneg %p15
  $region15: #{hunayn_forward.25} parent=0 // pred_check_branch
    %18 = sbr.rel (%p16) target = $region17
  $region16: #{hunayn_forward.25} parent=0 // pred_region
    %19 = vst [vmem:[#allocation2] sm:$0xff] 0.0
    %20 = vst [vmem:[#allocation2 + $0x8] sm:$0xff] 0.0
  $region17: #{hunayn_forward.25} parent=0 // pred_fallthru
    _
  %v21 = vld [vmem:[#allocation2] sm:$0xff]
  %v22 = vld [vmem:[#allocation2 + $0x8] sm:$0xff]
  %v23 = vld [vmem:[%s0] sm:$0xf]
  %v24 = vld [vmem:[%s0 + $0x4] sm:$0xf]
  %v25 = vld [vmem:[%s1] sm:$0xf]
  %v26 = vld [vmem:[%s1 + $0x4] sm:$0xf]
  %v27 = vld [vmem:[%s1 + $0x8] sm:$0xf]
  %v28 = vld [vmem:[%s1 + $0xc] sm:$0xf]
  %v29 = vld [vmem:[%s1 + $0x10] sm:$0xf]
  %v30 = vld [vmem:[%s1 + $0x14] sm:$0xf]
  %v31 = vld [vmem:[%s1 + $0x18] sm:$0xf]
  %v32 = vld [vmem:[%s1 + $0x1c] sm:$0xf]
  %v33 = vld [vmem:[%s1 + $0x20] sm:$0xf]
  %v34 = vld [vmem:[%s1 + $0x24] sm:$0xf]
  %v35 = vld [vmem:[%s1 + $0x28] sm:$0xf]
  %v36 = vld [vmem:[%s1 + $0x2c] sm:$0xf]
  %v37 = vld [vmem:[%s1 + $0x30] sm:$0xf]
  %v38 = vld [vmem:[%s1 + $0x34] sm:$0xf]
  %v39 = vld [vmem:[%s1 + $0x38] sm:$0xf]
  %v40 = vld [vmem:[%s1 + $0x3c] sm:$0xf]
  %v43 = vunpack.c.l.b16 %v23
  %v44 = vunpack.c.l.b16 %v24
  %v45 = vpack.c.b16 %v44, %v43
  %v63 = vunpack.c.l.b16 %v25
  %v64 = vunpack.c.l.b16 %v26
  %v65 = vunpack.c.l.b16 %v27
  %v66 = vunpack.c.l.b16 %v28
  %v67 = vunpack.c.l.b16 %v29
  %v68 = vunpack.c.l.b16 %v30
  %v69 = vunpack.c.l.b16 %v31
  %v70 = vunpack.c.l.b16 %v32
  %v71 = vunpack.c.l.b16 %v33
  %v72 = vunpack.c.l.b16 %v34
  %v73 = vunpack.c.l.b16 %v35
  %v74 = vunpack.c.l.b16 %v36
  %v75 = vunpack.c.l.b16 %v37
  %v76 = vunpack.c.l.b16 %v38
  %v77 = vunpack.c.l.b16 %v39
  %v78 = vunpack.c.l.b16 %v40
  %v79 = vpack.c.b16 %v64, %v63
  %v80 = vpack.c.b16 %v66, %v65
  %v81 = vpack.c.b16 %v68, %v67
  %v82 = vpack.c.b16 %v70, %v69
  %v83 = vpack.c.b16 %v72, %v71
  %v84 = vpack.c.b16 %v74, %v73
  %v85 = vpack.c.b16 %v76, %v75
  %v86 = vpack.c.b16 %v78, %v77
  %95 = vmatprep.subr.bf16.mxu0 0
  %96 = vmatpush1.bf16.msra.mxu0 %v79
  %97 = vmatprep.subr.bf16.mxu0 0
  %98 = vmatpush1.bf16.msra.mxu0 %v80
  %99 = vmatprep.subr.bf16.mxu0 0
  %100 = vmatpush1.bf16.msra.mxu0 %v81
  %101 = vmatprep.subr.bf16.mxu0 0
  %102 = vmatpush1.bf16.msra.mxu0 %v82
  %103 = vmatprep.subr.bf16.mxu0 0
  %104 = vmatpush1.bf16.msra.mxu0 %v83
  %105 = vmatprep.subr.bf16.mxu0 0
  %106 = vmatpush1.bf16.msra.mxu0 %v84
  %107 = vmatprep.subr.bf16.mxu0 0
  %108 = vmatpush1.bf16.msra.mxu0 %v85
  %109 = vmatprep.subr.bf16.mxu0 0
  %110 = vmatpush1.bf16.msra.mxu0 %v86
  %111 = vmatprep.subr.bf16.mxu0 0
  %112 = vmatpush1.bf16.msra.mxu0 0
  %113 = vmatprep.subr.bf16.mxu0 0
  %114 = vmatpush1.bf16.msra.mxu0 0
  %115 = vmatprep.subr.bf16.mxu0 0
  %116 = vmatpush1.bf16.msra.mxu0 0
  %117 = vmatprep.subr.bf16.mxu0 0
  %118 = vmatpush1.bf16.msra.mxu0 0
  %119 = vmatprep.subr.bf16.mxu0 0
  %120 = vmatpush1.bf16.msra.mxu0 0
  %121 = vmatprep.subr.bf16.mxu0 0
  %122 = vmatpush1.bf16.msra.mxu0 0
  %123 = vmatprep.subr.bf16.mxu0 0
  %124 = vmatpush1.bf16.msra.mxu0 0
  %125 = vmatprep.subr.bf16.mxu0 0
  %126 = vmatpush1.bf16.msra.mxu0 0
  %127 = vmatprep.mubr.bf16.mxu0 0
  %128 = vmatmul.mubr.bf16.gmra.mrb[0].mxu0 %v45
  %v129 = vpop.f32.mrb[0].mxu0
  %v130 = vadd.f32 0.0, %v129
  %v131 = vpop.f32.mrb[0].mxu0
  %v132 = vpop.f32.mrb[0].mxu0
  %v133 = vadd.f32 0.0, %v132
  %v134 = vpop.f32.mrb[0].mxu0
  %135 = vdwg.mxu0
  %v136 = vadd.f32 %v21, %v130
  %v137 = vadd.f32 %v22, %v133
  %138 = vst [vmem:[#allocation2] sm:$0xff] %v136
  %139 = vst [vmem:[#allocation2 + $0x8] sm:$0xff] %v137
  // Predicated region
  $region18: #{hunayn_forward.25} parent=0 // pred_check
    %p140 = pneg %p15
  $region19: #{hunayn_forward.25} parent=0 // pred_check_branch
    %142 = sbr.rel (%p140) target = $region21
  $region20: #{hunayn_forward.25} parent=0 // pred_region
    %v143 = vld [vmem:[#allocation2] sm:$0xff]
    %v144 = vld [vmem:[#allocation2 + $0x8] sm:$0xff]
    %v145 = vld [vmem:[%s2] sm:$0x1]
    %v147 = vlaneseq
    %v148 = vshrl.u32 %v147, 7
    %v149 = vsub.s32 0, %v148
    %v150 = vrot.slane %v145, %v149
    %v152 = vadd.f32 %v143, %v150
    %v153 = vadd.f32 %v144, %v150
    %v154 = vpack.c.bf16 %v153, %v152
    %v156 = vunpack.c.l.b16 %v154
    %v157 = vunpack.c.h.b16 %v154
    %v158 = vpack.c.b16 %v156, %v156
    %v159 = vpack.c.b16 %v157, %v157
    %162 = vst [vmem:[%s3] sm:$0xf] %v158
    %163 = vst [vmem:[%s3 + $0x4] sm:$0xf] %v159
  $region21: #{hunayn_forward.25} parent=0 // pred_fallthru
    _
  // Predicated region
  $region22: #{hunayn_forward.25} parent=0 // pred_check
    _
  $region23: #{hunayn_forward.25} parent=0 // pred_check_branch
    %165 = sbr.rel (0) target = $region25
  $region24: #{hunayn_forward.25} parent=0 // pred_region
    _
  $region25: #{hunayn_forward.25} parent=0 // pred_fallthru
    _
  // Predicated region
  $region26: #{hunayn_forward.25} parent=0 // pred_check
    _
  $region27: #{hunayn_forward.25} parent=0 // pred_check_branch
    %167 = sbr.rel (0) target = $region29
  $region28: #{hunayn_forward.25} parent=0 // pred_region
    _
  $region29: #{hunayn_forward.25} parent=0 // pred_fallthru
    _

// kernel: hunayn_forward.26
$region0: #{hunayn_forward.26}
  #allocation0 [shape = 'u32[]', space=smem, size = 0x4, offset = 0x4, fixed_abs, tag = 'smem constant byte address 0x4 - core index']
  #allocation1 [shape = 'u32[144,128]{1,0:T(1,128)}', space=vmem, size = 0x12000, scoped, tag = 'internal scratch']
  %s0 = inlined_call_operand.vmem [shape: bf16[2,8,96], index: 0, kind: input, shape index: {}]
  %s1 = inlined_call_operand.vmem [shape: f32[2,1,8], index: 1, kind: input, shape index: {}]
  %s2 = inlined_call_operand.vmem [shape: bf16[2,8,32], index: 2, kind: output, shape index: {}]
  %s3 = sld [smem:[#allocation0]]
  $region41: #{hunayn_forward.26} parent=0
    _
  %s5 = ssub.s32 1, %s3
  %s6 = scalar_select 0, %s5, %s3
  loop: start=0, step=1, limit=4
  $region2: #{hunayn_forward.26} parent=0 // loop_pre_header
    _
  $region3: #{hunayn_forward.26} parent=0 // loop_header
    %s8 = sphi 0, %s12
    %p9 = scmp.ge.s32.totalorder %s8, 4
    %s18 = sphi 0, %s20
    %s21 = sphi 0, %s18
    %s22 = sphi 0, %s21
    %s38 = sphi 0, %s22
    %s44 = sphi 0, %s46
    %s47 = sphi 0, %s44
    %s48 = sphi 0, %s47
    %s64 = sphi 0, %s48
    %s70 = sphi 0, %s72
    %s73 = sphi 0, %s70
    %s74 = sphi 0, %s73
    %s90 = sphi 0, %s74
  $region4: #{hunayn_forward.26} parent=0 // loop_header_branch
    %11 = sbr.rel (%p9) target = $region8
  $region5: #{hunayn_forward.26} parent=0 // loop_body
    %s13 = ssub.s32 %s8, 1
    %s14 = ssub.s32 %s8, 2
    %s15 = sadd.s32 %s8, 1
    %s16 = ssub.s32 %s8, %s15
    %p17 = scmp.eq.s32.totalorder %s16, 0
    %s19 = sadd.s32 %s18, 1
    %s20 = scalar_select %p17, %s18, %s19
    %p23 = pneg %p17
    %p24 = scmp.eq.s32.totalorder %s8, 1
    %p25 = por %p23, %p24
    %p26 = scmp.ne.s32.totalorder %s18, %s21
    %p27 = scmp.eq.s32.totalorder %s8, 0
    %p28 = por %p26, %p27
    %p29 = scmp.ne.s32.totalorder %s18, %s21
    %p30 = scmp.eq.s32.totalorder %s13, 1
    %p31 = por %p29, %p30
    %p32 = scmp.ne.s32.totalorder %s21, %s22
    %p33 = scmp.eq.s32.totalorder %s13, 0
    %p34 = por %p32, %p33
    %p35 = scmp.ne.s32.totalorder %s21, %s22
    %p36 = scmp.eq.s32.totalorder %s14, 1
    %p37 = por %p35, %p36
    %p39 = scmp.ne.s32.totalorder %s22, %s38
    %p40 = scmp.eq.s32.totalorder %s14, 0
    %p41 = por %p39, %p40
    %s42 = ssub.s32 %s8, %s15
    %p43 = scmp.eq.s32.totalorder %s42, 0
    %s45 = sadd.s32 %s44, 1
    %s46 = scalar_select %p43, %s44, %s45
    %p49 = pneg %p43
    %p50 = scmp.eq.s32.totalorder %s8, 1
    %p51 = por %p49, %p50
    %p52 = scmp.ne.s32.totalorder %s44, %s47
    %p53 = scmp.eq.s32.totalorder %s8, 0
    %p54 = por %p52, %p53
    %p55 = scmp.ne.s32.totalorder %s44, %s47
    %p56 = scmp.eq.s32.totalorder %s13, 1
    %p57 = por %p55, %p56
    %p58 = scmp.ne.s32.totalorder %s47, %s48
    %p59 = scmp.eq.s32.totalorder %s13, 0
    %p60 = por %p58, %p59
    %p61 = scmp.ne.s32.totalorder %s47, %s48
    %p62 = scmp.eq.s32.totalorder %s14, 1
    %p63 = por %p61, %p62
    %p65 = scmp.ne.s32.totalorder %s48, %s64
    %p66 = scmp.eq.s32.totalorder %s14, 0
    %p67 = por %p65, %p66
    %s68 = ssub.s32 %s8, %s15
    %p69 = scmp.eq.s32.totalorder %s68, 0
    %s71 = sadd.s32 %s70, 1
    %s72 = scalar_select %p69, %s70, %s71
    %p75 = pneg %p69
    %p76 = scmp.eq.s32.totalorder %s8, 1
    %p77 = por %p75, %p76
    %p78 = scmp.ne.s32.totalorder %s70, %s73
    %p79 = scmp.eq.s32.totalorder %s8, 0
    %p80 = por %p78, %p79
    %p81 = scmp.ne.s32.totalorder %s70, %s73
    %p82 = scmp.eq.s32.totalorder %s13, 1
    %p83 = por %p81, %p82
    %p84 = scmp.ne.s32.totalorder %s73, %s74
    %p85 = scmp.eq.s32.totalorder %s13, 0
    %p86 = por %p84, %p85
    %p87 = scmp.ne.s32.totalorder %s73, %s74
    %p88 = scmp.eq.s32.totalorder %s14, 1
    %p89 = por %p87, %p88
    %p91 = scmp.ne.s32.totalorder %s74, %s90
    %p92 = scmp.eq.s32.totalorder %s14, 0
    %p93 = por %p91, %p92
    %p94 = scmp.le.s32.totalorder 1, %s8
    %p95 = scmp.lt.s32.totalorder %s8, 3
    %p96 = pnand %p94, %p95
    %p97 = pneg %p96
    // Predicated region
    $region9: #{hunayn_forward.26} parent=5 // pred_check
      _
    $region10: #{hunayn_forward.26} parent=5 // pred_check_branch
      %99 = sbr.rel (%p96) target = $region12
    $region11: #{hunayn_forward.26} parent=5 // pred_region
      %s100 = ssub.s32 %s8, 1
    $region12: #{hunayn_forward.26} parent=5 // pred_fallthru
      _
    %p101 = scmp.lt.s32.totalorder %s8, 2
    // Predicated region
    $region13: #{hunayn_forward.26} parent=5 // pred_check
      %p102 = pneg %p101
    $region14: #{hunayn_forward.26} parent=5 // pred_check_branch
      %104 = sbr.rel (%p102) target = $region16
    $region15: #{hunayn_forward.26} parent=5 // pred_region
      // Predicated region
      $region17: #{hunayn_forward.26} parent=15 // pred_check
        %p105 = pneg %p28
      $region18: #{hunayn_forward.26} parent=15 // pred_check_branch
        %107 = sbr.rel (%p105) target = $region20
      $region19: #{hunayn_forward.26} parent=15 // pred_region
        %p108 = scmp.lt.s32.totalorder %s8, 1
        %s109 = scalar_select %p108, %s8, 1
        %s110 = smul.addr %s109, 4
        %s111 = scalar_lea.vmem %s0, %s110
      $region20: #{hunayn_forward.26} parent=15 // pred_fallthru
        _
      // Predicated region
      $region21: #{hunayn_forward.26} parent=15 // pred_check
        %p112 = pneg %p54
      $region22: #{hunayn_forward.26} parent=15 // pred_check_branch
        %114 = sbr.rel (%p112) target = $region24
      $region23: #{hunayn_forward.26} parent=15 // pred_region
        %p115 = scmp.lt.s32.totalorder %s8, 1
        %s116 = scalar_select %p115, %s8, 1
        %s117 = scalar_lea.vmem %s1, %s116
      $region24: #{hunayn_forward.26} parent=15 // pred_fallthru
        _
    $region16: #{hunayn_forward.26} parent=5 // pred_fallthru
      _
    %p118 = scmp.le.s32.totalorder 1, %s8
    %p119 = scmp.lt.s32.totalorder %s8, 3
    %p120 = pnand %p118, %p119
    %p121 = pneg %p120
    // Predicated region
    $region25: #{hunayn_forward.26} parent=5 // pred_check
      _
    $region26: #{hunayn_forward.26} parent=5 // pred_check_branch
      %123 = sbr.rel (%p120) target = $region28
    $region27: #{hunayn_forward.26} parent=5 // pred_region
      %s124 = ssub.s32 %s8, 1
      %p125 = scmp.lt.s32.totalorder %s13, 1
      %s126 = scalar_select %p125, %s13, 1
      %s127 = smul.addr %s126, 4
      %s128 = scalar_lea.vmem %s0, %s127
      %p129 = pneg %p34
      %p130 = pneg %p31
      %p131 = scmp.lt.s32.totalorder %s13, 1
      %s132 = scalar_select %p131, %s13, 1
      %s133 = scalar_lea.vmem %s1, %s132
      %p134 = pneg %p60
      %p135 = pneg %p57
      %p136 = pneg %p86
      %p137 = pneg %p83
      %p138 = scmp.lt.s32.totalorder %s13, 1
      %s139 = scalar_select %p138, %s13, 1
      %s140 = smul.addr %s139, 4
      %s141 = scalar_lea.vmem %s2, %s140
      %p142 = scmp.lt.s32.totalorder %s13, 1
      %s143 = scalar_select %p142, %s13, 1
      %s144 = smul.addr %s143, 4
      %s145 = scalar_lea.vmem %s0, %s144
      %p146 = scmp.lt.s32.totalorder %s13, 1
      %s147 = scalar_select %p146, %s13, 1
      %s148 = scalar_lea.vmem %s1, %s147
      %p149 = scmp.lt.s32.totalorder %s13, 1
      %s150 = scalar_select %p149, %s13, 1
      %s151 = smul.addr %s150, 4
      %s152 = scalar_lea.vmem %s2, %s151
      %v154 = vld [vmem:[%s145] sm:$0xf]
      %v155 = vld [vmem:[%s148] sm:$0x1]
      %v157 = vunpack.c.l.b16 %v154
      %v158 = vpack.c.b16 %v157, %v157
      %159 = vrot.lane.b32.xlu0 %v158, 96
      %v160 = vpop.permute.xlu0 %159
      %vm161 = vcmask 64512
      %v163 = vsel %vm161, %v154, 0
      %v166 = vsel %vm161, %v160, 0
      %168 = vmatprep.subr.bf16.mxu0 0
      %169 = vmatpush1.bf16.xpose.msra.mxu0 %v166
      %170 = vmatprep.subr.bf16.mxu0 0
      %171 = vmatpush1.bf16.xpose.msra.mxu0 0
      %172 = vmatprep.subr.bf16.mxu0 0
      %173 = vmatpush1.bf16.xpose.msra.mxu0 0
      %174 = vmatprep.subr.bf16.mxu0 0
      %175 = vmatpush1.bf16.xpose.msra.mxu0 0
      %176 = vmatprep.subr.bf16.mxu0 0
      %177 = vmatpush1.bf16.xpose.msra.mxu0 0
      %178 = vmatprep.subr.bf16.mxu0 0
      %179 = vmatpush1.bf16.xpose.msra.mxu0 0
      %180 = vmatprep.subr.bf16.mxu0 0
      %181 = vmatpush1.bf16.xpose.msra.mxu0 0
      %182 = vmatprep.subr.bf16.mxu0 0
      %183 = vmatpush1.bf16.xpose.msra.mxu0 0
      %184 = vmatprep.subr.bf16.mxu0 0
      %185 = vmatpush1.bf16.xpose.msra.mxu0 0
      %186 = vmatprep.subr.bf16.mxu0 0
      %187 = vmatpush1.bf16.xpose.msra.mxu0 0
      %188 = vmatprep.subr.bf16.mxu0 0
      %189 = vmatpush1.bf16.xpose.msra.mxu0 0
      %190 = vmatprep.subr.bf16.mxu0 0
      %191 = vmatpush1.bf16.xpose.msra.mxu0 0
      %192 = vmatprep.subr.bf16.mxu0 0
      %193 = vmatpush1.bf16.xpose.msra.mxu0 0
      %194 = vmatprep.subr.bf16.mxu0 0
      %195 = vmatpush1.bf16.xpose.msra.mxu0 0
      %196 = vmatprep.subr.bf16.mxu0 0
      %197 = vmatpush1.bf16.xpose.msra.mxu0 0
      %198 = vmatprep.subr.bf16.mxu0 0
      %199 = vmatpush1.bf16.xpose.msra.mxu0 0
      %200 = vmatprep.mubr.bf16.mxu0 0
      %201 = vmatmul.mubr.bf16.gmra.mrb[0].mxu0 %v163
      %v202 = vpop.f32.mrb[0].mxu0
      %v203 = vadd.f32 0.0, %v202
      %v204 = vpop.f32.mrb[0].mxu0
      %v205 = vpop.f32.mrb[0].mxu0
      %v206 = vpop.f32.mrb[0].mxu0
      %207 = vdwg.mxu0
      %v208 = vmul.f32 %v203, 0.35355338
      %v210 = vlaneseq
      %v211 = vshrl.u32 %v210, 7
      %v212 = vsub.s32 0, %v211
      %v213 = vrot.slane %v155, %v212
      %v215 = vadd.f32 %v208, %v213
      %v216 = vsel %vm161, %v215, -inf
      %217 = vmax.xlane.f32.xlu0 %v216
      %v218 = vpop.xlane.xlu0 %217
      %v219 = vsub.f32 %v215, %v218
      %v220 = vmul.f32 %v219, 1.442695
      %v221 = vpow.pop %v220
      %v222 = vsel %vm161, %v221, 0.0
      %223 = vadd.xlane.f32.xlu0 %v222
      %v224 = vpop.xlane.xlu0 %223
      %v225 = vrcp.pop %v224
      %v226 = vmul.f32 %v221, %v225
      %v227 = vpack.c.bf16 %v226, %v226
      %228 = vrot.lane.b32.xlu0 %v158, 64
      %v229 = vpop.permute.xlu0 %228
      %v231 = vsel %vm161, %v227, 0
      %vm233 = vcmask 1043456
      %v235 = vsel %vm233, %v229, 0
      %237 = vmatprep.subr.bf16.mxu0 0
      %238 = vmatpush1.bf16.msra.mxu0 %v235
      %239 = vmatprep.subr.bf16.mxu0 0
      %240 = vmatpush1.bf16.msra.mxu0 0
      %241 = vmatprep.subr.bf16.mxu0 0
      %242 = vmatpush1.bf16.msra.mxu0 0
      %243 = vmatprep.subr.bf16.mxu0 0
      %244 = vmatpush1.bf16.msra.mxu0 0
      %245 = vmatprep.subr.bf16.mxu0 0
      %246 = vmatpush1.bf16.msra.mxu0 0
      %247 = vmatprep.subr.bf16.mxu0 0
      %248 = vmatpush1.bf16.msra.mxu0 0
      %249 = vmatprep.subr.bf16.mxu0 0
      %250 = vmatpush1.bf16.msra.mxu0 0
      %251 = vmatprep.subr.bf16.mxu0 0
      %252 = vmatpush1.bf16.msra.mxu0 0
      %253 = vmatprep.subr.bf16.mxu0 0
      %254 = vmatpush1.bf16.msra.mxu0 0
      %255 = vmatprep.subr.bf16.mxu0 0
      %256 = vmatpush1.bf16.msra.mxu0 0
      %257 = vmatprep.subr.bf16.mxu0 0
      %258 = vmatpush1.bf16.msra.mxu0 0
      %259 = vmatprep.subr.bf16.mxu0 0
      %260 = vmatpush1.bf16.msra.mxu0 0
      %261 = vmatprep.subr.bf16.mxu0 0
      %262 = vmatpush1.bf16.msra.mxu0 0
      %263 = vmatprep.subr.bf16.mxu0 0
      %264 = vmatpush1.bf16.msra.mxu0 0
      %265 = vmatprep.subr.bf16.mxu0 0
      %266 = vmatpush1.bf16.msra.mxu0 0
      %267 = vmatprep.subr.bf16.mxu0 0
      %268 = vmatpush1.bf16.msra.mxu0 0
      %269 = vmatprep.mubr.bf16.mxu0 0
      %270 = vmatmul.mubr.bf16.gmra.mrb[0].mxu0 %v231
      %v271 = vpop.f32.mrb[0].mxu0
      %v272 = vadd.f32 0.0, %v271
      %v273 = vpop.f32.mrb[0].mxu0
      %v274 = vpop.f32.mrb[0].mxu0
      %v275 = vpop.f32.mrb[0].mxu0
      %276 = vdwg.mxu0
      %277 = vrot.lane.b32.xlu0 %v158, 120
      %v278 = vpop.permute.xlu0 %277
      %279 = vrot.lane.b32.xlu0 %v158, 88
      %v280 = vpop.permute.xlu0 %279
      %v282 = vsel %vm161, %v278, 0
      %v285 = vsel %vm161, %v280, 0
      %287 = vmatprep.subr.bf16.mxu0 0
      %288 = vmatpush1.bf16.xpose.msra.mxu0 %v285
      %289 = vmatprep.subr.bf16.mxu0 0
      %290 = vmatpush1.bf16.xpose.msra.mxu0 0
      %291 = vmatprep.subr.bf16.mxu0 0
      %292 = vmatpush1.bf16.xpose.msra.mxu0 0
      %293 = vmatprep.subr.bf16.mxu0 0
      %294 = vmatpush1.bf16.xpose.msra.mxu0 0
      %295 = vmatprep.subr.bf16.mxu0 0
      %296 = vmatpush1.bf16.xpose.msra.mxu0 0
      %297 = vmatprep.subr.bf16.mxu0 0
      %298 = vmatpush1.bf16.xpose.msra.mxu0 0
      %299 = vmatprep.subr.bf16.mxu0 0
      %300 = vmatpush1.bf16.xpose.msra.mxu0 0
      %301 = vmatprep.subr.bf16.mxu0 0
      %302 = vmatpush1.bf16.xpose.msra.mxu0 0
      %303 = vmatprep.subr.bf16.mxu0 0
      %304 = vmatpush1.bf16.xpose.msra.mxu0 0
      %305 = vmatprep.subr.bf16.mxu0 0
      %306 = vmatpush1.bf16.xpose.msra.mxu0 0
      %307 = vmatprep.subr.bf16.mxu0 0
      %308 = vmatpush1.bf16.xpose.msra.mxu0 0
      %309 = vmatprep.subr.bf16.mxu0 0
      %310 = vmatpush1.bf16.xpose.msra.mxu0 0
      %311 = vmatprep.subr.bf16.mxu0 0
      %312 = vmatpush1.bf16.xpose.msra.mxu0 0
      %313 = vmatprep.subr.bf16.mxu0 0
      %314 = vmatpush1.bf16.xpose.msra.mxu0 0
      %315 = vmatprep.subr.bf16.mxu0 0
      %316 = vmatpush1.bf16.xpose.msra.mxu0 0
      %317 = vmatprep.subr.bf16.mxu0 0
      %318 = vmatpush1.bf16.xpose.msra.mxu0 0
      %319 = vmatprep.mubr.bf16.mxu0 0
      %320 = vmatmul.mubr.bf16.gmra.mrb[0].mxu0 %v282
      %v321 = vpop.f32.mrb[0].mxu0
      %v322 = vadd.f32 0.0, %v321
      %v323 = vpop.f32.mrb[0].mxu0
      %v324 = vpop.f32.mrb[0].mxu0
      %v325 = vpop.f32.mrb[0].mxu0
      %326 = vdwg.mxu0
      %v327 = vmul.f32 %v322, 0.35355338
      %v328 = vadd.f32 %v327, %v213
      %v329 = vsel %vm161, %v328, -inf
      %330 = vmax.xlane.f32.xlu0 %v329
      %v331 = vpop.xlane.xlu0 %330
      %v332 = vsub.f32 %v328, %v331
      %v333 = vmul.f32 %v332, 1.442695
      %v334 = vpow.pop %v333
      %v335 = vsel %vm161, %v334, 0.0
      %336 = vadd.xlane.f32.xlu0 %v335
      %v337 = vpop.xlane.xlu0 %336
      %v338 = vrcp.pop %v337
      %v339 = vmul.f32 %v334, %v338
      %v340 = vpack.c.bf16 %v339, %v339
      %341 = vrot.lane.b32.xlu0 %v158, 56
      %v342 = vpop.permute.xlu0 %341
      %v344 = vsel %vm161, %v340, 0
      %v347 = vsel %vm233, %v342, 0
      %349 = vmatprep.subr.bf16.mxu0 0
      %350 = vmatpush1.bf16.msra.mxu0 %v347
      %351 = vmatprep.subr.bf16.mxu0 0
      %352 = vmatpush1.bf16.msra.mxu0 0
      %353 = vmatprep.subr.bf16.mxu0 0
      %354 = vmatpush1.bf16.msra.mxu0 0
      %355 = vmatprep.subr.bf16.mxu0 0
      %356 = vmatpush1.bf16.msra.mxu0 0
      %357 = vmatprep.subr.bf16.mxu0 0
      %358 = vmatpush1.bf16.msra.mxu0 0
      %359 = vmatprep.subr.bf16.mxu0 0
      %360 = vmatpush1.bf16.msra.mxu0 0
      %361 = vmatprep.subr.bf16.mxu0 0
      %362 = vmatpush1.bf16.msra.mxu0 0
      %363 = vmatprep.subr.bf16.mxu0 0
      %364 = vmatpush1.bf16.msra.mxu0 0
      %365 = vmatprep.subr.bf16.mxu0 0
      %366 = vmatpush1.bf16.msra.mxu0 0
      %367 = vmatprep.subr.bf16.mxu0 0
      %368 = vmatpush1.bf16.msra.mxu0 0
      %369 = vmatprep.subr.bf16.mxu0 0
      %370 = vmatpush1.bf16.msra.mxu0 0
      %371 = vmatprep.subr.bf16.mxu0 0
      %372 = vmatpush1.bf16.msra.mxu0 0
      %373 = vmatprep.subr.bf16.mxu0 0
      %374 = vmatpush1.bf16.msra.mxu0 0
      %375 = vmatprep.subr.bf16.mxu0 0
      %376 = vmatpush1.bf16.msra.mxu0 0
      %377 = vmatprep.subr.bf16.mxu0 0
      %378 = vmatpush1.bf16.msra.mxu0 0
      %379 = vmatprep.subr.bf16.mxu0 0
      %380 = vmatpush1.bf16.msra.mxu0 0
      %381 = vmatprep.mubr.bf16.mxu0 0
      %382 = vmatmul.mubr.bf16.gmra.mrb[0].mxu0 %v344
      %v383 = vpop.f32.mrb[0].mxu0
      %v384 = vadd.f32 0.0, %v383
      %v385 = vpop.f32.mrb[0].mxu0
      %v386 = vpop.f32.mrb[0].mxu0
      %v387 = vpop.f32.mrb[0].mxu0
      %388 = vdwg.mxu0
      %389 = vrot.lane.b32.xlu0 %v158, 112
      %v390 = vpop.permute.xlu0 %389
      %391 = vrot.lane.b32.xlu0 %v158, 80
      %v392 = vpop.permute.xlu0 %391
      %v394 = vsel %vm161, %v390, 0
      %v397 = vsel %vm161, %v392, 0
      %399 = vmatprep.subr.bf16.mxu0 0
      %400 = vmatpush1.bf16.xpose.msra.mxu0 %v397
      %401 = vmatprep.subr.bf16.mxu0 0
      %402 = vmatpush1.bf16.xpose.msra.mxu0 0
      %403 = vmatprep.subr.bf16.mxu0 0
      %404 = vmatpush1.bf16.xpose.msra.mxu0 0
      %405 = vmatprep.subr.bf16.mxu0 0
      %406 = vmatpush1.bf16.xpose.msra.mxu0 0
      %407 = vmatprep.subr.bf16.mxu0 0
      %408 = vmatpush1.bf16.xpose.msra.mxu0 0
      %409 = vmatprep.subr.bf16.mxu0 0
      %410 = vmatpush1.bf16.xpose.msra.mxu0 0
      %411 = vmatprep.subr.bf16.mxu0 0
      %412 = vmatpush1.bf16.xpose.msra.mxu0 0
      %413 = vmatprep.subr.bf16.mxu0 0
      %414 = vmatpush1.bf16.xpose.msra.mxu0 0
      %415 = vmatprep.subr.bf16.mxu0 0
      %416 = vmatpush1.bf16.xpose.msra.mxu0 0
      %417 = vmatprep.subr.bf16.mxu0 0
      %418 = vmatpush1.bf16.xpose.msra.mxu0 0
      %419 = vmatprep.subr.bf16.mxu0 0
      %420 = vmatpush1.bf16.xpose.msra.mxu0 0
      %421 = vmatprep.subr.bf16.mxu0 0
      %422 = vmatpush1.bf16.xpose.msra.mxu0 0
      %423 = vmatprep.subr.bf16.mxu0 0
      %424 = vmatpush1.bf16.xpose.msra.mxu0 0
      %425 = vmatprep.subr.bf16.mxu0 0
      %426 = vmatpush1.bf16.xpose.msra.mxu0 0
      %427 = vmatprep.subr.bf16.mxu0 0
      %428 = vmatpush1.bf16.xpose.msra.mxu0 0
      %429 = vmatprep.subr.bf16.mxu0 0
      %430 = vmatpush1.bf16.xpose.msra.mxu0 0
      %431 = vmatprep.mubr.bf16.mxu0 0
      %432 = vmatmul.mubr.bf16.gmra.mrb[0].mxu0 %v394
      %v433 = vpop.f32.mrb[0].mxu0
      %v434 = vadd.f32 0.0, %v433
      %v435 = vpop.f32.mrb[0].mxu0
      %v436 = vpop.f32.mrb[0].mxu0
      %v437 = vpop.f32.mrb[0].mxu0
      %438 = vdwg.mxu0
      %v439 = vmul.f32 %v434, 0.35355338
      %v440 = vadd.f32 %v439, %v213
      %v441 = vsel %vm161, %v440, -inf
      %442 = vmax.xlane.f32.xlu0 %v441
      %v443 = vpop.xlane.xlu0 %442
      %v444 = vsub.f32 %v440, %v443
      %v445 = vmul.f32 %v444, 1.442695
      %v446 = vpow.pop %v445
      %v447 = vsel %vm161, %v446, 0.0
      %448 = vadd.xlane.f32.xlu0 %v447
      %v449 = vpop.xlane.xlu0 %448
      %v450 = vrcp.pop %v449
      %v451 = vmul.f32 %v446, %v450
      %v452 = vpack.c.bf16 %v451, %v451
      %453 = vrot.lane.b32.xlu0 %v158, 48
      %v454 = vpop.permute.xlu0 %453
      %v456 = vsel %vm161, %v452, 0
      %v459 = vsel %vm233, %v454, 0
      %461 = vmatprep.subr.bf16.mxu0 0
      %462 = vmatpush1.bf16.msra.mxu0 %v459
      %463 = vmatprep.subr.bf16.mxu0 0
      %464 = vmatpush1.bf16.msra.mxu0 0
      %465 = vmatprep.subr.bf16.mxu0 0
      %466 = vmatpush1.bf16.msra.mxu0 0
      %467 = vmatprep.subr.bf16.mxu0 0
      %468 = vmatpush1.bf16.msra.mxu0 0
      %469 = vmatprep.subr.bf16.mxu0 0
      %470 = vmatpush1.bf16.msra.mxu0 0
      %471 = vmatprep.subr.bf16.mxu0 0
      %472 = vmatpush1.bf16.msra.mxu0 0
      %473 = vmatprep.subr.bf16.mxu0 0
      %474 = vmatpush1.bf16.msra.mxu0 0
      %475 = vmatprep.subr.bf16.mxu0 0
      %476 = vmatpush1.bf16.msra.mxu0 0
      %477 = vmatprep.subr.bf16.mxu0 0
      %478 = vmatpush1.bf16.msra.mxu0 0
      %479 = vmatprep.subr.bf16.mxu0 0
      %480 = vmatpush1.bf16.msra.mxu0 0
      %481 = vmatprep.subr.bf16.mxu0 0
      %482 = vmatpush1.bf16.msra.mxu0 0
      %483 = vmatprep.subr.bf16.mxu0 0
      %484 = vmatpush1.bf16.msra.mxu0 0
      %485 = vmatprep.subr.bf16.mxu0 0
      %486 = vmatpush1.bf16.msra.mxu0 0
      %487 = vmatprep.subr.bf16.mxu0 0
      %488 = vmatpush1.bf16.msra.mxu0 0
      %489 = vmatprep.subr.bf16.mxu0 0
      %490 = vmatpush1.bf16.msra.mxu0 0
      %491 = vmatprep.subr.bf16.mxu0 0
      %492 = vmatpush1.bf16.msra.mxu0 0
      %493 = vmatprep.mubr.bf16.mxu0 0
      %494 = vmatmul.mubr.bf16.gmra.mrb[0].mxu0 %v456
      %v495 = vpop.f32.mrb[0].mxu0
      %v496 = vadd.f32 0.0, %v495
      %v497 = vpop.f32.mrb[0].mxu0
      %v498 = vpop.f32.mrb[0].mxu0
      %v499 = vpop.f32.mrb[0].mxu0
      %500 = vdwg.mxu0
      %501 = vrot.lane.b32.xlu0 %v158, 104
      %v502 = vpop.permute.xlu0 %501
      %503 = vrot.lane.b32.xlu0 %v158, 72
      %v504 = vpop.permute.xlu0 %503
      %v506 = vsel %vm161, %v502, 0
      %v509 = vsel %vm161, %v504, 0
      %511 = vmatprep.subr.bf16.mxu0 0
      %512 = vmatpush1.bf16.xpose.msra.mxu0 %v509
      %513 = vmatprep.subr.bf16.mxu0 0
      %514 = vmatpush1.bf16.xpose.msra.mxu0 0
      %515 = vmatprep.subr.bf16.mxu0 0
      %516 = vmatpush1.bf16.xpose.msra.mxu0 0
      %517 = vmatprep.subr.bf16.mxu0 0
      %518 = vmatpush1.bf16.xpose.msra.mxu0 0
      %519 = vmatprep.subr.bf16.mxu0 0
      %520 = vmatpush1.bf16.xpose.msra.mxu0 0
      %521 = vmatprep.subr.bf16.mxu0 0
      %522 = vmatpush1.bf16.xpose.msra.mxu0 0
      %523 = vmatprep.subr.bf16.mxu0 0
      %524 = vmatpush1.bf16.xpose.msra.mxu0 0
      %525 = vmatprep.subr.bf16.mxu0 0
      %526 = vmatpush1.bf16.xpose.msra.mxu0 0
      %527 = vmatprep.subr.bf16.mxu0 0
      %528 = vmatpush1.bf16.xpose.msra.mxu0 0
      %529 = vmatprep.subr.bf16.mxu0 0
      %530 = vmatpush1.bf16.xpose.msra.mxu0 0
      %531 = vmatprep.subr.bf16.mxu0 0
      %532 = vmatpush1.bf16.xpose.msra.mxu0 0
      %533 = vmatprep.subr.bf16.mxu0 0
      %534 = vmatpush1.bf16.xpose.msra.mxu0 0
      %535 = vmatprep.subr.bf16.mxu0 0
      %536 = vmatpush1.bf16.xpose.msra.mxu0 0
      %537 = vmatprep.subr.bf16.mxu0 0
      %538 = vmatpush1.bf16.xpose.msra.mxu0 0
      %539 = vmatprep.subr.bf16.mxu0 0
      %540 = vmatpush1.bf16.xpose.msra.mxu0 0
      %541 = vmatprep.subr.bf16.mxu0 0
      %542 = vmatpush1.bf16.xpose.msra.mxu0 0
      %543 = vmatprep.mubr.bf16.mxu0 0
      %544 = vmatmul.mubr.bf16.gmra.mrb[0].mxu0 %v506
      %v545 = vpop.f32.mrb[0].mxu0
      %v546 = vadd.f32 0.0, %v545
      %v547 = vpop.f32.mrb[0].mxu0
      %v548 = vpop.f32.mrb[0].mxu0
      %v549 = vpop.f32.mrb[0].mxu0
      %550 = vdwg.mxu0
      %v551 = vmul.f32 %v546, 0.35355338
      %v552 = vadd.f32 %v551, %v213
      %v553 = vsel %vm161, %v552, -inf
      %554 = vmax.xlane.f32.xlu0 %v553
      %v555 = vpop.xlane.xlu0 %554
      %v556 = vsub.f32 %v552, %v555
      %v557 = vmul.f32 %v556, 1.442695
      %v558 = vpow.pop %v557
      %v559 = vsel %vm161, %v558, 0.0
      %560 = vadd.xlane.f32.xlu0 %v559
      %v561 = vpop.xlane.xlu0 %560
      %v562 = vrcp.pop %v561
      %v563 = vmul.f32 %v558, %v562
      %v564 = vpack.c.bf16 %v563, %v563
      %565 = vrot.lane.b32.xlu0 %v158, 40
      %v566 = vpop.permute.xlu0 %565
      %v568 = vsel %vm161, %v564, 0
      %v571 = vsel %vm233, %v566, 0
      %573 = vmatprep.subr.bf16.mxu0 0
      %574 = vmatpush1.bf16.msra.mxu0 %v571
      %575 = vmatprep.subr.bf16.mxu0 0
      %576 = vmatpush1.bf16.msra.mxu0 0
      %577 = vmatprep.subr.bf16.mxu0 0
      %578 = vmatpush1.bf16.msra.mxu0 0
      %579 = vmatprep.subr.bf16.mxu0 0
      %580 = vmatpush1.bf16.msra.mxu0 0
      %581 = vmatprep.subr.bf16.mxu0 0
      %582 = vmatpush1.bf16.msra.mxu0 0
      %583 = vmatprep.subr.bf16.mxu0 0
      %584 = vmatpush1.bf16.msra.mxu0 0
      %585 = vmatprep.subr.bf16.mxu0 0
      %586 = vmatpush1.bf16.msra.mxu0 0
      %587 = vmatprep.subr.bf16.mxu0 0
      %588 = vmatpush1.bf16.msra.mxu0 0
      %589 = vmatprep.subr.bf16.mxu0 0
      %590 = vmatpush1.bf16.msra.mxu0 0
      %591 = vmatprep.subr.bf16.mxu0 0
      %592 = vmatpush1.bf16.msra.mxu0 0
      %593 = vmatprep.subr.bf16.mxu0 0
      %594 = vmatpush1.bf16.msra.mxu0 0
      %595 = vmatprep.subr.bf16.mxu0 0
      %596 = vmatpush1.bf16.msra.mxu0 0
      %597 = vmatprep.subr.bf16.mxu0 0
      %598 = vmatpush1.bf16.msra.mxu0 0
      %599 = vmatprep.subr.bf16.mxu0 0
      %600 = vmatpush1.bf16.msra.mxu0 0
      %601 = vmatprep.subr.bf16.mxu0 0
      %602 = vmatpush1.bf16.msra.mxu0 0
      %603 = vmatprep.subr.bf16.mxu0 0
      %604 = vmatpush1.bf16.msra.mxu0 0
      %605 = vmatprep.mubr.bf16.mxu0 0
      %606 = vmatmul.mubr.bf16.gmra.mrb[0].mxu0 %v568
      %v607 = vpop.f32.mrb[0].mxu0
      %v608 = vadd.f32 0.0, %v607
      %v609 = vpop.f32.mrb[0].mxu0
      %v610 = vpop.f32.mrb[0].mxu0
      %v611 = vpop.f32.mrb[0].mxu0
      %612 = vdwg.mxu0
      %614 = vrot.lane.b32.xlu0 %v384, 8
      %v615 = vpop.permute.xlu0 %614
      %618 = vrot.lane.b32.xlu0 %v496, 16
      %v619 = vpop.permute.xlu0 %618
      %622 = vrot.lane.b32.xlu0 %v608, 24
      %v623 = vpop.permute.xlu0 %622
      %v625 = vsel %vm161, %v272, %v615
      %vm626 = vcmask 130048
      %v627 = vsel %vm626, %v625, %v619
      %vm628 = vcmask 195584
      %v629 = vsel %vm628, %v627, %v623
      %v630 = vpack.c.bf16 %v629, %v629
      %vm631 = vcmask 257024
      %632 = vst.msk [vmem:[%s152] sm:$0xf] %vm631, %v630
      %p633 = scmp.lt.s32.totalorder %s13, 1
      %s634 = scalar_select %p633, %s13, 1
      %s635 = smul.addr %s634, 4
      %s636 = scalar_lea.vmem %s2, %s635
      // Predicated region
      $region29: #{hunayn_forward.26} parent=27 // pred_check
        %p637 = pneg %p83
      $region30: #{hunayn_forward.26} parent=27 // pred_check_branch
        %639 = sbr.rel (%p637) target = $region32
      $region31: #{hunayn_forward.26} parent=27 // pred_region
        _
      $region32: #{hunayn_forward.26} parent=27 // pred_fallthru
        _
    $region28: #{hunayn_forward.26} parent=5 // pred_fallthru
      _
    %p640 = scmp.le.s32.totalorder 2, %s8
    // Predicated region
    $region33: #{hunayn_forward.26} parent=5 // pred_check
      %p641 = pneg %p640
    $region34: #{hunayn_forward.26} parent=5 // pred_check_branch
      %643 = sbr.rel (%p641) target = $region36
    $region35: #{hunayn_forward.26} parent=5 // pred_region
      %s644 = ssub.s32 %s8, 2
      // Predicated region
      $region37: #{hunayn_forward.26} parent=35 // pred_check
        %p645 = pneg %p89
      $region38: #{hunayn_forward.26} parent=35 // pred_check_branch
        %647 = sbr.rel (%p645) target = $region40
      $region39: #{hunayn_forward.26} parent=35 // pred_region
        %p648 = scmp.lt.s32.totalorder %s14, 1
        %s649 = scalar_select %p648, %s14, 1
        %s650 = smul.addr %s649, 4
        %s651 = scalar_lea.vmem %s2, %s650
      $region40: #{hunayn_forward.26} parent=35 // pred_fallthru
        _
    $region36: #{hunayn_forward.26} parent=5 // pred_fallthru
      _
  $region6: #{hunayn_forward.26} parent=0 // loop_footer
    %s12 = sadd.s32 1, %s8
  $region7: #{hunayn_forward.26} parent=0 // loop_footer_branch
    %7 = sbr.rel target = $region3
  $region8: #{hunayn_forward.26} parent=0 // loop_exit
    _

// kernel: hunayn_forward.28
$region0: #{hunayn_forward.28}
  #allocation0 [shape = 'u32[]', space=smem, size = 0x4, offset = 0x4, fixed_abs, tag = 'smem constant byte address 0x4 - core index']
  #allocation1 [shape = 'u32[144,128]{1,0:T(1,128)}', space=vmem, size = 0x12000, scoped, tag = 'internal scratch']
  %s0 = inlined_call_operand.vmem [shape: bf16[16,32], index: 0, kind: input, shape index: {}]
  %s1 = inlined_call_operand.vmem [shape: bf16[32,64], index: 1, kind: input, shape index: {}]
  %s2 = inlined_call_operand.vmem [shape: f32[1,64], index: 2, kind: input, shape index: {}]
  %s3 = inlined_call_operand.vmem [shape: bf16[64,32], index: 3, kind: input, shape index: {}]
  %s4 = inlined_call_operand.vmem [shape: f32[1,32], index: 4, kind: input, shape index: {}, may-alias: {4,6}]
  %s5 = inlined_call_operand.vmem [shape: f32[1,32], index: 5, kind: input, shape index: {}]
  %s6 = inlined_call_operand.vmem [shape: f32[1,32], index: 6, kind: input, shape index: {}, may-alias: {4,6}]
  %s7 = inlined_call_operand.vmem [shape: bf16[16,32], index: 7, kind: output, shape index: {}]
  %s8 = sld [smem:[#allocation0]]
  $region38: #{hunayn_forward.28} parent=0
    _
  %s10 = ssub.s32 1, %s8
  %s11 = scalar_select 0, %s10, %s8
  // Predicated region
  $region2: #{hunayn_forward.28} parent=0 // pred_check
    _
  $region3: #{hunayn_forward.28} parent=0 // pred_check_branch
    %13 = sbr.rel (0) target = $region5
  $region4: #{hunayn_forward.28} parent=0 // pred_region
    _
  $region5: #{hunayn_forward.28} parent=0 // pred_fallthru
    _
  // Predicated region
  $region6: #{hunayn_forward.28} parent=0 // pred_check
    _
  $region7: #{hunayn_forward.28} parent=0 // pred_check_branch
    %15 = sbr.rel (0) target = $region9
  $region8: #{hunayn_forward.28} parent=0 // pred_region
    _
  $region9: #{hunayn_forward.28} parent=0 // pred_fallthru
    _
  // Predicated region
  $region10: #{hunayn_forward.28} parent=0 // pred_check
    _
  $region11: #{hunayn_forward.28} parent=0 // pred_check_branch
    %17 = sbr.rel (0) target = $region13
  $region12: #{hunayn_forward.28} parent=0 // pred_region
    _
  $region13: #{hunayn_forward.28} parent=0 // pred_fallthru
    _
  // Predicated region
  $region14: #{hunayn_forward.28} parent=0 // pred_check
    _
  $region15: #{hunayn_forward.28} parent=0 // pred_check_branch
    %19 = sbr.rel (0) target = $region17
  $region16: #{hunayn_forward.28} parent=0 // pred_region
    _
  $region17: #{hunayn_forward.28} parent=0 // pred_fallthru
    _
  // Predicated region
  $region18: #{hunayn_forward.28} parent=0 // pred_check
    _
  $region19: #{hunayn_forward.28} parent=0 // pred_check_branch
    %21 = sbr.rel (0) target = $region21
  $region20: #{hunayn_forward.28} parent=0 // pred_region
    _
  $region21: #{hunayn_forward.28} parent=0 // pred_fallthru
    _
  // Predicated region
  $region22: #{hunayn_forward.28} parent=0 // pred_check
    _
  $region23: #{hunayn_forward.28} parent=0 // pred_check_branch
    %23 = sbr.rel (0) target = $region25
  $region24: #{hunayn_forward.28} parent=0 // pred_region
    _
  $region25: #{hunayn_forward.28} parent=0 // pred_fallthru
    _
  // Predicated region
  $region26: #{hunayn_forward.28} parent=0 // pred_check
    _
  $region27: #{hunayn_forward.28} parent=0 // pred_check_branch
    %25 = sbr.rel (0) target = $region29
  $region28: #{hunayn_forward.28} parent=0 // pred_region
    _
  $region29: #{hunayn_forward.28} parent=0 // pred_fallthru
    _
  %v27 = vld [vmem:[%s0] sm:$0xf]
  %v28 = vld [vmem:[%s0 + $0x4] sm:$0xf]
  %v29 = vld [vmem:[%s1] sm:$0xf]
  %v30 = vld [vmem:[%s1 + $0x4] sm:$0xf]
  %v31 = vld [vmem:[%s1 + $0x8] sm:$0xf]
  %v32 = vld [vmem:[%s1 + $0xc] sm:$0xf]
  %v33 = vld [vmem:[%s2] sm:$0x1]
  %v35 = vlaneseq
  %v36 = vshrl.u32 %v35, 7
  %v37 = vsub.s32 0, %v36
  %v38 = vrot.slane %v33, %v37
  %v42 = vunpack.c.l.b16 %v27
  %v43 = vunpack.c.l.b16 %v28
  %v44 = vpack.c.b16 %v43, %v42
  %v49 = vunpack.c.l.b16 %v29
  %v50 = vunpack.c.l.b16 %v30
  %v51 = vunpack.c.l.b16 %v31
  %v52 = vunpack.c.l.b16 %v32
  %v53 = vpack.c.b16 %v50, %v49
  %v54 = vpack.c.b16 %v52, %v51
  %vm57 = vcmask 261120
  %v59 = vsel %vm57, %v44, 0
  %61 = vmatprep.subr.bf16.mxu0 0
  %62 = vmatpush1.bf16.msra.mxu0 %v53
  %63 = vmatprep.subr.bf16.mxu0 0
  %64 = vmatpush1.bf16.msra.mxu0 %v54
  %65 = vmatprep.subr.bf16.mxu0 0
  %66 = vmatpush1.bf16.msra.mxu0 0
  %67 = vmatprep.subr.bf16.mxu0 0
  %68 = vmatpush1.bf16.msra.mxu0 0
  %69 = vmatprep.subr.bf16.mxu0 0
  %70 = vmatpush1.bf16.msra.mxu0 0
  %71 = vmatprep.subr.bf16.mxu0 0
  %72 = vmatpush1.bf16.msra.mxu0 0
  %73 = vmatprep.subr.bf16.mxu0 0
  %74 = vmatpush1.bf16.msra.mxu0 0
  %75 = vmatprep.subr.bf16.mxu0 0
  %76 = vmatpush1.bf16.msra.mxu0 0
  %77 = vmatprep.subr.bf16.mxu0 0
  %78 = vmatpush1.bf16.msra.mxu0 0
  %79 = vmatprep.subr.bf16.mxu0 0
  %80 = vmatpush1.bf16.msra.mxu0 0
  %81 = vmatprep.subr.bf16.mxu0 0
  %82 = vmatpush1.bf16.msra.mxu0 0
  %83 = vmatprep.subr.bf16.mxu0 0
  %84 = vmatpush1.bf16.msra.mxu0 0
  %85 = vmatprep.subr.bf16.mxu0 0
  %86 = vmatpush1.bf16.msra.mxu0 0
  %87 = vmatprep.subr.bf16.mxu0 0
  %88 = vmatpush1.bf16.msra.mxu0 0
  %89 = vmatprep.subr.bf16.mxu0 0
  %90 = vmatpush1.bf16.msra.mxu0 0
  %91 = vmatprep.subr.bf16.mxu0 0
  %92 = vmatpush1.bf16.msra.mxu0 0
  %93 = vmatprep.mubr.bf16.mxu0 0
  %94 = vmatmul.mubr.bf16.gmra.mrb[0].mxu0 %v59
  %v95 = vpop.f32.mrb[0].mxu0
  %v96 = vadd.f32 %v38, %v95
  %v97 = vpop.f32.mrb[0].mxu0
  %v98 = vpop.f32.mrb[0].mxu0
  %v99 = vadd.f32 %v38, %v98
  %v100 = vpop.f32.mrb[0].mxu0
  %101 = vdwg.mxu0
  %v102 = vmax.f32 %v96, 0.0
  %v103 = vmax.f32 %v99, 0.0
  %v104 = vpack.c.bf16 %v103, %v102
  %v105 = vld [vmem:[%s3] sm:$0xf]
  %v106 = vld [vmem:[%s3 + $0x4] sm:$0xf]
  %v107 = vld [vmem:[%s3 + $0x8] sm:$0xf]
  %v108 = vld [vmem:[%s3 + $0xc] sm:$0xf]
  %v109 = vld [vmem:[%s3 + $0x10] sm:$0xf]
  %v110 = vld [vmem:[%s3 + $0x14] sm:$0xf]
  %v111 = vld [vmem:[%s3 + $0x18] sm:$0xf]
  %v112 = vld [vmem:[%s3 + $0x1c] sm:$0xf]
  %v113 = vld [vmem:[%s4] sm:$0x1]
  %v115 = vlaneseq
  %v116 = vshrl.u32 %v115, 7
  %v117 = vsub.s32 0, %v116
  %v118 = vrot.slane %v113, %v117
  %v128 = vunpack.c.l.b16 %v105
  %v129 = vunpack.c.l.b16 %v106
  %v130 = vunpack.c.l.b16 %v107
  %v131 = vunpack.c.l.b16 %v108
  %v132 = vunpack.c.l.b16 %v109
  %v133 = vunpack.c.l.b16 %v110
  %v134 = vunpack.c.l.b16 %v111
  %v135 = vunpack.c.l.b16 %v112
  %v136 = vpack.c.b16 %v129, %v128
  %v137 = vpack.c.b16 %v131, %v130
  %v138 = vpack.c.b16 %v133, %v132
  %v139 = vpack.c.b16 %v135, %v134
  %vm144 = vcmask 523264
  %v146 = vsel %vm144, %v104, 0
  %148 = vmatprep.subr.bf16.mxu0 0
  %149 = vmatpush1.bf16.msra.mxu0 %v136
  %150 = vmatprep.subr.bf16.mxu0 0
  %151 = vmatpush1.bf16.msra.mxu0 %v137
  %152 = vmatprep.subr.bf16.mxu0 0
  %153 = vmatpush1.bf16.msra.mxu0 %v138
  %154 = vmatprep.subr.bf16.mxu0 0
  %155 = vmatpush1.bf16.msra.mxu0 %v139
  %156 = vmatprep.subr.bf16.mxu0 0
  %157 = vmatpush1.bf16.msra.mxu0 0
  %158 = vmatprep.subr.bf16.mxu0 0
  %159 = vmatpush1.bf16.msra.mxu0 0
  %160 = vmatprep.subr.bf16.mxu0 0
  %161 = vmatpush1.bf16.msra.mxu0 0
  %162 = vmatprep.subr.bf16.mxu0 0
  %163 = vmatpush1.bf16.msra.mxu0 0
  %164 = vmatprep.subr.bf16.mxu0 0
  %165 = vmatpush1.bf16.msra.mxu0 0
  %166 = vmatprep.subr.bf16.mxu0 0
  %167 = vmatpush1.bf16.msra.mxu0 0
  %168 = vmatprep.subr.bf16.mxu0 0
  %169 = vmatpush1.bf16.msra.mxu0 0
  %170 = vmatprep.subr.bf16.mxu0 0
  %171 = vmatpush1.bf16.msra.mxu0 0
  %172 = vmatprep.subr.bf16.mxu0 0
  %173 = vmatpush1.bf16.msra.mxu0 0
  %174 = vmatprep.subr.bf16.mxu0 0
  %175 = vmatpush1.bf16.msra.mxu0 0
  %176 = vmatprep.subr.bf16.mxu0 0
  %177 = vmatpush1.bf16.msra.mxu0 0
  %178 = vmatprep.subr.bf16.mxu0 0
  %179 = vmatpush1.bf16.msra.mxu0 0
  %180 = vmatprep.mubr.bf16.mxu0 0
  %181 = vmatmul.mubr.bf16.gmra.mrb[0].mxu0 %v146
  %v182 = vpop.f32.mrb[0].mxu0
  %v183 = vadd.f32 %v118, %v182
  %v184 = vpop.f32.mrb[0].mxu0
  %v185 = vpop.f32.mrb[0].mxu0
  %v186 = vadd.f32 %v118, %v185
  %v187 = vpop.f32.mrb[0].mxu0
  %188 = vdwg.mxu0
  %v189 = vunpack.c.l.bf16 %v27
  %v190 = vunpack.c.l.bf16 %v28
  %v191 = vadd.f32 %v183, %v189
  %v192 = vadd.f32 %v186, %v190
  %v193 = vld [vmem:[%s5] sm:$0x1]
  %v194 = vld [vmem:[%s6] sm:$0x1]
  %v195 = vsel %vm57, %v191, 0.0
  %196 = vadd.xlane.f32.xlu0 %v195
  %v197 = vpop.xlane.xlu0 %196
  %v198 = vsel %vm57, %v192, 0.0
  %199 = vadd.xlane.f32.xlu0 %v198
  %v200 = vpop.xlane.xlu0 %199
  %v201 = vrcp.pop 32.0
  %v202 = vmul.f32 %v197, %v201
  %v203 = vmul.f32 %v200, %v201
  %v204 = vsub.f32 %v191, %v202
  %v205 = vsub.f32 %v192, %v203
  %v206 = vmul.f32 %v204, %v204
  %v207 = vmul.f32 %v205, %v205
  %v208 = vsel %vm57, %v206, 0.0
  %209 = vadd.xlane.f32.xlu0 %v208
  %v210 = vpop.xlane.xlu0 %209
  %v211 = vsel %vm57, %v207, 0.0
  %212 = vadd.xlane.f32.xlu0 %v211
  %v213 = vpop.xlane.xlu0 %212
  %v214 = vmul.f32 %v210, %v201
  %v215 = vmul.f32 %v213, %v201
  %v216 = vadd.f32 %v214, 1e-05
  %v217 = vadd.f32 %v215, 1e-05
  %v218 = vrsqrt.pop %v216
  %v219 = vrsqrt.pop %v217
  %v220 = vmul.f32 %v204, %v218
  %v221 = vmul.f32 %v205, %v219
  %v223 = vlaneseq
  %v224 = vshrl.u32 %v223, 7
  %v225 = vsub.s32 0, %v224
  %v226 = vrot.slane %v193, %v225
  %v228 = vmul.f32 %v220, %v226
  %v229 = vmul.f32 %v221, %v226
  %v231 = vlaneseq
  %v232 = vshrl.u32 %v231, 7
  %v233 = vsub.s32 0, %v232
  %v234 = vrot.slane %v194, %v233
  %v236 = vadd.f32 %v228, %v234
  %v237 = vadd.f32 %v229, %v234
  %v238 = vpack.c.bf16 %v237, %v236
  %v240 = vunpack.c.l.b16 %v238
  %v241 = vunpack.c.h.b16 %v238
  %v242 = vpack.c.b16 %v240, %v240
  %v243 = vpack.c.b16 %v241, %v241
  %vm246 = vcmask 257024
  %247 = vst.msk [vmem:[%s7] sm:$0xf] %vm246, %v242
  %248 = vst.msk [vmem:[%s7 + $0x4] sm:$0xf] %vm246, %v243
  // Predicated region
  $region30: #{hunayn_forward.28} parent=0 // pred_check
    _
  $region31: #{hunayn_forward.28} parent=0 // pred_check_branch
    %250 = sbr.rel (0) target = $region33
  $region32: #{hunayn_forward.28} parent=0 // pred_region
    _
  $region33: #{hunayn_forward.28} parent=0 // pred_fallthru
    _
  // Predicated region
  $region34: #{hunayn_forward.28} parent=0 // pred_check
    _
  $region35: #{hunayn_forward.28} parent=0 // pred_check_branch
    %252 = sbr.rel (0) target = $region37
  $region36: #{hunayn_forward.28} parent=0 // pred_region
    _
  $region37: #{hunayn_forward.28} parent=0 // pred_fallthru
    _

// kernel: hunayn_forward.38
$region0: #{hunayn_forward.38}
  #allocation0 [shape = 'u32[]', space=smem, size = 0x4, offset = 0x4, fixed_abs, tag = 'smem constant byte address 0x4 - core index']
  #allocation1 [shape = 'u32[144,128]{1,0:T(1,128)}', space=vmem, size = 0x12000, scoped, tag = 'internal scratch']
  %s0 = inlined_call_operand.vmem [shape: bf16[2,8,32], index: 0, kind: input, shape index: {}]
  %s1 = inlined_call_operand.vmem [shape: bf16[2,8,64], index: 1, kind: input, shape index: {}]
  %s2 = inlined_call_operand.vmem [shape: f32[2,1,8], index: 2, kind: input, shape index: {}]
  %s3 = inlined_call_operand.vmem [shape: bf16[2,8,32], index: 3, kind: output, shape index: {}]
  %s4 = sld [smem:[#allocation0]]
  $region45: #{hunayn_forward.38} parent=0
    _
  %s6 = ssub.s32 1, %s4
  %s7 = scalar_select 0, %s6, %s4
  loop: start=0, step=1, limit=4
  $region2: #{hunayn_forward.38} parent=0 // loop_pre_header
    _
  $region3: #{hunayn_forward.38} parent=0 // loop_header
    %s9 = sphi 0, %s13
    %p10 = scmp.ge.s32.totalorder %s9, 4
    %s19 = sphi 0, %s21
    %s22 = sphi 0, %s19
    %s23 = sphi 0, %s22
    %s39 = sphi 0, %s23
    %s45 = sphi 0, %s47
    %s48 = sphi 0, %s45
    %s49 = sphi 0, %s48
    %s65 = sphi 0, %s49
    %s71 = sphi 0, %s73
    %s74 = sphi 0, %s71
    %s75 = sphi 0, %s74
    %s91 = sphi 0, %s75
    %s97 = sphi 0, %s99
    %s100 = sphi 0, %s97
    %s101 = sphi 0, %s100
    %s117 = sphi 0, %s101
  $region4: #{hunayn_forward.38} parent=0 // loop_header_branch
    %12 = sbr.rel (%p10) target = $region8
  $region5: #{hunayn_forward.38} parent=0 // loop_body
    %s14 = ssub.s32 %s9, 1
    %s15 = ssub.s32 %s9, 2
    %s16 = sadd.s32 %s9, 1
    %s17 = ssub.s32 %s9, %s16
    %p18 = scmp.eq.s32.totalorder %s17, 0
    %s20 = sadd.s32 %s19, 1
    %s21 = scalar_select %p18, %s19, %s20
    %p24 = pneg %p18
    %p25 = scmp.eq.s32.totalorder %s9, 1
    %p26 = por %p24, %p25
    %p27 = scmp.ne.s32.totalorder %s19, %s22
    %p28 = scmp.eq.s32.totalorder %s9, 0
    %p29 = por %p27, %p28
    %p30 = scmp.ne.s32.totalorder %s19, %s22
    %p31 = scmp.eq.s32.totalorder %s14, 1
    %p32 = por %p30, %p31
    %p33 = scmp.ne.s32.totalorder %s22, %s23
    %p34 = scmp.eq.s32.totalorder %s14, 0
    %p35 = por %p33, %p34
    %p36 = scmp.ne.s32.totalorder %s22, %s23
    %p37 = scmp.eq.s32.totalorder %s15, 1
    %p38 = por %p36, %p37
    %p40 = scmp.ne.s32.totalorder %s23, %s39
    %p41 = scmp.eq.s32.totalorder %s15, 0
    %p42 = por %p40, %p41
    %s43 = ssub.s32 %s9, %s16
    %p44 = scmp.eq.s32.totalorder %s43, 0
    %s46 = sadd.s32 %s45, 1
    %s47 = scalar_select %p44, %s45, %s46
    %p50 = pneg %p44
    %p51 = scmp.eq.s32.totalorder %s9, 1
    %p52 = por %p50, %p51
    %p53 = scmp.ne.s32.totalorder %s45, %s48
    %p54 = scmp.eq.s32.totalorder %s9, 0
    %p55 = por %p53, %p54
    %p56 = scmp.ne.s32.totalorder %s45, %s48
    %p57 = scmp.eq.s32.totalorder %s14, 1
    %p58 = por %p56, %p57
    %p59 = scmp.ne.s32.totalorder %s48, %s49
    %p60 = scmp.eq.s32.totalorder %s14, 0
    %p61 = por %p59, %p60
    %p62 = scmp.ne.s32.totalorder %s48, %s49
    %p63 = scmp.eq.s32.totalorder %s15, 1
    %p64 = por %p62, %p63
    %p66 = scmp.ne.s32.totalorder %s49, %s65
    %p67 = scmp.eq.s32.totalorder %s15, 0
    %p68 = por %p66, %p67
    %s69 = ssub.s32 %s9, %s16
    %p70 = scmp.eq.s32.totalorder %s69, 0
    %s72 = sadd.s32 %s71, 1
    %s73 = scalar_select %p70, %s71, %s72
    %p76 = pneg %p70
    %p77 = scmp.eq.s32.totalorder %s9, 1
    %p78 = por %p76, %p77
    %p79 = scmp.ne.s32.totalorder %s71, %s74
    %p80 = scmp.eq.s32.totalorder %s9, 0
    %p81 = por %p79, %p80
    %p82 = scmp.ne.s32.totalorder %s71, %s74
    %p83 = scmp.eq.s32.totalorder %s14, 1
    %p84 = por %p82, %p83
    %p85 = scmp.ne.s32.totalorder %s74, %s75
    %p86 = scmp.eq.s32.totalorder %s14, 0
    %p87 = por %p85, %p86
    %p88 = scmp.ne.s32.totalorder %s74, %s75
    %p89 = scmp.eq.s32.totalorder %s15, 1
    %p90 = por %p88, %p89
    %p92 = scmp.ne.s32.totalorder %s75, %s91
    %p93 = scmp.eq.s32.totalorder %s15, 0
    %p94 = por %p92, %p93
    %s95 = ssub.s32 %s9, %s16
    %p96 = scmp.eq.s32.totalorder %s95, 0
    %s98 = sadd.s32 %s97, 1
    %s99 = scalar_select %p96, %s97, %s98
    %p102 = pneg %p96
    %p103 = scmp.eq.s32.totalorder %s9, 1
    %p104 = por %p102, %p103
    %p105 = scmp.ne.s32.totalorder %s97, %s100
    %p106 = scmp.eq.s32.totalorder %s9, 0
    %p107 = por %p105, %p106
    %p108 = scmp.ne.s32.totalorder %s97, %s100
    %p109 = scmp.eq.s32.totalorder %s14, 1
    %p110 = por %p108, %p109
    %p111 = scmp.ne.s32.totalorder %s100, %s101
    %p112 = scmp.eq.s32.totalorder %s14, 0
    %p113 = por %p111, %p112
    %p114 = scmp.ne.s32.totalorder %s100, %s101
    %p115 = scmp.eq.s32.totalorder %s15, 1
    %p116 = por %p114, %p115
    %p118 = scmp.ne.s32.totalorder %s101, %s117
    %p119 = scmp.eq.s32.totalorder %s15, 0
    %p120 = por %p118, %p119
    %p121 = scmp.le.s32.totalorder 1, %s9
    %p122 = scmp.lt.s32.totalorder %s9, 3
    %p123 = pnand %p121, %p122
    %p124 = pneg %p123
    // Predicated region
    $region9: #{hunayn_forward.38} parent=5 // pred_check
      _
    $region10: #{hunayn_forward.38} parent=5 // pred_check_branch
      %126 = sbr.rel (%p123) target = $region12
    $region11: #{hunayn_forward.38} parent=5 // pred_region
      %s127 = ssub.s32 %s9, 1
    $region12: #{hunayn_forward.38} parent=5 // pred_fallthru
      _
    %p128 = scmp.lt.s32.totalorder %s9, 2
    // Predicated region
    $region13: #{hunayn_forward.38} parent=5 // pred_check
      %p129 = pneg %p128
    $region14: #{hunayn_forward.38} parent=5 // pred_check_branch
      %131 = sbr.rel (%p129) target = $region16
    $region15: #{hunayn_forward.38} parent=5 // pred_region
      // Predicated region
      $region17: #{hunayn_forward.38} parent=15 // pred_check
        %p132 = pneg %p29
      $region18: #{hunayn_forward.38} parent=15 // pred_check_branch
        %134 = sbr.rel (%p132) target = $region20
      $region19: #{hunayn_forward.38} parent=15 // pred_region
        %p135 = scmp.lt.s32.totalorder %s9, 1
        %s136 = scalar_select %p135, %s9, 1
        %s137 = smul.addr %s136, 4
        %s138 = scalar_lea.vmem %s0, %s137
      $region20: #{hunayn_forward.38} parent=15 // pred_fallthru
        _
      // Predicated region
      $region21: #{hunayn_forward.38} parent=15 // pred_check
        %p139 = pneg %p55
      $region22: #{hunayn_forward.38} parent=15 // pred_check_branch
        %141 = sbr.rel (%p139) target = $region24
      $region23: #{hunayn_forward.38} parent=15 // pred_region
        %p142 = scmp.lt.s32.totalorder %s9, 1
        %s143 = scalar_select %p142, %s9, 1
        %s144 = smul.addr %s143, 4
        %s145 = scalar_lea.vmem %s1, %s144
      $region24: #{hunayn_forward.38} parent=15 // pred_fallthru
        _
      // Predicated region
      $region25: #{hunayn_forward.38} parent=15 // pred_check
        %p146 = pneg %p81
      $region26: #{hunayn_forward.38} parent=15 // pred_check_branch
        %148 = sbr.rel (%p146) target = $region28
      $region27: #{hunayn_forward.38} parent=15 // pred_region
        %p149 = scmp.lt.s32.totalorder %s9, 1
        %s150 = scalar_select %p149, %s9, 1
        %s151 = scalar_lea.vmem %s2, %s150
      $region28: #{hunayn_forward.38} parent=15 // pred_fallthru
        _
    $region16: #{hunayn_forward.38} parent=5 // pred_fallthru
      _
    %p152 = scmp.le.s32.totalorder 1, %s9
    %p153 = scmp.lt.s32.totalorder %s9, 3
    %p154 = pnand %p152, %p153
    %p155 = pneg %p154
    // Predicated region
    $region29: #{hunayn_forward.38} parent=5 // pred_check
      _
    $region30: #{hunayn_forward.38} parent=5 // pred_check_branch
      %157 = sbr.rel (%p154) target = $region32
    $region31: #{hunayn_forward.38} parent=5 // pred_region
      %s158 = ssub.s32 %s9, 1
      %p159 = scmp.lt.s32.totalorder %s14, 1
      %s160 = scalar_select %p159, %s14, 1
      %s161 = smul.addr %s160, 4
      %s162 = scalar_lea.vmem %s0, %s161
      %p163 = pneg %p35
      %p164 = pneg %p32
      %p165 = scmp.lt.s32.totalorder %s14, 1
      %s166 = scalar_select %p165, %s14, 1
      %s167 = smul.addr %s166, 4
      %s168 = scalar_lea.vmem %s1, %s167
      %p169 = pneg %p61
      %p170 = pneg %p58
      %p171 = scmp.lt.s32.totalorder %s14, 1
      %s172 = scalar_select %p171, %s14, 1
      %s173 = scalar_lea.vmem %s2, %s172
      %p174 = pneg %p87
      %p175 = pneg %p84
      %p176 = pneg %p113
      %p177 = pneg %p110
      %p178 = scmp.lt.s32.totalorder %s14, 1
      %s179 = scalar_select %p178, %s14, 1
      %s180 = smul.addr %s179, 4
      %s181 = scalar_lea.vmem %s3, %s180
      %p182 = scmp.lt.s32.totalorder %s14, 1
      %s183 = scalar_select %p182, %s14, 1
      %s184 = smul.addr %s183, 4
      %s185 = scalar_lea.vmem %s0, %s184
      %p186 = scmp.lt.s32.totalorder %s14, 1
      %s187 = scalar_select %p186, %s14, 1
      %s188 = smul.addr %s187, 4
      %s189 = scalar_lea.vmem %s1, %s188
      %p190 = scmp.lt.s32.totalorder %s14, 1
      %s191 = scalar_select %p190, %s14, 1
      %s192 = scalar_lea.vmem %s2, %s191
      %p193 = scmp.lt.s32.totalorder %s14, 1
      %s194 = scalar_select %p193, %s14, 1
      %s195 = smul.addr %s194, 4
      %s196 = scalar_lea.vmem %s3, %s195
      %v198 = vld [vmem:[%s185] sm:$0xf]
      %v199 = vld [vmem:[%s189] sm:$0xf]
      %v200 = vld [vmem:[%s192] sm:$0x1]
      %vm201 = vcmask 64512
      %v203 = vsel %vm201, %v198, 0
      %v206 = vsel %vm201, %v199, 0
      %208 = vmatprep.subr.bf16.mxu0 0
      %209 = vmatpush1.bf16.xpose.msra.mxu0 %v206
      %210 = vmatprep.subr.bf16.mxu0 0
      %211 = vmatpush1.bf16.xpose.msra.mxu0 0
      %212 = vmatprep.subr.bf16.mxu0 0
      %213 = vmatpush1.bf16.xpose.msra.mxu0 0
      %214 = vmatprep.subr.bf16.mxu0 0
      %215 = vmatpush1.bf16.xpose.msra.mxu0 0
      %216 = vmatprep.subr.bf16.mxu0 0
      %217 = vmatpush1.bf16.xpose.msra.mxu0 0
      %218 = vmatprep.subr.bf16.mxu0 0
      %219 = vmatpush1.bf16.xpose.msra.mxu0 0
      %220 = vmatprep.subr.bf16.mxu0 0
      %221 = vmatpush1.bf16.xpose.msra.mxu0 0
      %222 = vmatprep.subr.bf16.mxu0 0
      %223 = vmatpush1.bf16.xpose.msra.mxu0 0
      %224 = vmatprep.subr.bf16.mxu0 0
      %225 = vmatpush1.bf16.xpose.msra.mxu0 0
      %226 = vmatprep.subr.bf16.mxu0 0
      %227 = vmatpush1.bf16.xpose.msra.mxu0 0
      %228 = vmatprep.subr.bf16.mxu0 0
      %229 = vmatpush1.bf16.xpose.msra.mxu0 0
      %230 = vmatprep.subr.bf16.mxu0 0
      %231 = vmatpush1.bf16.xpose.msra.mxu0 0
      %232 = vmatprep.subr.bf16.mxu0 0
      %233 = vmatpush1.bf16.xpose.msra.mxu0 0
      %234 = vmatprep.subr.bf16.mxu0 0
      %235 = vmatpush1.bf16.xpose.msra.mxu0 0
      %236 = vmatprep.subr.bf16.mxu0 0
      %237 = vmatpush1.bf16.xpose.msra.mxu0 0
      %238 = vmatprep.subr.bf16.mxu0 0
      %239 = vmatpush1.bf16.xpose.msra.mxu0 0
      %240 = vmatprep.mubr.bf16.mxu0 0
      %241 = vmatmul.mubr.bf16.gmra.mrb[0].mxu0 %v203
      %v242 = vpop.f32.mrb[0].mxu0
      %v243 = vadd.f32 0.0, %v242
      %v244 = vpop.f32.mrb[0].mxu0
      %v245 = vpop.f32.mrb[0].mxu0
      %v246 = vpop.f32.mrb[0].mxu0
      %247 = vdwg.mxu0
      %v248 = vmul.f32 %v243, 0.35355338
      %v250 = vlaneseq
      %v251 = vshrl.u32 %v250, 7
      %v252 = vsub.s32 0, %v251
      %v253 = vrot.slane %v200, %v252
      %v255 = vadd.f32 %v248, %v253
      %v256 = vsel %vm201, %v255, -inf
      %257 = vmax.xlane.f32.xlu0 %v256
      %v258 = vpop.xlane.xlu0 %257
      %v259 = vsub.f32 %v255, %v258
      %v260 = vmul.f32 %v259, 1.442695
      %v261 = vpow.pop %v260
      %v262 = vsel %vm201, %v261, 0.0
      %263 = vadd.xlane.f32.xlu0 %v262
      %v264 = vpop.xlane.xlu0 %263
      %v265 = vrcp.pop %v264
      %v266 = vmul.f32 %v261, %v265
      %v267 = vpack.c.bf16 %v266, %v266
      %v269 = vunpack.c.l.b16 %v199
      %v270 = vpack.c.b16 %v269, %v269
      %271 = vrot.lane.b32.xlu0 %v270, 96
      %v272 = vpop.permute.xlu0 %271
      %v274 = vsel %vm201, %v267, 0
      %vm276 = vcmask 1043456
      %v278 = vsel %vm276, %v272, 0
      %280 = vmatprep.subr.bf16.mxu0 0
      %281 = vmatpush1.bf16.msra.mxu0 %v278
      %282 = vmatprep.subr.bf16.mxu0 0
      %283 = vmatpush1.bf16.msra.mxu0 0
      %284 = vmatprep.subr.bf16.mxu0 0
      %285 = vmatpush1.bf16.msra.mxu0 0
      %286 = vmatprep.subr.bf16.mxu0 0
      %287 = vmatpush1.bf16.msra.mxu0 0
      %288 = vmatprep.subr.bf16.mxu0 0
      %289 = vmatpush1.bf16.msra.mxu0 0
      %290 = vmatprep.subr.bf16.mxu0 0
      %291 = vmatpush1.bf16.msra.mxu0 0
      %292 = vmatprep.subr.bf16.mxu0 0
      %293 = vmatpush1.bf16.msra.mxu0 0
      %294 = vmatprep.subr.bf16.mxu0 0
      %295 = vmatpush1.bf16.msra.mxu0 0
      %296 = vmatprep.subr.bf16.mxu0 0
      %297 = vmatpush1.bf16.msra.mxu0 0
      %298 = vmatprep.subr.bf16.mxu0 0
      %299 = vmatpush1.bf16.msra.mxu0 0
      %300 = vmatprep.subr.bf16.mxu0 0
      %301 = vmatpush1.bf16.msra.mxu0 0
      %302 = vmatprep.subr.bf16.mxu0 0
      %303 = vmatpush1.bf16.msra.mxu0 0
      %304 = vmatprep.subr.bf16.mxu0 0
      %305 = vmatpush1.bf16.msra.mxu0 0
      %306 = vmatprep.subr.bf16.mxu0 0
      %307 = vmatpush1.bf16.msra.mxu0 0
      %308 = vmatprep.subr.bf16.mxu0 0
      %309 = vmatpush1.bf16.msra.mxu0 0
      %310 = vmatprep.subr.bf16.mxu0 0
      %311 = vmatpush1.bf16.msra.mxu0 0
      %312 = vmatprep.mubr.bf16.mxu0 0
      %313 = vmatmul.mubr.bf16.gmra.mrb[0].mxu0 %v274
      %v314 = vpop.f32.mrb[0].mxu0
      %v315 = vadd.f32 0.0, %v314
      %v316 = vpop.f32.mrb[0].mxu0
      %v317 = vpop.f32.mrb[0].mxu0
      %v318 = vpop.f32.mrb[0].mxu0
      %319 = vdwg.mxu0
      %v321 = vunpack.c.l.b16 %v198
      %v322 = vpack.c.b16 %v321, %v321
      %323 = vrot.lane.b32.xlu0 %v322, 120
      %v324 = vpop.permute.xlu0 %323
      %325 = vrot.lane.b32.xlu0 %v270, 120
      %v326 = vpop.permute.xlu0 %325
      %v328 = vsel %vm201, %v324, 0
      %v331 = vsel %vm201, %v326, 0
      %333 = vmatprep.subr.bf16.mxu0 0
      %334 = vmatpush1.bf16.xpose.msra.mxu0 %v331
      %335 = vmatprep.subr.bf16.mxu0 0
      %336 = vmatpush1.bf16.xpose.msra.mxu0 0
      %337 = vmatprep.subr.bf16.mxu0 0
      %338 = vmatpush1.bf16.xpose.msra.mxu0 0
      %339 = vmatprep.subr.bf16.mxu0 0
      %340 = vmatpush1.bf16.xpose.msra.mxu0 0
      %341 = vmatprep.subr.bf16.mxu0 0
      %342 = vmatpush1.bf16.xpose.msra.mxu0 0
      %343 = vmatprep.subr.bf16.mxu0 0
      %344 = vmatpush1.bf16.xpose.msra.mxu0 0
      %345 = vmatprep.subr.bf16.mxu0 0
      %346 = vmatpush1.bf16.xpose.msra.mxu0 0
      %347 = vmatprep.subr.bf16.mxu0 0
      %348 = vmatpush1.bf16.xpose.msra.mxu0 0
      %349 = vmatprep.subr.bf16.mxu0 0
      %350 = vmatpush1.bf16.xpose.msra.mxu0 0
      %351 = vmatprep.subr.bf16.mxu0 0
      %352 = vmatpush1.bf16.xpose.msra.mxu0 0
      %353 = vmatprep.subr.bf16.mxu0 0
      %354 = vmatpush1.bf16.xpose.msra.mxu0 0
      %355 = vmatprep.subr.bf16.mxu0 0
      %356 = vmatpush1.bf16.xpose.msra.mxu0 0
      %357 = vmatprep.subr.bf16.mxu0 0
      %358 = vmatpush1.bf16.xpose.msra.mxu0 0
      %359 = vmatprep.subr.bf16.mxu0 0
      %360 = vmatpush1.bf16.xpose.msra.mxu0 0
      %361 = vmatprep.subr.bf16.mxu0 0
      %362 = vmatpush1.bf16.xpose.msra.mxu0 0
      %363 = vmatprep.subr.bf16.mxu0 0
      %364 = vmatpush1.bf16.xpose.msra.mxu0 0
      %365 = vmatprep.mubr.bf16.mxu0 0
      %366 = vmatmul.mubr.bf16.gmra.mrb[0].mxu0 %v328
      %v367 = vpop.f32.mrb[0].mxu0
      %v368 = vadd.f32 0.0, %v367
      %v369 = vpop.f32.mrb[0].mxu0
      %v370 = vpop.f32.mrb[0].mxu0
      %v371 = vpop.f32.mrb[0].mxu0
      %372 = vdwg.mxu0
      %v373 = vmul.f32 %v368, 0.35355338
      %v374 = vadd.f32 %v373, %v253
      %v375 = vsel %vm201, %v374, -inf
      %376 = vmax.xlane.f32.xlu0 %v375
      %v377 = vpop.xlane.xlu0 %376
      %v378 = vsub.f32 %v374, %v377
      %v379 = vmul.f32 %v378, 1.442695
      %v380 = vpow.pop %v379
      %v381 = vsel %vm201, %v380, 0.0
      %382 = vadd.xlane.f32.xlu0 %v381
      %v383 = vpop.xlane.xlu0 %382
      %v384 = vrcp.pop %v383
      %v385 = vmul.f32 %v380, %v384
      %v386 = vpack.c.bf16 %v385, %v385
      %387 = vrot.lane.b32.xlu0 %v270, 88
      %v388 = vpop.permute.xlu0 %387
      %v390 = vsel %vm201, %v386, 0
      %v393 = vsel %vm276, %v388, 0
      %395 = vmatprep.subr.bf16.mxu0 0
      %396 = vmatpush1.bf16.msra.mxu0 %v393
      %397 = vmatprep.subr.bf16.mxu0 0
      %398 = vmatpush1.bf16.msra.mxu0 0
      %399 = vmatprep.subr.bf16.mxu0 0
      %400 = vmatpush1.bf16.msra.mxu0 0
      %401 = vmatprep.subr.bf16.mxu0 0
      %402 = vmatpush1.bf16.msra.mxu0 0
      %403 = vmatprep.subr.bf16.mxu0 0
      %404 = vmatpush1.bf16.msra.mxu0 0
      %405 = vmatprep.subr.bf16.mxu0 0
      %406 = vmatpush1.bf16.msra.mxu0 0
      %407 = vmatprep.subr.bf16.mxu0 0
      %408 = vmatpush1.bf16.msra.mxu0 0
      %409 = vmatprep.subr.bf16.mxu0 0
      %410 = vmatpush1.bf16.msra.mxu0 0
      %411 = vmatprep.subr.bf16.mxu0 0
      %412 = vmatpush1.bf16.msra.mxu0 0
      %413 = vmatprep.subr.bf16.mxu0 0
      %414 = vmatpush1.bf16.msra.mxu0 0
      %415 = vmatprep.subr.bf16.mxu0 0
      %416 = vmatpush1.bf16.msra.mxu0 0
      %417 = vmatprep.subr.bf16.mxu0 0
      %418 = vmatpush1.bf16.msra.mxu0 0
      %419 = vmatprep.subr.bf16.mxu0 0
      %420 = vmatpush1.bf16.msra.mxu0 0
      %421 = vmatprep.subr.bf16.mxu0 0
      %422 = vmatpush1.bf16.msra.mxu0 0
      %423 = vmatprep.subr.bf16.mxu0 0
      %424 = vmatpush1.bf16.msra.mxu0 0
      %425 = vmatprep.subr.bf16.mxu0 0
      %426 = vmatpush1.bf16.msra.mxu0 0
      %427 = vmatprep.mubr.bf16.mxu0 0
      %428 = vmatmul.mubr.bf16.gmra.mrb[0].mxu0 %v390
      %v429 = vpop.f32.mrb[0].mxu0
      %v430 = vadd.f32 0.0, %v429
      %v431 = vpop.f32.mrb[0].mxu0
      %v432 = vpop.f32.mrb[0].mxu0
      %v433 = vpop.f32.mrb[0].mxu0
      %434 = vdwg.mxu0
      %435 = vrot.lane.b32.xlu0 %v322, 112
      %v436 = vpop.permute.xlu0 %435
      %437 = vrot.lane.b32.xlu0 %v270, 112
      %v438 = vpop.permute.xlu0 %437
      %v440 = vsel %vm201, %v436, 0
      %v443 = vsel %vm201, %v438, 0
      %445 = vmatprep.subr.bf16.mxu0 0
      %446 = vmatpush1.bf16.xpose.msra.mxu0 %v443
      %447 = vmatprep.subr.bf16.mxu0 0
      %448 = vmatpush1.bf16.xpose.msra.mxu0 0
      %449 = vmatprep.subr.bf16.mxu0 0
      %450 = vmatpush1.bf16.xpose.msra.mxu0 0
      %451 = vmatprep.subr.bf16.mxu0 0
      %452 = vmatpush1.bf16.xpose.msra.mxu0 0
      %453 = vmatprep.subr.bf16.mxu0 0
      %454 = vmatpush1.bf16.xpose.msra.mxu0 0
      %455 = vmatprep.subr.bf16.mxu0 0
      %456 = vmatpush1.bf16.xpose.msra.mxu0 0
      %457 = vmatprep.subr.bf16.mxu0 0
      %458 = vmatpush1.bf16.xpose.msra.mxu0 0
      %459 = vmatprep.subr.bf16.mxu0 0
      %460 = vmatpush1.bf16.xpose.msra.mxu0 0
      %461 = vmatprep.subr.bf16.mxu0 0
      %462 = vmatpush1.bf16.xpose.msra.mxu0 0
      %463 = vmatprep.subr.bf16.mxu0 0
      %464 = vmatpush1.bf16.xpose.msra.mxu0 0
      %465 = vmatprep.subr.bf16.mxu0 0
      %466 = vmatpush1.bf16.xpose.msra.mxu0 0
      %467 = vmatprep.subr.bf16.mxu0 0
      %468 = vmatpush1.bf16.xpose.msra.mxu0 0
      %469 = vmatprep.subr.bf16.mxu0 0
      %470 = vmatpush1.bf16.xpose.msra.mxu0 0
      %471 = vmatprep.subr.bf16.mxu0 0
      %472 = vmatpush1.bf16.xpose.msra.mxu0 0
      %473 = vmatprep.subr.bf16.mxu0 0
      %474 = vmatpush1.bf16.xpose.msra.mxu0 0
      %475 = vmatprep.subr.bf16.mxu0 0
      %476 = vmatpush1.bf16.xpose.msra.mxu0 0
      %477 = vmatprep.mubr.bf16.mxu0 0
      %478 = vmatmul.mubr.bf16.gmra.mrb[0].mxu0 %v440
      %v479 = vpop.f32.mrb[0].mxu0
      %v480 = vadd.f32 0.0, %v479
      %v481 = vpop.f32.mrb[0].mxu0
      %v482 = vpop.f32.mrb[0].mxu0
      %v483 = vpop.f32.mrb[0].mxu0
      %484 = vdwg.mxu0
      %v485 = vmul.f32 %v480, 0.35355338
      %v486 = vadd.f32 %v485, %v253
      %v487 = vsel %vm201, %v486, -inf
      %488 = vmax.xlane.f32.xlu0 %v487
      %v489 = vpop.xlane.xlu0 %488
      %v490 = vsub.f32 %v486, %v489
      %v491 = vmul.f32 %v490, 1.442695
      %v492 = vpow.pop %v491
      %v493 = vsel %vm201, %v492, 0.0
      %494 = vadd.xlane.f32.xlu0 %v493
      %v495 = vpop.xlane.xlu0 %494
      %v496 = vrcp.pop %v495
      %v497 = vmul.f32 %v492, %v496
      %v498 = vpack.c.bf16 %v497, %v497
      %499 = vrot.lane.b32.xlu0 %v270, 80
      %v500 = vpop.permute.xlu0 %499
      %v502 = vsel %vm201, %v498, 0
      %v505 = vsel %vm276, %v500, 0
      %507 = vmatprep.subr.bf16.mxu0 0
      %508 = vmatpush1.bf16.msra.mxu0 %v505
      %509 = vmatprep.subr.bf16.mxu0 0
      %510 = vmatpush1.bf16.msra.mxu0 0
      %511 = vmatprep.subr.bf16.mxu0 0
      %512 = vmatpush1.bf16.msra.mxu0 0
      %513 = vmatprep.subr.bf16.mxu0 0
      %514 = vmatpush1.bf16.msra.mxu0 0
      %515 = vmatprep.subr.bf16.mxu0 0
      %516 = vmatpush1.bf16.msra.mxu0 0
      %517 = vmatprep.subr.bf16.mxu0 0
      %518 = vmatpush1.bf16.msra.mxu0 0
      %519 = vmatprep.subr.bf16.mxu0 0
      %520 = vmatpush1.bf16.msra.mxu0 0
      %521 = vmatprep.subr.bf16.mxu0 0
      %522 = vmatpush1.bf16.msra.mxu0 0
      %523 = vmatprep.subr.bf16.mxu0 0
      %524 = vmatpush1.bf16.msra.mxu0 0
      %525 = vmatprep.subr.bf16.mxu0 0
      %526 = vmatpush1.bf16.msra.mxu0 0
      %527 = vmatprep.subr.bf16.mxu0 0
      %528 = vmatpush1.bf16.msra.mxu0 0
      %529 = vmatprep.subr.bf16.mxu0 0
      %530 = vmatpush1.bf16.msra.mxu0 0
      %531 = vmatprep.subr.bf16.mxu0 0
      %532 = vmatpush1.bf16.msra.mxu0 0
      %533 = vmatprep.subr.bf16.mxu0 0
      %534 = vmatpush1.bf16.msra.mxu0 0
      %535 = vmatprep.subr.bf16.mxu0 0
      %536 = vmatpush1.bf16.msra.mxu0 0
      %537 = vmatprep.subr.bf16.mxu0 0
      %538 = vmatpush1.bf16.msra.mxu0 0
      %539 = vmatprep.mubr.bf16.mxu0 0
      %540 = vmatmul.mubr.bf16.gmra.mrb[0].mxu0 %v502
      %v541 = vpop.f32.mrb[0].mxu0
      %v542 = vadd.f32 0.0, %v541
      %v543 = vpop.f32.mrb[0].mxu0
      %v544 = vpop.f32.mrb[0].mxu0
      %v545 = vpop.f32.mrb[0].mxu0
      %546 = vdwg.mxu0
      %547 = vrot.lane.b32.xlu0 %v322, 104
      %v548 = vpop.permute.xlu0 %547
      %549 = vrot.lane.b32.xlu0 %v270, 104
      %v550 = vpop.permute.xlu0 %549
      %v552 = vsel %vm201, %v548, 0
      %v555 = vsel %vm201, %v550, 0
      %557 = vmatprep.subr.bf16.mxu0 0
      %558 = vmatpush1.bf16.xpose.msra.mxu0 %v555
      %559 = vmatprep.subr.bf16.mxu0 0
      %560 = vmatpush1.bf16.xpose.msra.mxu0 0
      %561 = vmatprep.subr.bf16.mxu0 0
      %562 = vmatpush1.bf16.xpose.msra.mxu0 0
      %563 = vmatprep.subr.bf16.mxu0 0
      %564 = vmatpush1.bf16.xpose.msra.mxu0 0
      %565 = vmatprep.subr.bf16.mxu0 0
      %566 = vmatpush1.bf16.xpose.msra.mxu0 0
      %567 = vmatprep.subr.bf16.mxu0 0
      %568 = vmatpush1.bf16.xpose.msra.mxu0 0
      %569 = vmatprep.subr.bf16.mxu0 0
      %570 = vmatpush1.bf16.xpose.msra.mxu0 0
      %571 = vmatprep.subr.bf16.mxu0 0
      %572 = vmatpush1.bf16.xpose.msra.mxu0 0
      %573 = vmatprep.subr.bf16.mxu0 0
      %574 = vmatpush1.bf16.xpose.msra.mxu0 0
      %575 = vmatprep.subr.bf16.mxu0 0
      %576 = vmatpush1.bf16.xpose.msra.mxu0 0
      %577 = vmatprep.subr.bf16.mxu0 0
      %578 = vmatpush1.bf16.xpose.msra.mxu0 0
      %579 = vmatprep.subr.bf16.mxu0 0
      %580 = vmatpush1.bf16.xpose.msra.mxu0 0
      %581 = vmatprep.subr.bf16.mxu0 0
      %582 = vmatpush1.bf16.xpose.msra.mxu0 0
      %583 = vmatprep.subr.bf16.mxu0 0
      %584 = vmatpush1.bf16.xpose.msra.mxu0 0
      %585 = vmatprep.subr.bf16.mxu0 0
      %586 = vmatpush1.bf16.xpose.msra.mxu0 0
      %587 = vmatprep.subr.bf16.mxu0 0
      %588 = vmatpush1.bf16.xpose.msra.mxu0 0
      %589 = vmatprep.mubr.bf16.mxu0 0
      %590 = vmatmul.mubr.bf16.gmra.mrb[0].mxu0 %v552
      %v591 = vpop.f32.mrb[0].mxu0
      %v592 = vadd.f32 0.0, %v591
      %v593 = vpop.f32.mrb[0].mxu0
      %v594 = vpop.f32.mrb[0].mxu0
      %v595 = vpop.f32.mrb[0].mxu0
      %596 = vdwg.mxu0
      %v597 = vmul.f32 %v592, 0.35355338
      %v598 = vadd.f32 %v597, %v253
      %v599 = vsel %vm201, %v598, -inf
      %600 = vmax.xlane.f32.xlu0 %v599
      %v601 = vpop.xlane.xlu0 %600
      %v602 = vsub.f32 %v598, %v601
      %v603 = vmul.f32 %v602, 1.442695
      %v604 = vpow.pop %v603
      %v605 = vsel %vm201, %v604, 0.0
      %606 = vadd.xlane.f32.xlu0 %v605
      %v607 = vpop.xlane.xlu0 %606
      %v608 = vrcp.pop %v607
      %v609 = vmul.f32 %v604, %v608
      %v610 = vpack.c.bf16 %v609, %v609
      %611 = vrot.lane.b32.xlu0 %v270, 72
      %v612 = vpop.permute.xlu0 %611
      %v614 = vsel %vm201, %v610, 0
      %v617 = vsel %vm276, %v612, 0
      %619 = vmatprep.subr.bf16.mxu0 0
      %620 = vmatpush1.bf16.msra.mxu0 %v617
      %621 = vmatprep.subr.bf16.mxu0 0
      %622 = vmatpush1.bf16.msra.mxu0 0
      %623 = vmatprep.subr.bf16.mxu0 0
      %624 = vmatpush1.bf16.msra.mxu0 0
      %625 = vmatprep.subr.bf16.mxu0 0
      %626 = vmatpush1.bf16.msra.mxu0 0
      %627 = vmatprep.subr.bf16.mxu0 0
      %628 = vmatpush1.bf16.msra.mxu0 0
      %629 = vmatprep.subr.bf16.mxu0 0
      %630 = vmatpush1.bf16.msra.mxu0 0
      %631 = vmatprep.subr.bf16.mxu0 0
      %632 = vmatpush1.bf16.msra.mxu0 0
      %633 = vmatprep.subr.bf16.mxu0 0
      %634 = vmatpush1.bf16.msra.mxu0 0
      %635 = vmatprep.subr.bf16.mxu0 0
      %636 = vmatpush1.bf16.msra.mxu0 0
      %637 = vmatprep.subr.bf16.mxu0 0
      %638 = vmatpush1.bf16.msra.mxu0 0
      %639 = vmatprep.subr.bf16.mxu0 0
      %640 = vmatpush1.bf16.msra.mxu0 0
      %641 = vmatprep.subr.bf16.mxu0 0
      %642 = vmatpush1.bf16.msra.mxu0 0
      %643 = vmatprep.subr.bf16.mxu0 0
      %644 = vmatpush1.bf16.msra.mxu0 0
      %645 = vmatprep.subr.bf16.mxu0 0
      %646 = vmatpush1.bf16.msra.mxu0 0
      %647 = vmatprep.subr.bf16.mxu0 0
      %648 = vmatpush1.bf16.msra.mxu0 0
      %649 = vmatprep.subr.bf16.mxu0 0
      %650 = vmatpush1.bf16.msra.mxu0 0
      %651 = vmatprep.mubr.bf16.mxu0 0
      %652 = vmatmul.mubr.bf16.gmra.mrb[0].mxu0 %v614
      %v653 = vpop.f32.mrb[0].mxu0
      %v654 = vadd.f32 0.0, %v653
      %v655 = vpop.f32.mrb[0].mxu0
      %v656 = vpop.f32.mrb[0].mxu0
      %v657 = vpop.f32.mrb[0].mxu0
      %658 = vdwg.mxu0
      %660 = vrot.lane.b32.xlu0 %v430, 8
      %v661 = vpop.permute.xlu0 %660
      %664 = vrot.lane.b32.xlu0 %v542, 16
      %v665 = vpop.permute.xlu0 %664
      %668 = vrot.lane.b32.xlu0 %v654, 24
      %v669 = vpop.permute.xlu0 %668
      %v671 = vsel %vm201, %v315, %v661
      %vm672 = vcmask 130048
      %v673 = vsel %vm672, %v671, %v665
      %vm674 = vcmask 195584
      %v675 = vsel %vm674, %v673, %v669
      %v676 = vpack.c.bf16 %v675, %v675
      %vm677 = vcmask 257024
      %678 = vst.msk [vmem:[%s196] sm:$0xf] %vm677, %v676
      %p679 = scmp.lt.s32.totalorder %s14, 1
      %s680 = scalar_select %p679, %s14, 1
      %s681 = smul.addr %s680, 4
      %s682 = scalar_lea.vmem %s3, %s681
      // Predicated region
      $region33: #{hunayn_forward.38} parent=31 // pred_check
        %p683 = pneg %p110
      $region34: #{hunayn_forward.38} parent=31 // pred_check_branch
        %685 = sbr.rel (%p683) target = $region36
      $region35: #{hunayn_forward.38} parent=31 // pred_region
        _
      $region36: #{hunayn_forward.38} parent=31 // pred_fallthru
        _
    $region32: #{hunayn_forward.38} parent=5 // pred_fallthru
      _
    %p686 = scmp.le.s32.totalorder 2, %s9
    // Predicated region
    $region37: #{hunayn_forward.38} parent=5 // pred_check
      %p687 = pneg %p686
    $region38: #{hunayn_forward.38} parent=5 // pred_check_branch
      %689 = sbr.rel (%p687) target = $region40
    $region39: #{hunayn_forward.38} parent=5 // pred_region
      %s690 = ssub.s32 %s9, 2
      // Predicated region
      $region41: #{hunayn_forward.38} parent=39 // pred_check
        %p691 = pneg %p116
      $region42: #{hunayn_forward.38} parent=39 // pred_check_branch
        %693 = sbr.rel (%p691) target = $region44
      $region43: #{hunayn_forward.38} parent=39 // pred_region
        %p694 = scmp.lt.s32.totalorder %s15, 1
        %s695 = scalar_select %p694, %s15, 1
        %s696 = smul.addr %s695, 4
        %s697 = scalar_lea.vmem %s3, %s696
      $region44: #{hunayn_forward.38} parent=39 // pred_fallthru
        _
    $region40: #{hunayn_forward.38} parent=5 // pred_fallthru
      _
  $region6: #{hunayn_forward.38} parent=0 // loop_footer
    %s13 = sadd.s32 1, %s9
  $region7: #{hunayn_forward.38} parent=0 // loop_footer_branch
    %8 = sbr.rel target = $region3
  $region8: #{hunayn_forward.38} parent=0 // loop_exit
    _

// kernel: hunayn_forward.34
$region0: #{hunayn_forward.34}
  #allocation0 [shape = 'u32[]', space=smem, size = 0x4, offset = 0x4, fixed_abs, tag = 'smem constant byte address 0x4 - core index']
  #allocation1 [shape = 'u32[144,128]{1,0:T(1,128)}', space=vmem, size = 0x12000, scoped, tag = 'internal scratch']
  %s0 = inlined_call_operand.vmem [shape: bf16[2,8,96], index: 0, kind: input, shape index: {}]
  %s1 = inlined_call_operand.vmem [shape: f32[2,1,8], index: 1, kind: input, shape index: {}]
  %s2 = inlined_call_operand.vmem [shape: bf16[2,8,32], index: 2, kind: output, shape index: {}]
  %s3 = sld [smem:[#allocation0]]
  $region41: #{hunayn_forward.34} parent=0
    _
  %s5 = ssub.s32 1, %s3
  %s6 = scalar_select 0, %s5, %s3
  loop: start=0, step=1, limit=4
  $region2: #{hunayn_forward.34} parent=0 // loop_pre_header
    _
  $region3: #{hunayn_forward.34} parent=0 // loop_header
    %s8 = sphi 0, %s12
    %p9 = scmp.ge.s32.totalorder %s8, 4
    %s18 = sphi 0, %s20
    %s21 = sphi 0, %s18
    %s22 = sphi 0, %s21
    %s38 = sphi 0, %s22
    %s44 = sphi 0, %s46
    %s47 = sphi 0, %s44
    %s48 = sphi 0, %s47
    %s64 = sphi 0, %s48
    %s70 = sphi 0, %s72
    %s73 = sphi 0, %s70
    %s74 = sphi 0, %s73
    %s90 = sphi 0, %s74
  $region4: #{hunayn_forward.34} parent=0 // loop_header_branch
    %11 = sbr.rel (%p9) target = $region8
  $region5: #{hunayn_forward.34} parent=0 // loop_body
    %s13 = ssub.s32 %s8, 1
    %s14 = ssub.s32 %s8, 2
    %s15 = sadd.s32 %s8, 1
    %s16 = ssub.s32 %s8, %s15
    %p17 = scmp.eq.s32.totalorder %s16, 0
    %s19 = sadd.s32 %s18, 1
    %s20 = scalar_select %p17, %s18, %s19
    %p23 = pneg %p17
    %p24 = scmp.eq.s32.totalorder %s8, 1
    %p25 = por %p23, %p24
    %p26 = scmp.ne.s32.totalorder %s18, %s21
    %p27 = scmp.eq.s32.totalorder %s8, 0
    %p28 = por %p26, %p27
    %p29 = scmp.ne.s32.totalorder %s18, %s21
    %p30 = scmp.eq.s32.totalorder %s13, 1
    %p31 = por %p29, %p30
    %p32 = scmp.ne.s32.totalorder %s21, %s22
    %p33 = scmp.eq.s32.totalorder %s13, 0
    %p34 = por %p32, %p33
    %p35 = scmp.ne.s32.totalorder %s21, %s22
    %p36 = scmp.eq.s32.totalorder %s14, 1
    %p37 = por %p35, %p36
    %p39 = scmp.ne.s32.totalorder %s22, %s38
    %p40 = scmp.eq.s32.totalorder %s14, 0
    %p41 = por %p39, %p40
    %s42 = ssub.s32 %s8, %s15
    %p43 = scmp.eq.s32.totalorder %s42, 0
    %s45 = sadd.s32 %s44, 1
    %s46 = scalar_select %p43, %s44, %s45
    %p49 = pneg %p43
    %p50 = scmp.eq.s32.totalorder %s8, 1
    %p51 = por %p49, %p50
    %p52 = scmp.ne.s32.totalorder %s44, %s47
    %p53 = scmp.eq.s32.totalorder %s8, 0
    %p54 = por %p52, %p53
    %p55 = scmp.ne.s32.totalorder %s44, %s47
    %p56 = scmp.eq.s32.totalorder %s13, 1
    %p57 = por %p55, %p56
    %p58 = scmp.ne.s32.totalorder %s47, %s48
    %p59 = scmp.eq.s32.totalorder %s13, 0
    %p60 = por %p58, %p59
    %p61 = scmp.ne.s32.totalorder %s47, %s48
    %p62 = scmp.eq.s32.totalorder %s14, 1
    %p63 = por %p61, %p62
    %p65 = scmp.ne.s32.totalorder %s48, %s64
    %p66 = scmp.eq.s32.totalorder %s14, 0
    %p67 = por %p65, %p66
    %s68 = ssub.s32 %s8, %s15
    %p69 = scmp.eq.s32.totalorder %s68, 0
    %s71 = sadd.s32 %s70, 1
    %s72 = scalar_select %p69, %s70, %s71
    %p75 = pneg %p69
    %p76 = scmp.eq.s32.totalorder %s8, 1
    %p77 = por %p75, %p76
    %p78 = scmp.ne.s32.totalorder %s70, %s73
    %p79 = scmp.eq.s32.totalorder %s8, 0
    %p80 = por %p78, %p79
    %p81 = scmp.ne.s32.totalorder %s70, %s73
    %p82 = scmp.eq.s32.totalorder %s13, 1
    %p83 = por %p81, %p82
    %p84 = scmp.ne.s32.totalorder %s73, %s74
    %p85 = scmp.eq.s32.totalorder %s13, 0
    %p86 = por %p84, %p85
    %p87 = scmp.ne.s32.totalorder %s73, %s74
    %p88 = scmp.eq.s32.totalorder %s14, 1
    %p89 = por %p87, %p88
    %p91 = scmp.ne.s32.totalorder %s74, %s90
    %p92 = scmp.eq.s32.totalorder %s14, 0
    %p93 = por %p91, %p92
    %p94 = scmp.le.s32.totalorder 1, %s8
    %p95 = scmp.lt.s32.totalorder %s8, 3
    %p96 = pnand %p94, %p95
    %p97 = pneg %p96
    // Predicated region
    $region9: #{hunayn_forward.34} parent=5 // pred_check
      _
    $region10: #{hunayn_forward.34} parent=5 // pred_check_branch
      %99 = sbr.rel (%p96) target = $region12
    $region11: #{hunayn_forward.34} parent=5 // pred_region
      %s100 = ssub.s32 %s8, 1
    $region12: #{hunayn_forward.34} parent=5 // pred_fallthru
      _
    %p101 = scmp.lt.s32.totalorder %s8, 2
    // Predicated region
    $region13: #{hunayn_forward.34} parent=5 // pred_check
      %p102 = pneg %p101
    $region14: #{hunayn_forward.34} parent=5 // pred_check_branch
      %104 = sbr.rel (%p102) target = $region16
    $region15: #{hunayn_forward.34} parent=5 // pred_region
      // Predicated region
      $region17: #{hunayn_forward.34} parent=15 // pred_check
        %p105 = pneg %p28
      $region18: #{hunayn_forward.34} parent=15 // pred_check_branch
        %107 = sbr.rel (%p105) target = $region20
      $region19: #{hunayn_forward.34} parent=15 // pred_region
        %p108 = scmp.lt.s32.totalorder %s8, 1
        %s109 = scalar_select %p108, %s8, 1
        %s110 = smul.addr %s109, 4
        %s111 = scalar_lea.vmem %s0, %s110
      $region20: #{hunayn_forward.34} parent=15 // pred_fallthru
        _
      // Predicated region
      $region21: #{hunayn_forward.34} parent=15 // pred_check
        %p112 = pneg %p54
      $region22: #{hunayn_forward.34} parent=15 // pred_check_branch
        %114 = sbr.rel (%p112) target = $region24
      $region23: #{hunayn_forward.34} parent=15 // pred_region
        %p115 = scmp.lt.s32.totalorder %s8, 1
        %s116 = scalar_select %p115, %s8, 1
        %s117 = scalar_lea.vmem %s1, %s116
      $region24: #{hunayn_forward.34} parent=15 // pred_fallthru
        _
    $region16: #{hunayn_forward.34} parent=5 // pred_fallthru
      _
    %p118 = scmp.le.s32.totalorder 1, %s8
    %p119 = scmp.lt.s32.totalorder %s8, 3
    %p120 = pnand %p118, %p119
    %p121 = pneg %p120
    // Predicated region
    $region25: #{hunayn_forward.34} parent=5 // pred_check
      _
    $region26: #{hunayn_forward.34} parent=5 // pred_check_branch
      %123 = sbr.rel (%p120) target = $region28
    $region27: #{hunayn_forward.34} parent=5 // pred_region
      %s124 = ssub.s32 %s8, 1
      %p125 = scmp.lt.s32.totalorder %s13, 1
      %s126 = scalar_select %p125, %s13, 1
      %s127 = smul.addr %s126, 4
      %s128 = scalar_lea.vmem %s0, %s127
      %p129 = pneg %p34
      %p130 = pneg %p31
      %p131 = scmp.lt.s32.totalorder %s13, 1
      %s132 = scalar_select %p131, %s13, 1
      %s133 = scalar_lea.vmem %s1, %s132
      %p134 = pneg %p60
      %p135 = pneg %p57
      %p136 = pneg %p86
      %p137 = pneg %p83
      %p138 = scmp.lt.s32.totalorder %s13, 1
      %s139 = scalar_select %p138, %s13, 1
      %s140 = smul.addr %s139, 4
      %s141 = scalar_lea.vmem %s2, %s140
      %p142 = scmp.lt.s32.totalorder %s13, 1
      %s143 = scalar_select %p142, %s13, 1
      %s144 = smul.addr %s143, 4
      %s145 = scalar_lea.vmem %s0, %s144
      %p146 = scmp.lt.s32.totalorder %s13, 1
      %s147 = scalar_select %p146, %s13, 1
      %s148 = scalar_lea.vmem %s1, %s147
      %p149 = scmp.lt.s32.totalorder %s13, 1
      %s150 = scalar_select %p149, %s13, 1
      %s151 = smul.addr %s150, 4
      %s152 = scalar_lea.vmem %s2, %s151
      %v154 = vld [vmem:[%s145] sm:$0xf]
      %v155 = vld [vmem:[%s148] sm:$0x1]
      %v156 = vlaneseq
      %v157 = vshrl.u32 %v156, 7
      %v158 = vlaneseq
      %v159 = vand.u32 %v158, 127
      %vm160 = vcmp.le.s32.totalorder %v159, %v157
      %v161 = vsel %vm160, 0.0, -1e+09
      %v163 = vlaneseq
      %v164 = vshrl.u32 %v163, 7
      %v165 = vsub.s32 0, %v164
      %v166 = vrot.slane %v155, %v165
      %v168 = vadd.f32 %v166, %v161
      %v170 = vunpack.c.l.b16 %v154
      %v171 = vpack.c.b16 %v170, %v170
      %172 = vrot.lane.b32.xlu0 %v171, 96
      %v173 = vpop.permute.xlu0 %172
      %vm174 = vcmask 64512
      %v176 = vsel %vm174, %v154, 0
      %v179 = vsel %vm174, %v173, 0
      %181 = vmatprep.subr.bf16.mxu0 0
      %182 = vmatpush1.bf16.xpose.msra.mxu0 %v179
      %183 = vmatprep.subr.bf16.mxu0 0
      %184 = vmatpush1.bf16.xpose.msra.mxu0 0
      %185 = vmatprep.subr.bf16.mxu0 0
      %186 = vmatpush1.bf16.xpose.msra.mxu0 0
      %187 = vmatprep.subr.bf16.mxu0 0
      %188 = vmatpush1.bf16.xpose.msra.mxu0 0
      %189 = vmatprep.subr.bf16.mxu0 0
      %190 = vmatpush1.bf16.xpose.msra.mxu0 0
      %191 = vmatprep.subr.bf16.mxu0 0
      %192 = vmatpush1.bf16.xpose.msra.mxu0 0
      %193 = vmatprep.subr.bf16.mxu0 0
      %194 = vmatpush1.bf16.xpose.msra.mxu0 0
      %195 = vmatprep.subr.bf16.mxu0 0
      %196 = vmatpush1.bf16.xpose.msra.mxu0 0
      %197 = vmatprep.subr.bf16.mxu0 0
      %198 = vmatpush1.bf16.xpose.msra.mxu0 0
      %199 = vmatprep.subr.bf16.mxu0 0
      %200 = vmatpush1.bf16.xpose.msra.mxu0 0
      %201 = vmatprep.subr.bf16.mxu0 0
      %202 = vmatpush1.bf16.xpose.msra.mxu0 0
      %203 = vmatprep.subr.bf16.mxu0 0
      %204 = vmatpush1.bf16.xpose.msra.mxu0 0
      %205 = vmatprep.subr.bf16.mxu0 0
      %206 = vmatpush1.bf16.xpose.msra.mxu0 0
      %207 = vmatprep.subr.bf16.mxu0 0
      %208 = vmatpush1.bf16.xpose.msra.mxu0 0
      %209 = vmatprep.subr.bf16.mxu0 0
      %210 = vmatpush1.bf16.xpose.msra.mxu0 0
      %211 = vmatprep.subr.bf16.mxu0 0
      %212 = vmatpush1.bf16.xpose.msra.mxu0 0
      %213 = vmatprep.mubr.bf16.mxu0 0
      %214 = vmatmul.mubr.bf16.gmra.mrb[0].mxu0 %v176
      %v215 = vpop.f32.mrb[0].mxu0
      %v216 = vadd.f32 0.0, %v215
      %v217 = vpop.f32.mrb[0].mxu0
      %v218 = vpop.f32.mrb[0].mxu0
      %v219 = vpop.f32.mrb[0].mxu0
      %220 = vdwg.mxu0
      %v221 = vmul.f32 %v216, 0.35355338
      %v222 = vadd.f32 %v221, %v168
      %v223 = vsel %vm174, %v222, -inf
      %224 = vmax.xlane.f32.xlu0 %v223
      %v225 = vpop.xlane.xlu0 %224
      %v226 = vsub.f32 %v222, %v225
      %v227 = vmul.f32 %v226, 1.442695
      %v228 = vpow.pop %v227
      %v229 = vsel %vm174, %v228, 0.0
      %230 = vadd.xlane.f32.xlu0 %v229
      %v231 = vpop.xlane.xlu0 %230
      %v232 = vrcp.pop %v231
      %v233 = vmul.f32 %v228, %v232
      %v234 = vpack.c.bf16 %v233, %v233
      %235 = vrot.lane.b32.xlu0 %v171, 64
      %v236 = vpop.permute.xlu0 %235
      %v238 = vsel %vm174, %v234, 0
      %vm240 = vcmask 1043456
      %v242 = vsel %vm240, %v236, 0
      %244 = vmatprep.subr.bf16.mxu0 0
      %245 = vmatpush1.bf16.msra.mxu0 %v242
      %246 = vmatprep.subr.bf16.mxu0 0
      %247 = vmatpush1.bf16.msra.mxu0 0
      %248 = vmatprep.subr.bf16.mxu0 0
      %249 = vmatpush1.bf16.msra.mxu0 0
      %250 = vmatprep.subr.bf16.mxu0 0
      %251 = vmatpush1.bf16.msra.mxu0 0
      %252 = vmatprep.subr.bf16.mxu0 0
      %253 = vmatpush1.bf16.msra.mxu0 0
      %254 = vmatprep.subr.bf16.mxu0 0
      %255 = vmatpush1.bf16.msra.mxu0 0
      %256 = vmatprep.subr.bf16.mxu0 0
      %257 = vmatpush1.bf16.msra.mxu0 0
      %258 = vmatprep.subr.bf16.mxu0 0
      %259 = vmatpush1.bf16.msra.mxu0 0
      %260 = vmatprep.subr.bf16.mxu0 0
      %261 = vmatpush1.bf16.msra.mxu0 0
      %262 = vmatprep.subr.bf16.mxu0 0
      %263 = vmatpush1.bf16.msra.mxu0 0
      %264 = vmatprep.subr.bf16.mxu0 0
      %265 = vmatpush1.bf16.msra.mxu0 0
      %266 = vmatprep.subr.bf16.mxu0 0
      %267 = vmatpush1.bf16.msra.mxu0 0
      %268 = vmatprep.subr.bf16.mxu0 0
      %269 = vmatpush1.bf16.msra.mxu0 0
      %270 = vmatprep.subr.bf16.mxu0 0
      %271 = vmatpush1.bf16.msra.mxu0 0
      %272 = vmatprep.subr.bf16.mxu0 0
      %273 = vmatpush1.bf16.msra.mxu0 0
      %274 = vmatprep.subr.bf16.mxu0 0
      %275 = vmatpush1.bf16.msra.mxu0 0
      %276 = vmatprep.mubr.bf16.mxu0 0
      %277 = vmatmul.mubr.bf16.gmra.mrb[0].mxu0 %v238
      %v278 = vpop.f32.mrb[0].mxu0
      %v279 = vadd.f32 0.0, %v278
      %v280 = vpop.f32.mrb[0].mxu0
      %v281 = vpop.f32.mrb[0].mxu0
      %v282 = vpop.f32.mrb[0].mxu0
      %283 = vdwg.mxu0
      %284 = vrot.lane.b32.xlu0 %v171, 120
      %v285 = vpop.permute.xlu0 %284
      %286 = vrot.lane.b32.xlu0 %v171, 88
      %v287 = vpop.permute.xlu0 %286
      %v289 = vsel %vm174, %v285, 0
      %v292 = vsel %vm174, %v287, 0
      %294 = vmatprep.subr.bf16.mxu0 0
      %295 = vmatpush1.bf16.xpose.msra.mxu0 %v292
      %296 = vmatprep.subr.bf16.mxu0 0
      %297 = vmatpush1.bf16.xpose.msra.mxu0 0
      %298 = vmatprep.subr.bf16.mxu0 0
      %299 = vmatpush1.bf16.xpose.msra.mxu0 0
      %300 = vmatprep.subr.bf16.mxu0 0
      %301 = vmatpush1.bf16.xpose.msra.mxu0 0
      %302 = vmatprep.subr.bf16.mxu0 0
      %303 = vmatpush1.bf16.xpose.msra.mxu0 0
      %304 = vmatprep.subr.bf16.mxu0 0
      %305 = vmatpush1.bf16.xpose.msra.mxu0 0
      %306 = vmatprep.subr.bf16.mxu0 0
      %307 = vmatpush1.bf16.xpose.msra.mxu0 0
      %308 = vmatprep.subr.bf16.mxu0 0
      %309 = vmatpush1.bf16.xpose.msra.mxu0 0
      %310 = vmatprep.subr.bf16.mxu0 0
      %311 = vmatpush1.bf16.xpose.msra.mxu0 0
      %312 = vmatprep.subr.bf16.mxu0 0
      %313 = vmatpush1.bf16.xpose.msra.mxu0 0
      %314 = vmatprep.subr.bf16.mxu0 0
      %315 = vmatpush1.bf16.xpose.msra.mxu0 0
      %316 = vmatprep.subr.bf16.mxu0 0
      %317 = vmatpush1.bf16.xpose.msra.mxu0 0
      %318 = vmatprep.subr.bf16.mxu0 0
      %319 = vmatpush1.bf16.xpose.msra.mxu0 0
      %320 = vmatprep.subr.bf16.mxu0 0
      %321 = vmatpush1.bf16.xpose.msra.mxu0 0
      %322 = vmatprep.subr.bf16.mxu0 0
      %323 = vmatpush1.bf16.xpose.msra.mxu0 0
      %324 = vmatprep.subr.bf16.mxu0 0
      %325 = vmatpush1.bf16.xpose.msra.mxu0 0
      %326 = vmatprep.mubr.bf16.mxu0 0
      %327 = vmatmul.mubr.bf16.gmra.mrb[0].mxu0 %v289
      %v328 = vpop.f32.mrb[0].mxu0
      %v329 = vadd.f32 0.0, %v328
      %v330 = vpop.f32.mrb[0].mxu0
      %v331 = vpop.f32.mrb[0].mxu0
      %v332 = vpop.f32.mrb[0].mxu0
      %333 = vdwg.mxu0
      %v334 = vmul.f32 %v329, 0.35355338
      %v335 = vadd.f32 %v334, %v168
      %v336 = vsel %vm174, %v335, -inf
      %337 = vmax.xlane.f32.xlu0 %v336
      %v338 = vpop.xlane.xlu0 %337
      %v339 = vsub.f32 %v335, %v338
      %v340 = vmul.f32 %v339, 1.442695
      %v341 = vpow.pop %v340
      %v342 = vsel %vm174, %v341, 0.0
      %343 = vadd.xlane.f32.xlu0 %v342
      %v344 = vpop.xlane.xlu0 %343
      %v345 = vrcp.pop %v344
      %v346 = vmul.f32 %v341, %v345
      %v347 = vpack.c.bf16 %v346, %v346
      %348 = vrot.lane.b32.xlu0 %v171, 56
      %v349 = vpop.permute.xlu0 %348
      %v351 = vsel %vm174, %v347, 0
      %v354 = vsel %vm240, %v349, 0
      %356 = vmatprep.subr.bf16.mxu0 0
      %357 = vmatpush1.bf16.msra.mxu0 %v354
      %358 = vmatprep.subr.bf16.mxu0 0
      %359 = vmatpush1.bf16.msra.mxu0 0
      %360 = vmatprep.subr.bf16.mxu0 0
      %361 = vmatpush1.bf16.msra.mxu0 0
      %362 = vmatprep.subr.bf16.mxu0 0
      %363 = vmatpush1.bf16.msra.mxu0 0
      %364 = vmatprep.subr.bf16.mxu0 0
      %365 = vmatpush1.bf16.msra.mxu0 0
      %366 = vmatprep.subr.bf16.mxu0 0
      %367 = vmatpush1.bf16.msra.mxu0 0
      %368 = vmatprep.subr.bf16.mxu0 0
      %369 = vmatpush1.bf16.msra.mxu0 0
      %370 = vmatprep.subr.bf16.mxu0 0
      %371 = vmatpush1.bf16.msra.mxu0 0
      %372 = vmatprep.subr.bf16.mxu0 0
      %373 = vmatpush1.bf16.msra.mxu0 0
      %374 = vmatprep.subr.bf16.mxu0 0
      %375 = vmatpush1.bf16.msra.mxu0 0
      %376 = vmatprep.subr.bf16.mxu0 0
      %377 = vmatpush1.bf16.msra.mxu0 0
      %378 = vmatprep.subr.bf16.mxu0 0
      %379 = vmatpush1.bf16.msra.mxu0 0
      %380 = vmatprep.subr.bf16.mxu0 0
      %381 = vmatpush1.bf16.msra.mxu0 0
      %382 = vmatprep.subr.bf16.mxu0 0
      %383 = vmatpush1.bf16.msra.mxu0 0
      %384 = vmatprep.subr.bf16.mxu0 0
      %385 = vmatpush1.bf16.msra.mxu0 0
      %386 = vmatprep.subr.bf16.mxu0 0
      %387 = vmatpush1.bf16.msra.mxu0 0
      %388 = vmatprep.mubr.bf16.mxu0 0
      %389 = vmatmul.mubr.bf16.gmra.mrb[0].mxu0 %v351
      %v390 = vpop.f32.mrb[0].mxu0
      %v391 = vadd.f32 0.0, %v390
      %v392 = vpop.f32.mrb[0].mxu0
      %v393 = vpop.f32.mrb[0].mxu0
      %v394 = vpop.f32.mrb[0].mxu0
      %395 = vdwg.mxu0
      %396 = vrot.lane.b32.xlu0 %v171, 112
      %v397 = vpop.permute.xlu0 %396
      %398 = vrot.lane.b32.xlu0 %v171, 80
      %v399 = vpop.permute.xlu0 %398
      %v401 = vsel %vm174, %v397, 0
      %v404 = vsel %vm174, %v399, 0
      %406 = vmatprep.subr.bf16.mxu0 0
      %407 = vmatpush1.bf16.xpose.msra.mxu0 %v404
      %408 = vmatprep.subr.bf16.mxu0 0
      %409 = vmatpush1.bf16.xpose.msra.mxu0 0
      %410 = vmatprep.subr.bf16.mxu0 0
      %411 = vmatpush1.bf16.xpose.msra.mxu0 0
      %412 = vmatprep.subr.bf16.mxu0 0
      %413 = vmatpush1.bf16.xpose.msra.mxu0 0
      %414 = vmatprep.subr.bf16.mxu0 0
      %415 = vmatpush1.bf16.xpose.msra.mxu0 0
      %416 = vmatprep.subr.bf16.mxu0 0
      %417 = vmatpush1.bf16.xpose.msra.mxu0 0
      %418 = vmatprep.subr.bf16.mxu0 0
      %419 = vmatpush1.bf16.xpose.msra.mxu0 0
      %420 = vmatprep.subr.bf16.mxu0 0
      %421 = vmatpush1.bf16.xpose.msra.mxu0 0
      %422 = vmatprep.subr.bf16.mxu0 0
      %423 = vmatpush1.bf16.xpose.msra.mxu0 0
      %424 = vmatprep.subr.bf16.mxu0 0
      %425 = vmatpush1.bf16.xpose.msra.mxu0 0
      %426 = vmatprep.subr.bf16.mxu0 0
      %427 = vmatpush1.bf16.xpose.msra.mxu0 0
      %428 = vmatprep.subr.bf16.mxu0 0
      %429 = vmatpush1.bf16.xpose.msra.mxu0 0
      %430 = vmatprep.subr.bf16.mxu0 0
      %431 = vmatpush1.bf16.xpose.msra.mxu0 0
      %432 = vmatprep.subr.bf16.mxu0 0
      %433 = vmatpush1.bf16.xpose.msra.mxu0 0
      %434 = vmatprep.subr.bf16.mxu0 0
      %435 = vmatpush1.bf16.xpose.msra.mxu0 0
      %436 = vmatprep.subr.bf16.mxu0 0
      %437 = vmatpush1.bf16.xpose.msra.mxu0 0
      %438 = vmatprep.mubr.bf16.mxu0 0
      %439 = vmatmul.mubr.bf16.gmra.mrb[0].mxu0 %v401
      %v440 = vpop.f32.mrb[0].mxu0
      %v441 = vadd.f32 0.0, %v440
      %v442 = vpop.f32.mrb[0].mxu0
      %v443 = vpop.f32.mrb[0].mxu0
      %v444 = vpop.f32.mrb[0].mxu0
      %445 = vdwg.mxu0
      %v446 = vmul.f32 %v441, 0.35355338
      %v447 = vadd.f32 %v446, %v168
      %v448 = vsel %vm174, %v447, -inf
      %449 = vmax.xlane.f32.xlu0 %v448
      %v450 = vpop.xlane.xlu0 %449
      %v451 = vsub.f32 %v447, %v450
      %v452 = vmul.f32 %v451, 1.442695
      %v453 = vpow.pop %v452
      %v454 = vsel %vm174, %v453, 0.0
      %455 = vadd.xlane.f32.xlu0 %v454
      %v456 = vpop.xlane.xlu0 %455
      %v457 = vrcp.pop %v456
      %v458 = vmul.f32 %v453, %v457
      %v459 = vpack.c.bf16 %v458, %v458
      %460 = vrot.lane.b32.xlu0 %v171, 48
      %v461 = vpop.permute.xlu0 %460
      %v463 = vsel %vm174, %v459, 0
      %v466 = vsel %vm240, %v461, 0
      %468 = vmatprep.subr.bf16.mxu0 0
      %469 = vmatpush1.bf16.msra.mxu0 %v466
      %470 = vmatprep.subr.bf16.mxu0 0
      %471 = vmatpush1.bf16.msra.mxu0 0
      %472 = vmatprep.subr.bf16.mxu0 0
      %473 = vmatpush1.bf16.msra.mxu0 0
      %474 = vmatprep.subr.bf16.mxu0 0
      %475 = vmatpush1.bf16.msra.mxu0 0
      %476 = vmatprep.subr.bf16.mxu0 0
      %477 = vmatpush1.bf16.msra.mxu0 0
      %478 = vmatprep.subr.bf16.mxu0 0
      %479 = vmatpush1.bf16.msra.mxu0 0
      %480 = vmatprep.subr.bf16.mxu0 0
      %481 = vmatpush1.bf16.msra.mxu0 0
      %482 = vmatprep.subr.bf16.mxu0 0
      %483 = vmatpush1.bf16.msra.mxu0 0
      %484 = vmatprep.subr.bf16.mxu0 0
      %485 = vmatpush1.bf16.msra.mxu0 0
      %486 = vmatprep.subr.bf16.mxu0 0
      %487 = vmatpush1.bf16.msra.mxu0 0
      %488 = vmatprep.subr.bf16.mxu0 0
      %489 = vmatpush1.bf16.msra.mxu0 0
      %490 = vmatprep.subr.bf16.mxu0 0
      %491 = vmatpush1.bf16.msra.mxu0 0
      %492 = vmatprep.subr.bf16.mxu0 0
      %493 = vmatpush1.bf16.msra.mxu0 0
      %494 = vmatprep.subr.bf16.mxu0 0
      %495 = vmatpush1.bf16.msra.mxu0 0
      %496 = vmatprep.subr.bf16.mxu0 0
      %497 = vmatpush1.bf16.msra.mxu0 0
      %498 = vmatprep.subr.bf16.mxu0 0
      %499 = vmatpush1.bf16.msra.mxu0 0
      %500 = vmatprep.mubr.bf16.mxu0 0
      %501 = vmatmul.mubr.bf16.gmra.mrb[0].mxu0 %v463
      %v502 = vpop.f32.mrb[0].mxu0
      %v503 = vadd.f32 0.0, %v502
      %v504 = vpop.f32.mrb[0].mxu0
      %v505 = vpop.f32.mrb[0].mxu0
      %v506 = vpop.f32.mrb[0].mxu0
      %507 = vdwg.mxu0
      %508 = vrot.lane.b32.xlu0 %v171, 104
      %v509 = vpop.permute.xlu0 %508
      %510 = vrot.lane.b32.xlu0 %v171, 72
      %v511 = vpop.permute.xlu0 %510
      %v513 = vsel %vm174, %v509, 0
      %v516 = vsel %vm174, %v511, 0
      %518 = vmatprep.subr.bf16.mxu0 0
      %519 = vmatpush1.bf16.xpose.msra.mxu0 %v516
      %520 = vmatprep.subr.bf16.mxu0 0
      %521 = vmatpush1.bf16.xpose.msra.mxu0 0
      %522 = vmatprep.subr.bf16.mxu0 0
      %523 = vmatpush1.bf16.xpose.msra.mxu0 0
      %524 = vmatprep.subr.bf16.mxu0 0
      %525 = vmatpush1.bf16.xpose.msra.mxu0 0
      %526 = vmatprep.subr.bf16.mxu0 0
      %527 = vmatpush1.bf16.xpose.msra.mxu0 0
      %528 = vmatprep.subr.bf16.mxu0 0
      %529 = vmatpush1.bf16.xpose.msra.mxu0 0
      %530 = vmatprep.subr.bf16.mxu0 0
      %531 = vmatpush1.bf16.xpose.msra.mxu0 0
      %532 = vmatprep.subr.bf16.mxu0 0
      %533 = vmatpush1.bf16.xpose.msra.mxu0 0
      %534 = vmatprep.subr.bf16.mxu0 0
      %535 = vmatpush1.bf16.xpose.msra.mxu0 0
      %536 = vmatprep.subr.bf16.mxu0 0
      %537 = vmatpush1.bf16.xpose.msra.mxu0 0
      %538 = vmatprep.subr.bf16.mxu0 0
      %539 = vmatpush1.bf16.xpose.msra.mxu0 0
      %540 = vmatprep.subr.bf16.mxu0 0
      %541 = vmatpush1.bf16.xpose.msra.mxu0 0
      %542 = vmatprep.subr.bf16.mxu0 0
      %543 = vmatpush1.bf16.xpose.msra.mxu0 0
      %544 = vmatprep.subr.bf16.mxu0 0
      %545 = vmatpush1.bf16.xpose.msra.mxu0 0
      %546 = vmatprep.subr.bf16.mxu0 0
      %547 = vmatpush1.bf16.xpose.msra.mxu0 0
      %548 = vmatprep.subr.bf16.mxu0 0
      %549 = vmatpush1.bf16.xpose.msra.mxu0 0
      %550 = vmatprep.mubr.bf16.mxu0 0
      %551 = vmatmul.mubr.bf16.gmra.mrb[0].mxu0 %v513
      %v552 = vpop.f32.mrb[0].mxu0
      %v553 = vadd.f32 0.0, %v552
      %v554 = vpop.f32.mrb[0].mxu0
      %v555 = vpop.f32.mrb[0].mxu0
      %v556 = vpop.f32.mrb[0].mxu0
      %557 = vdwg.mxu0
      %v558 = vmul.f32 %v553, 0.35355338
      %v559 = vadd.f32 %v558, %v168
      %v560 = vsel %vm174, %v559, -inf
      %561 = vmax.xlane.f32.xlu0 %v560
      %v562 = vpop.xlane.xlu0 %561
      %v563 = vsub.f32 %v559, %v562
      %v564 = vmul.f32 %v563, 1.442695
      %v565 = vpow.pop %v564
      %v566 = vsel %vm174, %v565, 0.0
      %567 = vadd.xlane.f32.xlu0 %v566
      %v568 = vpop.xlane.xlu0 %567
      %v569 = vrcp.pop %v568
      %v570 = vmul.f32 %v565, %v569
      %v571 = vpack.c.bf16 %v570, %v570
      %572 = vrot.lane.b32.xlu0 %v171, 40
      %v573 = vpop.permute.xlu0 %572
      %v575 = vsel %vm174, %v571, 0
      %v578 = vsel %vm240, %v573, 0
      %580 = vmatprep.subr.bf16.mxu0 0
      %581 = vmatpush1.bf16.msra.mxu0 %v578
      %582 = vmatprep.subr.bf16.mxu0 0
      %583 = vmatpush1.bf16.msra.mxu0 0
      %584 = vmatprep.subr.bf16.mxu0 0
      %585 = vmatpush1.bf16.msra.mxu0 0
      %586 = vmatprep.subr.bf16.mxu0 0
      %587 = vmatpush1.bf16.msra.mxu0 0
      %588 = vmatprep.subr.bf16.mxu0 0
      %589 = vmatpush1.bf16.msra.mxu0 0
      %590 = vmatprep.subr.bf16.mxu0 0
      %591 = vmatpush1.bf16.msra.mxu0 0
      %592 = vmatprep.subr.bf16.mxu0 0
      %593 = vmatpush1.bf16.msra.mxu0 0
      %594 = vmatprep.subr.bf16.mxu0 0
      %595 = vmatpush1.bf16.msra.mxu0 0
      %596 = vmatprep.subr.bf16.mxu0 0
      %597 = vmatpush1.bf16.msra.mxu0 0
      %598 = vmatprep.subr.bf16.mxu0 0
      %599 = vmatpush1.bf16.msra.mxu0 0
      %600 = vmatprep.subr.bf16.mxu0 0
      %601 = vmatpush1.bf16.msra.mxu0 0
      %602 = vmatprep.subr.bf16.mxu0 0
      %603 = vmatpush1.bf16.msra.mxu0 0
      %604 = vmatprep.subr.bf16.mxu0 0
      %605 = vmatpush1.bf16.msra.mxu0 0
      %606 = vmatprep.subr.bf16.mxu0 0
      %607 = vmatpush1.bf16.msra.mxu0 0
      %608 = vmatprep.subr.bf16.mxu0 0
      %609 = vmatpush1.bf16.msra.mxu0 0
      %610 = vmatprep.subr.bf16.mxu0 0
      %611 = vmatpush1.bf16.msra.mxu0 0
      %612 = vmatprep.mubr.bf16.mxu0 0
      %613 = vmatmul.mubr.bf16.gmra.mrb[0].mxu0 %v575
      %v614 = vpop.f32.mrb[0].mxu0
      %v615 = vadd.f32 0.0, %v614
      %v616 = vpop.f32.mrb[0].mxu0
      %v617 = vpop.f32.mrb[0].mxu0
      %v618 = vpop.f32.mrb[0].mxu0
      %619 = vdwg.mxu0
      %621 = vrot.lane.b32.xlu0 %v391, 8
      %v622 = vpop.permute.xlu0 %621
      %625 = vrot.lane.b32.xlu0 %v503, 16
      %v626 = vpop.permute.xlu0 %625
      %629 = vrot.lane.b32.xlu0 %v615, 24
      %v630 = vpop.permute.xlu0 %629
      %v632 = vsel %vm174, %v279, %v622
      %vm633 = vcmask 130048
      %v634 = vsel %vm633, %v632, %v626
      %vm635 = vcmask 195584
      %v636 = vsel %vm635, %v634, %v630
      %v637 = vpack.c.bf16 %v636, %v636
      %vm638 = vcmask 257024
      %639 = vst.msk [vmem:[%s152] sm:$0xf] %vm638, %v637
      %p640 = scmp.lt.s32.totalorder %s13, 1
      %s641 = scalar_select %p640, %s13, 1
      %s642 = smul.addr %s641, 4
      %s643 = scalar_lea.vmem %s2, %s642
      // Predicated region
      $region29: #{hunayn_forward.34} parent=27 // pred_check
        %p644 = pneg %p83
      $region30: #{hunayn_forward.34} parent=27 // pred_check_branch
        %646 = sbr.rel (%p644) target = $region32
      $region31: #{hunayn_forward.34} parent=27 // pred_region
        _
      $region32: #{hunayn_forward.34} parent=27 // pred_fallthru
        _
    $region28: #{hunayn_forward.34} parent=5 // pred_fallthru
      _
    %p647 = scmp.le.s32.totalorder 2, %s8
    // Predicated region
    $region33: #{hunayn_forward.34} parent=5 // pred_check
      %p648 = pneg %p647
    $region34: #{hunayn_forward.34} parent=5 // pred_check_branch
      %650 = sbr.rel (%p648) target = $region36
    $region35: #{hunayn_forward.34} parent=5 // pred_region
      %s651 = ssub.s32 %s8, 2
      // Predicated region
      $region37: #{hunayn_forward.34} parent=35 // pred_check
        %p652 = pneg %p89
      $region38: #{hunayn_forward.34} parent=35 // pred_check_branch
        %654 = sbr.rel (%p652) target = $region40
      $region39: #{hunayn_forward.34} parent=35 // pred_region
        %p655 = scmp.lt.s32.totalorder %s14, 1
        %s656 = scalar_select %p655, %s14, 1
        %s657 = smul.addr %s656, 4
        %s658 = scalar_lea.vmem %s2, %s657
      $region40: #{hunayn_forward.34} parent=35 // pred_fallthru
        _
    $region36: #{hunayn_forward.34} parent=5 // pred_fallthru
      _
  $region6: #{hunayn_forward.34} parent=0 // loop_footer
    %s12 = sadd.s32 1, %s8
  $region7: #{hunayn_forward.34} parent=0 // loop_footer_branch
    %7 = sbr.rel target = $region3
  $region8: #{hunayn_forward.34} parent=0 // loop_exit
    _

// kernel: hunayn_forward.49
$region0: #{hunayn_forward.49}
  #allocation0 [shape = 'u32[]', space=smem, size = 0x4, offset = 0x4, fixed_abs, tag = 'smem constant byte address 0x4 - core index']
  #allocation1 [shape = 'u32[144,128]{1,0:T(1,128)}', space=vmem, size = 0x12000, scoped, tag = 'internal scratch']
  #allocation2 [shape = 'f32[16,128]{1,0:T(8,128)}', space=vmem, size = 0x2000, scoped, tag = 'scratch operand']
  %s0 = inlined_call_operand.vmem [shape: bf16[16,128], index: 0, kind: input, shape index: {}]
  %s1 = inlined_call_operand.vmem [shape: bf16[128,128], index: 1, kind: input, shape index: {}]
  %s2 = inlined_call_operand.vmem [shape: f32[1,128], index: 2, kind: input, shape index: {}]
  %s3 = inlined_call_operand.vmem [shape: f32[16,128], index: 3, kind: output, shape index: {}]
  %s4 = sld [smem:[#allocation0]]
  $region30: #{hunayn_forward.49} parent=0
    _
  %s6 = ssub.s32 1, %s4
  %s7 = scalar_select 0, %s6, %s4
  // Predicated region
  $region2: #{hunayn_forward.49} parent=0 // pred_check
    _
  $region3: #{hunayn_forward.49} parent=0 // pred_check_branch
    %9 = sbr.rel (0) target = $region5
  $region4: #{hunayn_forward.49} parent=0 // pred_region
    _
  $region5: #{hunayn_forward.49} parent=0 // pred_fallthru
    _
  // Predicated region
  $region6: #{hunayn_forward.49} parent=0 // pred_check
    _
  $region7: #{hunayn_forward.49} parent=0 // pred_check_branch
    %11 = sbr.rel (0) target = $region9
  $region8: #{hunayn_forward.49} parent=0 // pred_region
    _
  $region9: #{hunayn_forward.49} parent=0 // pred_fallthru
    _
  // Predicated region
  $region10: #{hunayn_forward.49} parent=0 // pred_check
    _
  $region11: #{hunayn_forward.49} parent=0 // pred_check_branch
    %13 = sbr.rel (0) target = $region13
  $region12: #{hunayn_forward.49} parent=0 // pred_region
    _
  $region13: #{hunayn_forward.49} parent=0 // pred_fallthru
    _
  %p15 = scmp.eq.s32.totalorder 0, 0
  // Predicated region
  $region14: #{hunayn_forward.49} parent=0 // pred_check
    %p16 = pneg %p15
  $region15: #{hunayn_forward.49} parent=0 // pred_check_branch
    %18 = sbr.rel (%p16) target = $region17
  $region16: #{hunayn_forward.49} parent=0 // pred_region
    %19 = vst [vmem:[#allocation2] sm:$0xff] 0.0
    %20 = vst [vmem:[#allocation2 + $0x8] sm:$0xff] 0.0
  $region17: #{hunayn_forward.49} parent=0 // pred_fallthru
    _
  %v21 = vld [vmem:[#allocation2] sm:$0xff]
  %v22 = vld [vmem:[#allocation2 + $0x8] sm:$0xff]
  %v23 = vld [vmem:[%s0] sm:$0xf]
  %v24 = vld [vmem:[%s0 + $0x4] sm:$0xf]
  %v25 = vld [vmem:[%s1] sm:$0xf]
  %v26 = vld [vmem:[%s1 + $0x4] sm:$0xf]
  %v27 = vld [vmem:[%s1 + $0x8] sm:$0xf]
  %v28 = vld [vmem:[%s1 + $0xc] sm:$0xf]
  %v29 = vld [vmem:[%s1 + $0x10] sm:$0xf]
  %v30 = vld [vmem:[%s1 + $0x14] sm:$0xf]
  %v31 = vld [vmem:[%s1 + $0x18] sm:$0xf]
  %v32 = vld [vmem:[%s1 + $0x1c] sm:$0xf]
  %v33 = vld [vmem:[%s1 + $0x20] sm:$0xf]
  %v34 = vld [vmem:[%s1 + $0x24] sm:$0xf]
  %v35 = vld [vmem:[%s1 + $0x28] sm:$0xf]
  %v36 = vld [vmem:[%s1 + $0x2c] sm:$0xf]
  %v37 = vld [vmem:[%s1 + $0x30] sm:$0xf]
  %v38 = vld [vmem:[%s1 + $0x34] sm:$0xf]
  %v39 = vld [vmem:[%s1 + $0x38] sm:$0xf]
  %v40 = vld [vmem:[%s1 + $0x3c] sm:$0xf]
  %v43 = vunpack.c.l.b16 %v23
  %v44 = vunpack.c.l.b16 %v24
  %v45 = vpack.c.b16 %v44, %v43
  %v63 = vunpack.c.l.b16 %v25
  %v64 = vunpack.c.l.b16 %v26
  %v65 = vunpack.c.l.b16 %v27
  %v66 = vunpack.c.l.b16 %v28
  %v67 = vunpack.c.l.b16 %v29
  %v68 = vunpack.c.l.b16 %v30
  %v69 = vunpack.c.l.b16 %v31
  %v70 = vunpack.c.l.b16 %v32
  %v71 = vunpack.c.l.b16 %v33
  %v72 = vunpack.c.l.b16 %v34
  %v73 = vunpack.c.l.b16 %v35
  %v74 = vunpack.c.l.b16 %v36
  %v75 = vunpack.c.l.b16 %v37
  %v76 = vunpack.c.l.b16 %v38
  %v77 = vunpack.c.l.b16 %v39
  %v78 = vunpack.c.l.b16 %v40
  %v79 = vpack.c.b16 %v64, %v63
  %v80 = vpack.c.b16 %v66, %v65
  %v81 = vpack.c.b16 %v68, %v67
  %v82 = vpack.c.b16 %v70, %v69
  %v83 = vpack.c.b16 %v72, %v71
  %v84 = vpack.c.b16 %v74, %v73
  %v85 = vpack.c.b16 %v76, %v75
  %v86 = vpack.c.b16 %v78, %v77
  %95 = vmatprep.subr.bf16.mxu0 0
  %96 = vmatpush1.bf16.msra.mxu0 %v79
  %97 = vmatprep.subr.bf16.mxu0 0
  %98 = vmatpush1.bf16.msra.mxu0 %v80
  %99 = vmatprep.subr.bf16.mxu0 0
  %100 = vmatpush1.bf16.msra.mxu0 %v81
  %101 = vmatprep.subr.bf16.mxu0 0
  %102 = vmatpush1.bf16.msra.mxu0 %v82
  %103 = vmatprep.subr.bf16.mxu0 0
  %104 = vmatpush1.bf16.msra.mxu0 %v83
  %105 = vmatprep.subr.bf16.mxu0 0
  %106 = vmatpush1.bf16.msra.mxu0 %v84
  %107 = vmatprep.subr.bf16.mxu0 0
  %108 = vmatpush1.bf16.msra.mxu0 %v85
  %109 = vmatprep.subr.bf16.mxu0 0
  %110 = vmatpush1.bf16.msra.mxu0 %v86
  %111 = vmatprep.subr.bf16.mxu0 0
  %112 = vmatpush1.bf16.msra.mxu0 0
  %113 = vmatprep.subr.bf16.mxu0 0
  %114 = vmatpush1.bf16.msra.mxu0 0
  %115 = vmatprep.subr.bf16.mxu0 0
  %116 = vmatpush1.bf16.msra.mxu0 0
  %117 = vmatprep.subr.bf16.mxu0 0
  %118 = vmatpush1.bf16.msra.mxu0 0
  %119 = vmatprep.subr.bf16.mxu0 0
  %120 = vmatpush1.bf16.msra.mxu0 0
  %121 = vmatprep.subr.bf16.mxu0 0
  %122 = vmatpush1.bf16.msra.mxu0 0
  %123 = vmatprep.subr.bf16.mxu0 0
  %124 = vmatpush1.bf16.msra.mxu0 0
  %125 = vmatprep.subr.bf16.mxu0 0
  %126 = vmatpush1.bf16.msra.mxu0 0
  %127 = vmatprep.mubr.bf16.mxu0 0
  %128 = vmatmul.mubr.bf16.gmra.mrb[0].mxu0 %v45
  %v129 = vpop.f32.mrb[0].mxu0
  %v130 = vadd.f32 0.0, %v129
  %v131 = vpop.f32.mrb[0].mxu0
  %v132 = vpop.f32.mrb[0].mxu0
  %v133 = vadd.f32 0.0, %v132
  %v134 = vpop.f32.mrb[0].mxu0
  %135 = vdwg.mxu0
  %v136 = vadd.f32 %v21, %v130
  %v137 = vadd.f32 %v22, %v133
  %138 = vst [vmem:[#allocation2] sm:$0xff] %v136
  %139 = vst [vmem:[#allocation2 + $0x8] sm:$0xff] %v137
  // Predicated region
  $region18: #{hunayn_forward.49} parent=0 // pred_check
    %p140 = pneg %p15
  $region19: #{hunayn_forward.49} parent=0 // pred_check_branch
    %142 = sbr.rel (%p140) target = $region21
  $region20: #{hunayn_forward.49} parent=0 // pred_region
    %v143 = vld [vmem:[#allocation2] sm:$0xff]
    %v144 = vld [vmem:[#allocation2 + $0x8] sm:$0xff]
    %v145 = vld [vmem:[%s2] sm:$0x1]
    %v147 = vlaneseq
    %v148 = vshrl.u32 %v147, 7
    %v149 = vsub.s32 0, %v148
    %v150 = vrot.slane %v145, %v149
    %v152 = vadd.f32 %v143, %v150
    %v153 = vadd.f32 %v144, %v150
    %154 = vst [vmem:[%s3] sm:$0xff] %v152
    %155 = vst [vmem:[%s3 + $0x8] sm:$0xff] %v153
  $region21: #{hunayn_forward.49} parent=0 // pred_fallthru
    _
  // Predicated region
  $region22: #{hunayn_forward.49} parent=0 // pred_check
    _
  $region23: #{hunayn_forward.49} parent=0 // pred_check_branch
    %157 = sbr.rel (0) target = $region25
  $region24: #{hunayn_forward.49} parent=0 // pred_region
    _
  $region25: #{hunayn_forward.49} parent=0 // pred_fallthru
    _
  // Predicated region
  $region26: #{hunayn_forward.49} parent=0 // pred_check
    _
  $region27: #{hunayn_forward.49} parent=0 // pred_check_branch
    %159 = sbr.rel (0) target = $region29
  $region28: #{hunayn_forward.49} parent=0 // pred_region
    _
  $region29: #{hunayn_forward.49} parent=0 // pred_fallthru
    _

</llo_original>
